<compile_context>
chip_gen: v5e
topology: v5e:2x2
jax: 0.10.0
libtpu: 0.0.40
codegen_flags: <defaults>
</compile_context>

<pallas_src>
import functools

import jax
import jax.numpy as jnp
from jax.experimental import pallas as pl
from jax.experimental.pallas import tpu as pltpu

BN_EPS = 1e-5
NEG_SLOPE = 0.2


def _round_up(x, m):
    return (x + m - 1) // m * m


# ---------------------------------------------------------------------------
# Pallas kernels
# ---------------------------------------------------------------------------
def _gemm_stats_kernel(p_ref, w_ref, y_ref, sum_ref, ssq_ref):
    """Per-M-tile GEMM (bf16 operands, f32 accum) + per-channel sum / sumsq."""
    @pl.when(pl.program_id(0) == 0)
    def _():
        sum_ref[...] = jnp.zeros_like(sum_ref)
        ssq_ref[...] = jnp.zeros_like(ssq_ref)

    y = jnp.dot(p_ref[...], w_ref[...], preferred_element_type=jnp.float32)
    y_ref[...] = y.astype(y_ref.dtype)
    sum_ref[...] += jnp.sum(y, axis=0, keepdims=True)
    ssq_ref[...] += jnp.sum(y * y, axis=0, keepdims=True)


def _bn_lrelu_kernel(m_total, y_ref, sum_ref, ssq_ref, g_ref, b_ref, o_ref):
    """Fused BatchNorm (training-mode batch stats) + LeakyReLU(0.2).

    Single affine: scale = gamma * rsqrt(var + eps), shift = beta - mean*scale.
    Stats come in as global sums over the true M (padded rows contribute 0).
    """
    inv_m = 1.0 / m_total
    mean = sum_ref[...] * inv_m
    var = jnp.maximum(ssq_ref[...] * inv_m - mean * mean, 0.0)
    scale = g_ref[...] * jax.lax.rsqrt(var + BN_EPS)
    shift = b_ref[...] - mean * scale
    y = y_ref[...].astype(jnp.float32)
    yh = y * scale + shift
    out = jnp.where(yh >= 0, yh, NEG_SLOPE * yh)
    o_ref[...] = out.astype(o_ref.dtype)


def _gemm_bias_sigmoid_kernel(p_ref, w_ref, b_ref, o_ref):
    y = jnp.dot(p_ref[...], w_ref[...], preferred_element_type=jnp.float32)
    o_ref[...] = jax.nn.sigmoid(y + b_ref[...])


# ---------------------------------------------------------------------------
# XLA glue: NHWC im2col + padded GEMM operands
# ---------------------------------------------------------------------------
def _im2col_nhwc(x, kh, kw, stride, pad):
    """x: (N, H, W, C) -> patches (N*Ho*Wo, kh*kw*C); channels stay minor."""
    n, h, w, c = x.shape
    xp = jnp.pad(x, ((0, 0), (pad, pad), (pad, pad), (0, 0)))
    ho = (h + 2 * pad - kh) // stride + 1
    wo = (w + 2 * pad - kw) // stride + 1
    cols = []
    for i in range(kh):
        for j in range(kw):
            cols.append(xp[:, i:i + stride * ho:stride,
                           j:j + stride * wo:stride, :])
    cols = jnp.stack(cols, axis=3)                 # (N, Ho, Wo, kh*kw, C)
    return cols.reshape(n * ho * wo, kh * kw * c), ho, wo


def _pad_gemm_operands(patches, w, m_pad, k_pad, cout_pad):
    """Zero-pad (M, K) patches and (K, Cout) weights; cast to bf16 for the MXU."""
    cout, cin, kh, kw = w.shape
    m, k = patches.shape
    patches = jnp.pad(patches, ((0, m_pad - m), (0, k_pad - k)))
    patches = patches.astype(jnp.bfloat16)
    # K order must match the patches: (kh, kw, Cin).
    wmat = w.transpose(2, 3, 1, 0).reshape(k, cout)
    wmat = jnp.pad(wmat, ((0, k_pad - k), (0, cout_pad - cout)))
    wmat = wmat.astype(jnp.bfloat16)
    return patches, wmat


# ---------------------------------------------------------------------------
# Layer wrappers
# ---------------------------------------------------------------------------
def _conv_bn_lrelu_layer(x, w, gamma, beta, *, stride, pad, tile_m=512):
    """Conv2d (no bias: cancelled by BN) + BatchNorm2d (batch stats) + LeakyReLU."""
    cout, cin, kh, kw = w.shape
    n = x.shape[0]
    patches, ho, wo = _im2col_nhwc(x, kh, kw, stride, pad)
    m, k = patches.shape

    k_pad = _round_up(k, 128)
    cout_pad = _round_up(cout, 128)
    tile = min(tile_m, _round_up(m, 8))
    m_pad = _round_up(m, tile)
    num_tiles = m_pad // tile

    patches, wmat = _pad_gemm_operands(patches, w, m_pad, k_pad, cout_pad)
    g = jnp.pad(gamma, (0, cout_pad - cout)).reshape(1, cout_pad).astype(jnp.float32)
    b = jnp.pad(beta, (0, cout_pad - cout)).reshape(1, cout_pad).astype(jnp.float32)

    vec_spec = pl.BlockSpec((1, cout_pad), lambda i: (0, 0))

    # Pass A: tiled GEMM + global per-channel sum / sumsq (resident accumulators).
    y, ysum, yssq = pl.pallas_call(
        _gemm_stats_kernel,
        grid=(num_tiles,),
        in_specs=[
            pl.BlockSpec((tile, k_pad), lambda i: (i, 0)),
            pl.BlockSpec((k_pad, cout_pad), lambda i: (0, 0)),
        ],
        out_specs=[
            pl.BlockSpec((tile, cout_pad), lambda i: (i, 0)),
            vec_spec,
            vec_spec,
        ],
        out_shape=[
            jax.ShapeDtypeStruct((m_pad, cout_pad), jnp.bfloat16),
            jax.ShapeDtypeStruct((1, cout_pad), jnp.float32),
            jax.ShapeDtypeStruct((1, cout_pad), jnp.float32),
        ],
        compiler_params=pltpu.CompilerParams(
            dimension_semantics=("arbitrary",)),
    )(patches, wmat)

    # Pass B: tiled fused normalize + LeakyReLU (fully parallel over M tiles).
    out = pl.pallas_call(
        functools.partial(_bn_lrelu_kernel, float(m)),
        grid=(num_tiles,),
        in_specs=[
            pl.BlockSpec((tile, cout_pad), lambda i: (i, 0)),
            vec_spec, vec_spec, vec_spec, vec_spec,
        ],
        out_specs=pl.BlockSpec((tile, cout_pad), lambda i: (i, 0)),
        out_shape=jax.ShapeDtypeStruct((m_pad, cout_pad), jnp.bfloat16),
        compiler_params=pltpu.CompilerParams(
            dimension_semantics=("parallel",)),
    )(y, ysum, yssq, g, b)

    return out[:m, :cout].reshape(n, ho, wo, cout)


def _conv_sigmoid_layer(x, w, b, *, stride, pad):
    cout, cin, kh, kw = w.shape
    n = x.shape[0]
    patches, ho, wo = _im2col_nhwc(x, kh, kw, stride, pad)
    m, k = patches.shape

    k_pad = _round_up(k, 128)
    cout_pad = _round_up(cout, 128)
    m_pad = _round_up(m, 8)

    patches, wmat = _pad_gemm_operands(patches, w, m_pad, k_pad, cout_pad)
    bp = jnp.pad(b, (0, cout_pad - cout)).reshape(1, cout_pad).astype(jnp.float32)

    out = pl.pallas_call(
        _gemm_bias_sigmoid_kernel,
        grid=(1,),
        in_specs=[
            pl.BlockSpec((m_pad, k_pad), lambda i: (0, 0)),
            pl.BlockSpec((k_pad, cout_pad), lambda i: (0, 0)),
            pl.BlockSpec((1, cout_pad), lambda i: (0, 0)),
        ],
        out_specs=pl.BlockSpec((m_pad, cout_pad), lambda i: (0, 0)),
        out_shape=jax.ShapeDtypeStruct((m_pad, cout_pad), jnp.float32),
    )(patches, wmat, bp)
    return out[:m, :cout].reshape(n, ho, wo, cout)


# ---------------------------------------------------------------------------
# Discriminator
# ---------------------------------------------------------------------------
def init_params(key, ndf):
    channels = [3, ndf, 2 * ndf, 4 * ndf, 8 * ndf]
    blocks = []
    for i in range(4):
        key, k1, k2, k3, k4 = jax.random.split(key, 5)
        cin, cout = channels[i], channels[i + 1]
        w = 0.05 * jax.random.normal(k1, (cout, cin, 4, 4), jnp.float32)
        b = 0.05 * jax.random.normal(k2, (cout,), jnp.float32)   # kept for parity; cancelled by BN
        gamma = 1.0 + 0.1 * jax.random.normal(k3, (cout,), jnp.float32)
        beta = 0.1 * jax.random.normal(k4, (cout,), jnp.float32)
        blocks.append((w, b, gamma, beta))
    key, k1, k2 = jax.random.split(key, 3)
    w_final = 0.05 * jax.random.normal(k1, (1, 8 * ndf, 4, 4), jnp.float32)
    b_final = 0.05 * jax.random.normal(k2, (1,), jnp.float32)
    return blocks, (w_final, b_final)


def discriminator_forward(x_nchw, params):
    blocks, (w_final, b_final) = params
    x = jnp.transpose(x_nchw, (0, 2, 3, 1))          # NHWC internally
    for (w, _b, gamma, beta) in blocks:
        # Conv bias is mathematically cancelled by BatchNorm's mean subtraction.
        x = _conv_bn_lrelu_layer(x, w, gamma, beta, stride=2, pad=1)
    x = _conv_sigmoid_layer(x, w_final, b_final, stride=1, pad=0)
    return jnp.transpose(x, (0, 3, 1, 2))            # back to NCHW: (N, 1, 1, 1)


# ---------------------------------------------------------------------------
# Pure-JAX reference (PyTorch semantics, training-mode BatchNorm)
# ---------------------------------------------------------------------------
def _reference_forward(x, params):
    blocks, (wf, bf) = params
    y = x
    for (w, b, gamma, beta) in blocks:
        y = jax.lax.conv_general_dilated(
            y, w, window_strides=(2, 2), padding=[(1, 1), (1, 1)],
            dimension_numbers=("NCHW", "OIHW", "NCHW"))
        y = y + b.reshape(1, -1, 1, 1)
        mean = y.mean(axis=(0, 2, 3), keepdims=True)
        var = ((y - mean) ** 2).mean(axis=(0, 2, 3), keepdims=True)
        y = (y - mean) * jax.lax.rsqrt(var + BN_EPS)
        y = y * gamma.reshape(1, -1, 1, 1) + beta.reshape(1, -1, 1, 1)
        y = jnp.where(y >= 0, y, NEG_SLOPE * y)
    y = jax.lax.conv_general_dilated(
        y, wf, window_strides=(1, 1), padding=[(0, 0), (0, 0)],
        dimension_numbers=("NCHW", "OIHW", "NCHW"))
    y = y + bf.reshape(1, -1, 1, 1)
    return jax.nn.sigmoid(y)


if __name__ == "__main__":
    key = jax.random.PRNGKey(0)
    k_x, k_p = jax.random.split(key)
    ndf = 8                                           # opt.ndf
    x = jax.random.normal(k_x, (2, 3, 64, 64), jnp.float32)  # NCHW like PyTorch
    params = init_params(k_p, ndf)

    fwd = jax.jit(discriminator_forward)
    out = fwd(x, params)
    jax.block_until_ready(out)
    assert out.shape == (2, 1, 1, 1)
    assert bool(jnp.all(jnp.isfinite(out)))

    ref = _reference_forward(x, params)
    err = float(jnp.max(jnp.abs(out - ref)))
    assert err < 5e-2, f"max abs err vs reference: {err}"
    print("KERNEL_OK")
</pallas_src>

<mosaic_0001>
module attributes {stable_mosaic.version = 11 : i64} {
  func.func @_gemm_stats_kernel(%arg0: i32, %arg1: memref<512x128xbf16, #tpu.memory_space<vmem>>, %arg2: memref<128x128xbf16, #tpu.memory_space<vmem>>, %arg3: memref<512x128xbf16, #tpu.memory_space<vmem>>, %arg4: memref<1x128xf32, #tpu.memory_space<vmem>>, %arg5: memref<1x128xf32, #tpu.memory_space<vmem>>) attributes {dimension_semantics = [#tpu.dimension_semantics<arbitrary>], iteration_bounds = array<i64: 4>, scalar_prefetch = 0 : i64, scratch_operands = 0 : i64, tpu.core_type = #tpu.core_type<tc>, window_params = [{transform_indices = @transform_0, window_bounds = array<i64: 512, 128>}, {pipeline_mode = #tpu.pipeline_mode<synchronous>, transform_indices = @transform_1, window_bounds = array<i64: 128, 128>}, {transform_indices = @transform_2, window_bounds = array<i64: 512, 128>}, {pipeline_mode = #tpu.pipeline_mode<synchronous>, transform_indices = @transform_3, window_bounds = array<i64: 1, 128>}, {pipeline_mode = #tpu.pipeline_mode<synchronous>, transform_indices = @transform_4, window_bounds = array<i64: 1, 128>}]} {
    %c0_i32 = arith.constant 0 : i32
    %0 = arith.cmpi eq, %arg0, %c0_i32 : i32
    %1 = arith.extui %0 : i1 to i32
    %c0_i32_0 = arith.constant 0 : i32
    %2 = arith.cmpi ne, %1, %c0_i32_0 : i32
    scf.if %2 {
      %cst_16 = arith.constant 0.000000e+00 : f32
      %19 = vector.broadcast %cst_16 : f32 to vector<1x128xf32>
      %c0_17 = arith.constant 0 : index
      %c0_18 = arith.constant 0 : index
      %20 = vector.load %arg4[%c0_17, %c0_18] : memref<1x128xf32, #tpu.memory_space<vmem>>, vector<1x128xf32>
      tpu.vector_store %arg4[%c0_17, %c0_18], %19 {strides = array<i32>} : memref<1x128xf32, #tpu.memory_space<vmem>>, vector<1x128xf32>,
      %cst_19 = arith.constant 0.000000e+00 : f32
      %21 = vector.broadcast %cst_19 : f32 to vector<1x128xf32>
      %c0_20 = arith.constant 0 : index
      %c0_21 = arith.constant 0 : index
      %22 = vector.load %arg5[%c0_20, %c0_21] : memref<1x128xf32, #tpu.memory_space<vmem>>, vector<1x128xf32>
      tpu.vector_store %arg5[%c0_20, %c0_21], %21 {strides = array<i32>} : memref<1x128xf32, #tpu.memory_space<vmem>>, vector<1x128xf32>,
    } else {
    }
    %c0 = arith.constant 0 : index
    %c0_1 = arith.constant 0 : index
    %3 = vector.load %arg1[%c0, %c0_1] : memref<512x128xbf16, #tpu.memory_space<vmem>>, vector<512x128xbf16>
    %c0_2 = arith.constant 0 : index
    %c0_3 = arith.constant 0 : index
    %4 = vector.load %arg2[%c0_2, %c0_3] : memref<128x128xbf16, #tpu.memory_space<vmem>>, vector<128x128xbf16>
    %cst = arith.constant dense<0.000000e+00> : vector<512x128xf32>
    %5 = tpu.matmul %3, %4, %cst {dimension_numbers = #tpu.dot_dimension_numbers<[1], [0], [0], [1], [0, 0, 1, 1], [], []>} : vector<512x128xbf16>, vector<128x128xbf16>, vector<512x128xf32> -> vector<512x128xf32>
    %6 = arith.truncf %5 : vector<512x128xf32> to vector<512x128xbf16>
    %c0_4 = arith.constant 0 : index
    %c0_5 = arith.constant 0 : index
    %7 = vector.load %arg3[%c0_4, %c0_5] : memref<512x128xbf16, #tpu.memory_space<vmem>>, vector<512x128xbf16>
    tpu.vector_store %arg3[%c0_4, %c0_5], %6 {strides = array<i32>} : memref<512x128xbf16, #tpu.memory_space<vmem>>, vector<512x128xbf16>,
    %c0_6 = arith.constant 0 : index
    %c0_7 = arith.constant 0 : index
    %8 = vector.load %arg4[%c0_6, %c0_7] : memref<1x128xf32, #tpu.memory_space<vmem>>, vector<1x128xf32>
    %cst_8 = arith.constant dense<0.000000e+00> : vector<128xf32>
    %9 = vector.multi_reduction <add>, %5, %cst_8 [0] : vector<512x128xf32> to vector<128xf32>
    %10 = vector.shape_cast %9 : vector<128xf32> to vector<1x128xf32>
    %11 = arith.addf %8, %10 : vector<1x128xf32>
    %c0_9 = arith.constant 0 : index
    %c0_10 = arith.constant 0 : index
    %12 = vector.load %arg4[%c0_9, %c0_10] : memref<1x128xf32, #tpu.memory_space<vmem>>, vector<1x128xf32>
    tpu.vector_store %arg4[%c0_9, %c0_10], %11 {strides = array<i32>} : memref<1x128xf32, #tpu.memory_space<vmem>>, vector<1x128xf32>,
    %c0_11 = arith.constant 0 : index
    %c0_12 = arith.constant 0 : index
    %13 = vector.load %arg5[%c0_11, %c0_12] : memref<1x128xf32, #tpu.memory_space<vmem>>, vector<1x128xf32>
    %14 = arith.mulf %5, %5 : vector<512x128xf32>
    %cst_13 = arith.constant dense<0.000000e+00> : vector<128xf32>
    %15 = vector.multi_reduction <add>, %14, %cst_13 [0] : vector<512x128xf32> to vector<128xf32>
    %16 = vector.shape_cast %15 : vector<128xf32> to vector<1x128xf32>
    %17 = arith.addf %13, %16 : vector<1x128xf32>
    %c0_14 = arith.constant 0 : index
    %c0_15 = arith.constant 0 : index
    %18 = vector.load %arg5[%c0_14, %c0_15] : memref<1x128xf32, #tpu.memory_space<vmem>>, vector<1x128xf32>
    tpu.vector_store %arg5[%c0_14, %c0_15], %17 {strides = array<i32>} : memref<1x128xf32, #tpu.memory_space<vmem>>, vector<1x128xf32>,
    return
  }
  func.func @transform_0(%arg0: i32) -> (i32, i32) {
    %c0_i32 = arith.constant 0 : i32
    %c0_i32_0 = arith.constant 0 : i32
    return %arg0, %c0_i32 : i32, i32
  }
  func.func @transform_1(%arg0: i32) -> (i32, i32) {
    %c0_i32 = arith.constant 0 : i32
    %c0_i32_0 = arith.constant 0 : i32
    %c0_i32_1 = arith.constant 0 : i32
    return %c0_i32, %c0_i32_0 : i32, i32
  }
  func.func @transform_2(%arg0: i32) -> (i32, i32) {
    %c0_i32 = arith.constant 0 : i32
    %c0_i32_0 = arith.constant 0 : i32
    return %arg0, %c0_i32 : i32, i32
  }
  func.func @transform_3(%arg0: i32) -> (i32, i32) {
    %c0_i32 = arith.constant 0 : i32
    %c0_i32_0 = arith.constant 0 : i32
    %c0_i32_1 = arith.constant 0 : i32
    return %c0_i32, %c0_i32_0 : i32, i32
  }
  func.func @transform_4(%arg0: i32) -> (i32, i32) {
    %c0_i32 = arith.constant 0 : i32
    %c0_i32_0 = arith.constant 0 : i32
    %c0_i32_1 = arith.constant 0 : i32
    return %c0_i32, %c0_i32_0 : i32, i32
  }
}

module attributes {stable_mosaic.version = 11 : i64} {
  func.func @_bn_lrelu_kernel(%arg0: i32, %arg1: memref<512x128xbf16, #tpu.memory_space<vmem>>, %arg2: memref<1x128xf32, #tpu.memory_space<vmem>>, %arg3: memref<1x128xf32, #tpu.memory_space<vmem>>, %arg4: memref<1x128xf32, #tpu.memory_space<vmem>>, %arg5: memref<1x128xf32, #tpu.memory_space<vmem>>, %arg6: memref<512x128xbf16, #tpu.memory_space<vmem>>) attributes {dimension_semantics = [#tpu.dimension_semantics<parallel>], iteration_bounds = array<i64: 4>, scalar_prefetch = 0 : i64, scratch_operands = 0 : i64, tpu.core_type = #tpu.core_type<tc>, window_params = [{transform_indices = @transform_0, window_bounds = array<i64: 512, 128>}, {pipeline_mode = #tpu.pipeline_mode<synchronous>, transform_indices = @transform_1, window_bounds = array<i64: 1, 128>}, {pipeline_mode = #tpu.pipeline_mode<synchronous>, transform_indices = @transform_2, window_bounds = array<i64: 1, 128>}, {pipeline_mode = #tpu.pipeline_mode<synchronous>, transform_indices = @transform_3, window_bounds = array<i64: 1, 128>}, {pipeline_mode = #tpu.pipeline_mode<synchronous>, transform_indices = @transform_4, window_bounds = array<i64: 1, 128>}, {transform_indices = @transform_5, window_bounds = array<i64: 512, 128>}]} {
    %c0 = arith.constant 0 : index
    %c0_0 = arith.constant 0 : index
    %0 = vector.load %arg2[%c0, %c0_0] : memref<1x128xf32, #tpu.memory_space<vmem>>, vector<1x128xf32>
    %cst = arith.constant 4.8828125E-4 : f32
    %1 = vector.broadcast %cst : f32 to vector<1x128xf32>
    %2 = arith.mulf %0, %1 : vector<1x128xf32>
    %c0_1 = arith.constant 0 : index
    %c0_2 = arith.constant 0 : index
    %3 = vector.load %arg3[%c0_1, %c0_2] : memref<1x128xf32, #tpu.memory_space<vmem>>, vector<1x128xf32>
    %cst_3 = arith.constant 4.8828125E-4 : f32
    %4 = vector.broadcast %cst_3 : f32 to vector<1x128xf32>
    %5 = arith.mulf %3, %4 : vector<1x128xf32>
    %6 = arith.mulf %2, %2 : vector<1x128xf32>
    %7 = arith.subf %5, %6 : vector<1x128xf32>
    %cst_4 = arith.constant 0.000000e+00 : f32
    %8 = vector.broadcast %cst_4 : f32 to vector<1x128xf32>
    %9 = arith.maximumf %7, %8 : vector<1x128xf32>
    %c0_5 = arith.constant 0 : index
    %c0_6 = arith.constant 0 : index
    %10 = vector.load %arg4[%c0_5, %c0_6] : memref<1x128xf32, #tpu.memory_space<vmem>>, vector<1x128xf32>
    %cst_7 = arith.constant 9.99999974E-6 : f32
    %11 = vector.broadcast %cst_7 : f32 to vector<1x128xf32>
    %12 = arith.addf %9, %11 : vector<1x128xf32>
    %13 = math.rsqrt %12 : vector<1x128xf32>
    %14 = arith.mulf %10, %13 : vector<1x128xf32>
    %c0_8 = arith.constant 0 : index
    %c0_9 = arith.constant 0 : index
    %15 = vector.load %arg5[%c0_8, %c0_9] : memref<1x128xf32, #tpu.memory_space<vmem>>, vector<1x128xf32>
    %16 = arith.mulf %2, %14 : vector<1x128xf32>
    %17 = arith.subf %15, %16 : vector<1x128xf32>
    %c0_10 = arith.constant 0 : index
    %c0_11 = arith.constant 0 : index
    %18 = vector.load %arg1[%c0_10, %c0_11] : memref<512x128xbf16, #tpu.memory_space<vmem>>, vector<512x128xbf16>
    %19 = arith.extf %18 : vector<512x128xbf16> to vector<512x128xf32>
    %20 = vector.broadcast %14 : vector<1x128xf32> to vector<512x128xf32>
    %21 = arith.mulf %19, %20 : vector<512x128xf32>
    %22 = vector.broadcast %17 : vector<1x128xf32> to vector<512x128xf32>
    %23 = arith.addf %21, %22 : vector<512x128xf32>
    %cst_12 = arith.constant 0.000000e+00 : f32
    %24 = vector.broadcast %cst_12 : f32 to vector<512x128xf32>
    %25 = arith.cmpf oge, %23, %24 : vector<512x128xf32>
    %cst_13 = arith.constant 2.000000e-01 : f32
    %26 = vector.broadcast %cst_13 : f32 to vector<512x128xf32>
    %27 = arith.mulf %26, %23 : vector<512x128xf32>
    %28 = arith.select %25, %23, %27 : vector<512x128xi1>, vector<512x128xf32>
    %29 = arith.truncf %28 : vector<512x128xf32> to vector<512x128xbf16>
    %c0_14 = arith.constant 0 : index
    %c0_15 = arith.constant 0 : index
    %30 = vector.load %arg6[%c0_14, %c0_15] : memref<512x128xbf16, #tpu.memory_space<vmem>>, vector<512x128xbf16>
    tpu.vector_store %arg6[%c0_14, %c0_15], %29 {strides = array<i32>} : memref<512x128xbf16, #tpu.memory_space<vmem>>, vector<512x128xbf16>,
    return
  }
  func.func @transform_0(%arg0: i32) -> (i32, i32) {
    %c0_i32 = arith.constant 0 : i32
    %c0_i32_0 = arith.constant 0 : i32
    return %arg0, %c0_i32 : i32, i32
  }
  func.func @transform_1(%arg0: i32) -> (i32, i32) {
    %c0_i32 = arith.constant 0 : i32
    %c0_i32_0 = arith.constant 0 : i32
    %c0_i32_1 = arith.constant 0 : i32
    return %c0_i32, %c0_i32_0 : i32, i32
  }
  func.func @transform_2(%arg0: i32) -> (i32, i32) {
    %c0_i32 = arith.constant 0 : i32
    %c0_i32_0 = arith.constant 0 : i32
    %c0_i32_1 = arith.constant 0 : i32
    return %c0_i32, %c0_i32_0 : i32, i32
  }
  func.func @transform_3(%arg0: i32) -> (i32, i32) {
    %c0_i32 = arith.constant 0 : i32
    %c0_i32_0 = arith.constant 0 : i32
    %c0_i32_1 = arith.constant 0 : i32
    return %c0_i32, %c0_i32_0 : i32, i32
  }
  func.func @transform_4(%arg0: i32) -> (i32, i32) {
    %c0_i32 = arith.constant 0 : i32
    %c0_i32_0 = arith.constant 0 : i32
    %c0_i32_1 = arith.constant 0 : i32
    return %c0_i32, %c0_i32_0 : i32, i32
  }
  func.func @transform_5(%arg0: i32) -> (i32, i32) {
    %c0_i32 = arith.constant 0 : i32
    %c0_i32_0 = arith.constant 0 : i32
    return %arg0, %c0_i32 : i32, i32
  }
}

module attributes {stable_mosaic.version = 11 : i64} {
  func.func @_gemm_stats_kernel(%arg0: i32, %arg1: memref<512x128xbf16, #tpu.memory_space<vmem>>, %arg2: memref<128x128xbf16, #tpu.memory_space<vmem>>, %arg3: memref<512x128xbf16, #tpu.memory_space<vmem>>, %arg4: memref<1x128xf32, #tpu.memory_space<vmem>>, %arg5: memref<1x128xf32, #tpu.memory_space<vmem>>) attributes {dimension_semantics = [#tpu.dimension_semantics<arbitrary>], iteration_bounds = array<i64: 1>, scalar_prefetch = 0 : i64, scratch_operands = 0 : i64, tpu.core_type = #tpu.core_type<tc>, window_params = [{transform_indices = @transform_0, window_bounds = array<i64: 512, 128>}, {pipeline_mode = #tpu.pipeline_mode<synchronous>, transform_indices = @transform_1, window_bounds = array<i64: 128, 128>}, {transform_indices = @transform_2, window_bounds = array<i64: 512, 128>}, {pipeline_mode = #tpu.pipeline_mode<synchronous>, transform_indices = @transform_3, window_bounds = array<i64: 1, 128>}, {pipeline_mode = #tpu.pipeline_mode<synchronous>, transform_indices = @transform_4, window_bounds = array<i64: 1, 128>}]} {
    %c0_i32 = arith.constant 0 : i32
    %0 = arith.cmpi eq, %arg0, %c0_i32 : i32
    %1 = arith.extui %0 : i1 to i32
    %c0_i32_0 = arith.constant 0 : i32
    %2 = arith.cmpi ne, %1, %c0_i32_0 : i32
    scf.if %2 {
      %cst_16 = arith.constant 0.000000e+00 : f32
      %19 = vector.broadcast %cst_16 : f32 to vector<1x128xf32>
      %c0_17 = arith.constant 0 : index
      %c0_18 = arith.constant 0 : index
      %20 = vector.load %arg4[%c0_17, %c0_18] : memref<1x128xf32, #tpu.memory_space<vmem>>, vector<1x128xf32>
      tpu.vector_store %arg4[%c0_17, %c0_18], %19 {strides = array<i32>} : memref<1x128xf32, #tpu.memory_space<vmem>>, vector<1x128xf32>,
      %cst_19 = arith.constant 0.000000e+00 : f32
      %21 = vector.broadcast %cst_19 : f32 to vector<1x128xf32>
      %c0_20 = arith.constant 0 : index
      %c0_21 = arith.constant 0 : index
      %22 = vector.load %arg5[%c0_20, %c0_21] : memref<1x128xf32, #tpu.memory_space<vmem>>, vector<1x128xf32>
      tpu.vector_store %arg5[%c0_20, %c0_21], %21 {strides = array<i32>} : memref<1x128xf32, #tpu.memory_space<vmem>>, vector<1x128xf32>,
    } else {
    }
    %c0 = arith.constant 0 : index
    %c0_1 = arith.constant 0 : index
    %3 = vector.load %arg1[%c0, %c0_1] : memref<512x128xbf16, #tpu.memory_space<vmem>>, vector<512x128xbf16>
    %c0_2 = arith.constant 0 : index
    %c0_3 = arith.constant 0 : index
    %4 = vector.load %arg2[%c0_2, %c0_3] : memref<128x128xbf16, #tpu.memory_space<vmem>>, vector<128x128xbf16>
    %cst = arith.constant dense<0.000000e+00> : vector<512x128xf32>
    %5 = tpu.matmul %3, %4, %cst {dimension_numbers = #tpu.dot_dimension_numbers<[1], [0], [0], [1], [0, 0, 1, 1], [], []>} : vector<512x128xbf16>, vector<128x128xbf16>, vector<512x128xf32> -> vector<512x128xf32>
    %6 = arith.truncf %5 : vector<512x128xf32> to vector<512x128xbf16>
    %c0_4 = arith.constant 0 : index
    %c0_5 = arith.constant 0 : index
    %7 = vector.load %arg3[%c0_4, %c0_5] : memref<512x128xbf16, #tpu.memory_space<vmem>>, vector<512x128xbf16>
    tpu.vector_store %arg3[%c0_4, %c0_5], %6 {strides = array<i32>} : memref<512x128xbf16, #tpu.memory_space<vmem>>, vector<512x128xbf16>,
    %c0_6 = arith.constant 0 : index
    %c0_7 = arith.constant 0 : index
    %8 = vector.load %arg4[%c0_6, %c0_7] : memref<1x128xf32, #tpu.memory_space<vmem>>, vector<1x128xf32>
    %cst_8 = arith.constant dense<0.000000e+00> : vector<128xf32>
    %9 = vector.multi_reduction <add>, %5, %cst_8 [0] : vector<512x128xf32> to vector<128xf32>
    %10 = vector.shape_cast %9 : vector<128xf32> to vector<1x128xf32>
    %11 = arith.addf %8, %10 : vector<1x128xf32>
    %c0_9 = arith.constant 0 : index
    %c0_10 = arith.constant 0 : index
    %12 = vector.load %arg4[%c0_9, %c0_10] : memref<1x128xf32, #tpu.memory_space<vmem>>, vector<1x128xf32>
    tpu.vector_store %arg4[%c0_9, %c0_10], %11 {strides = array<i32>} : memref<1x128xf32, #tpu.memory_space<vmem>>, vector<1x128xf32>,
    %c0_11 = arith.constant 0 : index
    %c0_12 = arith.constant 0 : index
    %13 = vector.load %arg5[%c0_11, %c0_12] : memref<1x128xf32, #tpu.memory_space<vmem>>, vector<1x128xf32>
    %14 = arith.mulf %5, %5 : vector<512x128xf32>
    %cst_13 = arith.constant dense<0.000000e+00> : vector<128xf32>
    %15 = vector.multi_reduction <add>, %14, %cst_13 [0] : vector<512x128xf32> to vector<128xf32>
    %16 = vector.shape_cast %15 : vector<128xf32> to vector<1x128xf32>
    %17 = arith.addf %13, %16 : vector<1x128xf32>
    %c0_14 = arith.constant 0 : index
    %c0_15 = arith.constant 0 : index
    %18 = vector.load %arg5[%c0_14, %c0_15] : memref<1x128xf32, #tpu.memory_space<vmem>>, vector<1x128xf32>
    tpu.vector_store %arg5[%c0_14, %c0_15], %17 {strides = array<i32>} : memref<1x128xf32, #tpu.memory_space<vmem>>, vector<1x128xf32>,
    return
  }
  func.func @transform_0(%arg0: i32) -> (i32, i32) {
    %c0_i32 = arith.constant 0 : i32
    %c0_i32_0 = arith.constant 0 : i32
    return %arg0, %c0_i32 : i32, i32
  }
  func.func @transform_1(%arg0: i32) -> (i32, i32) {
    %c0_i32 = arith.constant 0 : i32
    %c0_i32_0 = arith.constant 0 : i32
    %c0_i32_1 = arith.constant 0 : i32
    return %c0_i32, %c0_i32_0 : i32, i32
  }
  func.func @transform_2(%arg0: i32) -> (i32, i32) {
    %c0_i32 = arith.constant 0 : i32
    %c0_i32_0 = arith.constant 0 : i32
    return %arg0, %c0_i32 : i32, i32
  }
  func.func @transform_3(%arg0: i32) -> (i32, i32) {
    %c0_i32 = arith.constant 0 : i32
    %c0_i32_0 = arith.constant 0 : i32
    %c0_i32_1 = arith.constant 0 : i32
    return %c0_i32, %c0_i32_0 : i32, i32
  }
  func.func @transform_4(%arg0: i32) -> (i32, i32) {
    %c0_i32 = arith.constant 0 : i32
    %c0_i32_0 = arith.constant 0 : i32
    %c0_i32_1 = arith.constant 0 : i32
    return %c0_i32, %c0_i32_0 : i32, i32
  }
}

module attributes {stable_mosaic.version = 11 : i64} {
  func.func @_bn_lrelu_kernel(%arg0: i32, %arg1: memref<512x128xbf16, #tpu.memory_space<vmem>>, %arg2: memref<1x128xf32, #tpu.memory_space<vmem>>, %arg3: memref<1x128xf32, #tpu.memory_space<vmem>>, %arg4: memref<1x128xf32, #tpu.memory_space<vmem>>, %arg5: memref<1x128xf32, #tpu.memory_space<vmem>>, %arg6: memref<512x128xbf16, #tpu.memory_space<vmem>>) attributes {dimension_semantics = [#tpu.dimension_semantics<parallel>], iteration_bounds = array<i64: 1>, scalar_prefetch = 0 : i64, scratch_operands = 0 : i64, tpu.core_type = #tpu.core_type<tc>, window_params = [{transform_indices = @transform_0, window_bounds = array<i64: 512, 128>}, {pipeline_mode = #tpu.pipeline_mode<synchronous>, transform_indices = @transform_1, window_bounds = array<i64: 1, 128>}, {pipeline_mode = #tpu.pipeline_mode<synchronous>, transform_indices = @transform_2, window_bounds = array<i64: 1, 128>}, {pipeline_mode = #tpu.pipeline_mode<synchronous>, transform_indices = @transform_3, window_bounds = array<i64: 1, 128>}, {pipeline_mode = #tpu.pipeline_mode<synchronous>, transform_indices = @transform_4, window_bounds = array<i64: 1, 128>}, {transform_indices = @transform_5, window_bounds = array<i64: 512, 128>}]} {
    %c0 = arith.constant 0 : index
    %c0_0 = arith.constant 0 : index
    %0 = vector.load %arg2[%c0, %c0_0] : memref<1x128xf32, #tpu.memory_space<vmem>>, vector<1x128xf32>
    %cst = arith.constant 0.001953125 : f32
    %1 = vector.broadcast %cst : f32 to vector<1x128xf32>
    %2 = arith.mulf %0, %1 : vector<1x128xf32>
    %c0_1 = arith.constant 0 : index
    %c0_2 = arith.constant 0 : index
    %3 = vector.load %arg3[%c0_1, %c0_2] : memref<1x128xf32, #tpu.memory_space<vmem>>, vector<1x128xf32>
    %cst_3 = arith.constant 0.001953125 : f32
    %4 = vector.broadcast %cst_3 : f32 to vector<1x128xf32>
    %5 = arith.mulf %3, %4 : vector<1x128xf32>
    %6 = arith.mulf %2, %2 : vector<1x128xf32>
    %7 = arith.subf %5, %6 : vector<1x128xf32>
    %cst_4 = arith.constant 0.000000e+00 : f32
    %8 = vector.broadcast %cst_4 : f32 to vector<1x128xf32>
    %9 = arith.maximumf %7, %8 : vector<1x128xf32>
    %c0_5 = arith.constant 0 : index
    %c0_6 = arith.constant 0 : index
    %10 = vector.load %arg4[%c0_5, %c0_6] : memref<1x128xf32, #tpu.memory_space<vmem>>, vector<1x128xf32>
    %cst_7 = arith.constant 9.99999974E-6 : f32
    %11 = vector.broadcast %cst_7 : f32 to vector<1x128xf32>
    %12 = arith.addf %9, %11 : vector<1x128xf32>
    %13 = math.rsqrt %12 : vector<1x128xf32>
    %14 = arith.mulf %10, %13 : vector<1x128xf32>
    %c0_8 = arith.constant 0 : index
    %c0_9 = arith.constant 0 : index
    %15 = vector.load %arg5[%c0_8, %c0_9] : memref<1x128xf32, #tpu.memory_space<vmem>>, vector<1x128xf32>
    %16 = arith.mulf %2, %14 : vector<1x128xf32>
    %17 = arith.subf %15, %16 : vector<1x128xf32>
    %c0_10 = arith.constant 0 : index
    %c0_11 = arith.constant 0 : index
    %18 = vector.load %arg1[%c0_10, %c0_11] : memref<512x128xbf16, #tpu.memory_space<vmem>>, vector<512x128xbf16>
    %19 = arith.extf %18 : vector<512x128xbf16> to vector<512x128xf32>
    %20 = vector.broadcast %14 : vector<1x128xf32> to vector<512x128xf32>
    %21 = arith.mulf %19, %20 : vector<512x128xf32>
    %22 = vector.broadcast %17 : vector<1x128xf32> to vector<512x128xf32>
    %23 = arith.addf %21, %22 : vector<512x128xf32>
    %cst_12 = arith.constant 0.000000e+00 : f32
    %24 = vector.broadcast %cst_12 : f32 to vector<512x128xf32>
    %25 = arith.cmpf oge, %23, %24 : vector<512x128xf32>
    %cst_13 = arith.constant 2.000000e-01 : f32
    %26 = vector.broadcast %cst_13 : f32 to vector<512x128xf32>
    %27 = arith.mulf %26, %23 : vector<512x128xf32>
    %28 = arith.select %25, %23, %27 : vector<512x128xi1>, vector<512x128xf32>
    %29 = arith.truncf %28 : vector<512x128xf32> to vector<512x128xbf16>
    %c0_14 = arith.constant 0 : index
    %c0_15 = arith.constant 0 : index
    %30 = vector.load %arg6[%c0_14, %c0_15] : memref<512x128xbf16, #tpu.memory_space<vmem>>, vector<512x128xbf16>
    tpu.vector_store %arg6[%c0_14, %c0_15], %29 {strides = array<i32>} : memref<512x128xbf16, #tpu.memory_space<vmem>>, vector<512x128xbf16>,
    return
  }
  func.func @transform_0(%arg0: i32) -> (i32, i32) {
    %c0_i32 = arith.constant 0 : i32
    %c0_i32_0 = arith.constant 0 : i32
    return %arg0, %c0_i32 : i32, i32
  }
  func.func @transform_1(%arg0: i32) -> (i32, i32) {
    %c0_i32 = arith.constant 0 : i32
    %c0_i32_0 = arith.constant 0 : i32
    %c0_i32_1 = arith.constant 0 : i32
    return %c0_i32, %c0_i32_0 : i32, i32
  }
  func.func @transform_2(%arg0: i32) -> (i32, i32) {
    %c0_i32 = arith.constant 0 : i32
    %c0_i32_0 = arith.constant 0 : i32
    %c0_i32_1 = arith.constant 0 : i32
    return %c0_i32, %c0_i32_0 : i32, i32
  }
  func.func @transform_3(%arg0: i32) -> (i32, i32) {
    %c0_i32 = arith.constant 0 : i32
    %c0_i32_0 = arith.constant 0 : i32
    %c0_i32_1 = arith.constant 0 : i32
    return %c0_i32, %c0_i32_0 : i32, i32
  }
  func.func @transform_4(%arg0: i32) -> (i32, i32) {
    %c0_i32 = arith.constant 0 : i32
    %c0_i32_0 = arith.constant 0 : i32
    %c0_i32_1 = arith.constant 0 : i32
    return %c0_i32, %c0_i32_0 : i32, i32
  }
  func.func @transform_5(%arg0: i32) -> (i32, i32) {
    %c0_i32 = arith.constant 0 : i32
    %c0_i32_0 = arith.constant 0 : i32
    return %arg0, %c0_i32 : i32, i32
  }
}

module attributes {stable_mosaic.version = 11 : i64} {
  func.func @_gemm_stats_kernel(%arg0: i32, %arg1: memref<128x256xbf16, #tpu.memory_space<vmem>>, %arg2: memref<256x128xbf16, #tpu.memory_space<vmem>>, %arg3: memref<128x128xbf16, #tpu.memory_space<vmem>>, %arg4: memref<1x128xf32, #tpu.memory_space<vmem>>, %arg5: memref<1x128xf32, #tpu.memory_space<vmem>>) attributes {dimension_semantics = [#tpu.dimension_semantics<arbitrary>], iteration_bounds = array<i64: 1>, scalar_prefetch = 0 : i64, scratch_operands = 0 : i64, tpu.core_type = #tpu.core_type<tc>, window_params = [{transform_indices = @transform_0, window_bounds = array<i64: 128, 256>}, {pipeline_mode = #tpu.pipeline_mode<synchronous>, transform_indices = @transform_1, window_bounds = array<i64: 256, 128>}, {transform_indices = @transform_2, window_bounds = array<i64: 128, 128>}, {pipeline_mode = #tpu.pipeline_mode<synchronous>, transform_indices = @transform_3, window_bounds = array<i64: 1, 128>}, {pipeline_mode = #tpu.pipeline_mode<synchronous>, transform_indices = @transform_4, window_bounds = array<i64: 1, 128>}]} {
    %c0_i32 = arith.constant 0 : i32
    %0 = arith.cmpi eq, %arg0, %c0_i32 : i32
    %1 = arith.extui %0 : i1 to i32
    %c0_i32_0 = arith.constant 0 : i32
    %2 = arith.cmpi ne, %1, %c0_i32_0 : i32
    scf.if %2 {
      %cst_16 = arith.constant 0.000000e+00 : f32
      %19 = vector.broadcast %cst_16 : f32 to vector<1x128xf32>
      %c0_17 = arith.constant 0 : index
      %c0_18 = arith.constant 0 : index
      %20 = vector.load %arg4[%c0_17, %c0_18] : memref<1x128xf32, #tpu.memory_space<vmem>>, vector<1x128xf32>
      tpu.vector_store %arg4[%c0_17, %c0_18], %19 {strides = array<i32>} : memref<1x128xf32, #tpu.memory_space<vmem>>, vector<1x128xf32>,
      %cst_19 = arith.constant 0.000000e+00 : f32
      %21 = vector.broadcast %cst_19 : f32 to vector<1x128xf32>
      %c0_20 = arith.constant 0 : index
      %c0_21 = arith.constant 0 : index
      %22 = vector.load %arg5[%c0_20, %c0_21] : memref<1x128xf32, #tpu.memory_space<vmem>>, vector<1x128xf32>
      tpu.vector_store %arg5[%c0_20, %c0_21], %21 {strides = array<i32>} : memref<1x128xf32, #tpu.memory_space<vmem>>, vector<1x128xf32>,
    } else {
    }
    %c0 = arith.constant 0 : index
    %c0_1 = arith.constant 0 : index
    %3 = vector.load %arg1[%c0, %c0_1] : memref<128x256xbf16, #tpu.memory_space<vmem>>, vector<128x256xbf16>
    %c0_2 = arith.constant 0 : index
    %c0_3 = arith.constant 0 : index
    %4 = vector.load %arg2[%c0_2, %c0_3] : memref<256x128xbf16, #tpu.memory_space<vmem>>, vector<256x128xbf16>
    %cst = arith.constant dense<0.000000e+00> : vector<128x128xf32>
    %5 = tpu.matmul %3, %4, %cst {dimension_numbers = #tpu.dot_dimension_numbers<[1], [0], [0], [1], [0, 0, 1, 1], [], []>} : vector<128x256xbf16>, vector<256x128xbf16>, vector<128x128xf32> -> vector<128x128xf32>
    %6 = arith.truncf %5 : vector<128x128xf32> to vector<128x128xbf16>
    %c0_4 = arith.constant 0 : index
    %c0_5 = arith.constant 0 : index
    %7 = vector.load %arg3[%c0_4, %c0_5] : memref<128x128xbf16, #tpu.memory_space<vmem>>, vector<128x128xbf16>
    tpu.vector_store %arg3[%c0_4, %c0_5], %6 {strides = array<i32>} : memref<128x128xbf16, #tpu.memory_space<vmem>>, vector<128x128xbf16>,
    %c0_6 = arith.constant 0 : index
    %c0_7 = arith.constant 0 : index
    %8 = vector.load %arg4[%c0_6, %c0_7] : memref<1x128xf32, #tpu.memory_space<vmem>>, vector<1x128xf32>
    %cst_8 = arith.constant dense<0.000000e+00> : vector<128xf32>
    %9 = vector.multi_reduction <add>, %5, %cst_8 [0] : vector<128x128xf32> to vector<128xf32>
    %10 = vector.shape_cast %9 : vector<128xf32> to vector<1x128xf32>
    %11 = arith.addf %8, %10 : vector<1x128xf32>
    %c0_9 = arith.constant 0 : index
    %c0_10 = arith.constant 0 : index
    %12 = vector.load %arg4[%c0_9, %c0_10] : memref<1x128xf32, #tpu.memory_space<vmem>>, vector<1x128xf32>
    tpu.vector_store %arg4[%c0_9, %c0_10], %11 {strides = array<i32>} : memref<1x128xf32, #tpu.memory_space<vmem>>, vector<1x128xf32>,
    %c0_11 = arith.constant 0 : index
    %c0_12 = arith.constant 0 : index
    %13 = vector.load %arg5[%c0_11, %c0_12] : memref<1x128xf32, #tpu.memory_space<vmem>>, vector<1x128xf32>
    %14 = arith.mulf %5, %5 : vector<128x128xf32>
    %cst_13 = arith.constant dense<0.000000e+00> : vector<128xf32>
    %15 = vector.multi_reduction <add>, %14, %cst_13 [0] : vector<128x128xf32> to vector<128xf32>
    %16 = vector.shape_cast %15 : vector<128xf32> to vector<1x128xf32>
    %17 = arith.addf %13, %16 : vector<1x128xf32>
    %c0_14 = arith.constant 0 : index
    %c0_15 = arith.constant 0 : index
    %18 = vector.load %arg5[%c0_14, %c0_15] : memref<1x128xf32, #tpu.memory_space<vmem>>, vector<1x128xf32>
    tpu.vector_store %arg5[%c0_14, %c0_15], %17 {strides = array<i32>} : memref<1x128xf32, #tpu.memory_space<vmem>>, vector<1x128xf32>,
    return
  }
  func.func @transform_0(%arg0: i32) -> (i32, i32) {
    %c0_i32 = arith.constant 0 : i32
    %c0_i32_0 = arith.constant 0 : i32
    return %arg0, %c0_i32 : i32, i32
  }
  func.func @transform_1(%arg0: i32) -> (i32, i32) {
    %c0_i32 = arith.constant 0 : i32
    %c0_i32_0 = arith.constant 0 : i32
    %c0_i32_1 = arith.constant 0 : i32
    return %c0_i32, %c0_i32_0 : i32, i32
  }
  func.func @transform_2(%arg0: i32) -> (i32, i32) {
    %c0_i32 = arith.constant 0 : i32
    %c0_i32_0 = arith.constant 0 : i32
    return %arg0, %c0_i32 : i32, i32
  }
  func.func @transform_3(%arg0: i32) -> (i32, i32) {
    %c0_i32 = arith.constant 0 : i32
    %c0_i32_0 = arith.constant 0 : i32
    %c0_i32_1 = arith.constant 0 : i32
    return %c0_i32, %c0_i32_0 : i32, i32
  }
  func.func @transform_4(%arg0: i32) -> (i32, i32) {
    %c0_i32 = arith.constant 0 : i32
    %c0_i32_0 = arith.constant 0 : i32
    %c0_i32_1 = arith.constant 0 : i32
    return %c0_i32, %c0_i32_0 : i32, i32
  }
}

module attributes {stable_mosaic.version = 11 : i64} {
  func.func @_bn_lrelu_kernel(%arg0: i32, %arg1: memref<128x128xbf16, #tpu.memory_space<vmem>>, %arg2: memref<1x128xf32, #tpu.memory_space<vmem>>, %arg3: memref<1x128xf32, #tpu.memory_space<vmem>>, %arg4: memref<1x128xf32, #tpu.memory_space<vmem>>, %arg5: memref<1x128xf32, #tpu.memory_space<vmem>>, %arg6: memref<128x128xbf16, #tpu.memory_space<vmem>>) attributes {dimension_semantics = [#tpu.dimension_semantics<parallel>], iteration_bounds = array<i64: 1>, scalar_prefetch = 0 : i64, scratch_operands = 0 : i64, tpu.core_type = #tpu.core_type<tc>, window_params = [{transform_indices = @transform_0, window_bounds = array<i64: 128, 128>}, {pipeline_mode = #tpu.pipeline_mode<synchronous>, transform_indices = @transform_1, window_bounds = array<i64: 1, 128>}, {pipeline_mode = #tpu.pipeline_mode<synchronous>, transform_indices = @transform_2, window_bounds = array<i64: 1, 128>}, {pipeline_mode = #tpu.pipeline_mode<synchronous>, transform_indices = @transform_3, window_bounds = array<i64: 1, 128>}, {pipeline_mode = #tpu.pipeline_mode<synchronous>, transform_indices = @transform_4, window_bounds = array<i64: 1, 128>}, {transform_indices = @transform_5, window_bounds = array<i64: 128, 128>}]} {
    %c0 = arith.constant 0 : index
    %c0_0 = arith.constant 0 : index
    %0 = vector.load %arg2[%c0, %c0_0] : memref<1x128xf32, #tpu.memory_space<vmem>>, vector<1x128xf32>
    %cst = arith.constant 7.812500e-03 : f32
    %1 = vector.broadcast %cst : f32 to vector<1x128xf32>
    %2 = arith.mulf %0, %1 : vector<1x128xf32>
    %c0_1 = arith.constant 0 : index
    %c0_2 = arith.constant 0 : index
    %3 = vector.load %arg3[%c0_1, %c0_2] : memref<1x128xf32, #tpu.memory_space<vmem>>, vector<1x128xf32>
    %cst_3 = arith.constant 7.812500e-03 : f32
    %4 = vector.broadcast %cst_3 : f32 to vector<1x128xf32>
    %5 = arith.mulf %3, %4 : vector<1x128xf32>
    %6 = arith.mulf %2, %2 : vector<1x128xf32>
    %7 = arith.subf %5, %6 : vector<1x128xf32>
    %cst_4 = arith.constant 0.000000e+00 : f32
    %8 = vector.broadcast %cst_4 : f32 to vector<1x128xf32>
    %9 = arith.maximumf %7, %8 : vector<1x128xf32>
    %c0_5 = arith.constant 0 : index
    %c0_6 = arith.constant 0 : index
    %10 = vector.load %arg4[%c0_5, %c0_6] : memref<1x128xf32, #tpu.memory_space<vmem>>, vector<1x128xf32>
    %cst_7 = arith.constant 9.99999974E-6 : f32
    %11 = vector.broadcast %cst_7 : f32 to vector<1x128xf32>
    %12 = arith.addf %9, %11 : vector<1x128xf32>
    %13 = math.rsqrt %12 : vector<1x128xf32>
    %14 = arith.mulf %10, %13 : vector<1x128xf32>
    %c0_8 = arith.constant 0 : index
    %c0_9 = arith.constant 0 : index
    %15 = vector.load %arg5[%c0_8, %c0_9] : memref<1x128xf32, #tpu.memory_space<vmem>>, vector<1x128xf32>
    %16 = arith.mulf %2, %14 : vector<1x128xf32>
    %17 = arith.subf %15, %16 : vector<1x128xf32>
    %c0_10 = arith.constant 0 : index
    %c0_11 = arith.constant 0 : index
    %18 = vector.load %arg1[%c0_10, %c0_11] : memref<128x128xbf16, #tpu.memory_space<vmem>>, vector<128x128xbf16>
    %19 = arith.extf %18 : vector<128x128xbf16> to vector<128x128xf32>
    %20 = vector.broadcast %14 : vector<1x128xf32> to vector<128x128xf32>
    %21 = arith.mulf %19, %20 : vector<128x128xf32>
    %22 = vector.broadcast %17 : vector<1x128xf32> to vector<128x128xf32>
    %23 = arith.addf %21, %22 : vector<128x128xf32>
    %cst_12 = arith.constant 0.000000e+00 : f32
    %24 = vector.broadcast %cst_12 : f32 to vector<128x128xf32>
    %25 = arith.cmpf oge, %23, %24 : vector<128x128xf32>
    %cst_13 = arith.constant 2.000000e-01 : f32
    %26 = vector.broadcast %cst_13 : f32 to vector<128x128xf32>
    %27 = arith.mulf %26, %23 : vector<128x128xf32>
    %28 = arith.select %25, %23, %27 : vector<128x128xi1>, vector<128x128xf32>
    %29 = arith.truncf %28 : vector<128x128xf32> to vector<128x128xbf16>
    %c0_14 = arith.constant 0 : index
    %c0_15 = arith.constant 0 : index
    %30 = vector.load %arg6[%c0_14, %c0_15] : memref<128x128xbf16, #tpu.memory_space<vmem>>, vector<128x128xbf16>
    tpu.vector_store %arg6[%c0_14, %c0_15], %29 {strides = array<i32>} : memref<128x128xbf16, #tpu.memory_space<vmem>>, vector<128x128xbf16>,
    return
  }
  func.func @transform_0(%arg0: i32) -> (i32, i32) {
    %c0_i32 = arith.constant 0 : i32
    %c0_i32_0 = arith.constant 0 : i32
    return %arg0, %c0_i32 : i32, i32
  }
  func.func @transform_1(%arg0: i32) -> (i32, i32) {
    %c0_i32 = arith.constant 0 : i32
    %c0_i32_0 = arith.constant 0 : i32
    %c0_i32_1 = arith.constant 0 : i32
    return %c0_i32, %c0_i32_0 : i32, i32
  }
  func.func @transform_2(%arg0: i32) -> (i32, i32) {
    %c0_i32 = arith.constant 0 : i32
    %c0_i32_0 = arith.constant 0 : i32
    %c0_i32_1 = arith.constant 0 : i32
    return %c0_i32, %c0_i32_0 : i32, i32
  }
  func.func @transform_3(%arg0: i32) -> (i32, i32) {
    %c0_i32 = arith.constant 0 : i32
    %c0_i32_0 = arith.constant 0 : i32
    %c0_i32_1 = arith.constant 0 : i32
    return %c0_i32, %c0_i32_0 : i32, i32
  }
  func.func @transform_4(%arg0: i32) -> (i32, i32) {
    %c0_i32 = arith.constant 0 : i32
    %c0_i32_0 = arith.constant 0 : i32
    %c0_i32_1 = arith.constant 0 : i32
    return %c0_i32, %c0_i32_0 : i32, i32
  }
  func.func @transform_5(%arg0: i32) -> (i32, i32) {
    %c0_i32 = arith.constant 0 : i32
    %c0_i32_0 = arith.constant 0 : i32
    return %arg0, %c0_i32 : i32, i32
  }
}

module attributes {stable_mosaic.version = 11 : i64} {
  func.func @_bn_lrelu_kernel(%arg0: i32, %arg1: memref<32x128xbf16, #tpu.memory_space<vmem>>, %arg2: memref<1x128xf32, #tpu.memory_space<vmem>>, %arg3: memref<1x128xf32, #tpu.memory_space<vmem>>, %arg4: memref<1x128xf32, #tpu.memory_space<vmem>>, %arg5: memref<1x128xf32, #tpu.memory_space<vmem>>, %arg6: memref<32x128xbf16, #tpu.memory_space<vmem>>) attributes {dimension_semantics = [#tpu.dimension_semantics<parallel>], iteration_bounds = array<i64: 1>, scalar_prefetch = 0 : i64, scratch_operands = 0 : i64, tpu.core_type = #tpu.core_type<tc>, window_params = [{transform_indices = @transform_0, window_bounds = array<i64: 32, 128>}, {pipeline_mode = #tpu.pipeline_mode<synchronous>, transform_indices = @transform_1, window_bounds = array<i64: 1, 128>}, {pipeline_mode = #tpu.pipeline_mode<synchronous>, transform_indices = @transform_2, window_bounds = array<i64: 1, 128>}, {pipeline_mode = #tpu.pipeline_mode<synchronous>, transform_indices = @transform_3, window_bounds = array<i64: 1, 128>}, {pipeline_mode = #tpu.pipeline_mode<synchronous>, transform_indices = @transform_4, window_bounds = array<i64: 1, 128>}, {transform_indices = @transform_5, window_bounds = array<i64: 32, 128>}]} {
    %c0 = arith.constant 0 : index
    %c0_0 = arith.constant 0 : index
    %0 = vector.load %arg2[%c0, %c0_0] : memref<1x128xf32, #tpu.memory_space<vmem>>, vector<1x128xf32>
    %cst = arith.constant 3.125000e-02 : f32
    %1 = vector.broadcast %cst : f32 to vector<1x128xf32>
    %2 = arith.mulf %0, %1 : vector<1x128xf32>
    %c0_1 = arith.constant 0 : index
    %c0_2 = arith.constant 0 : index
    %3 = vector.load %arg3[%c0_1, %c0_2] : memref<1x128xf32, #tpu.memory_space<vmem>>, vector<1x128xf32>
    %cst_3 = arith.constant 3.125000e-02 : f32
    %4 = vector.broadcast %cst_3 : f32 to vector<1x128xf32>
    %5 = arith.mulf %3, %4 : vector<1x128xf32>
    %6 = arith.mulf %2, %2 : vector<1x128xf32>
    %7 = arith.subf %5, %6 : vector<1x128xf32>
    %cst_4 = arith.constant 0.000000e+00 : f32
    %8 = vector.broadcast %cst_4 : f32 to vector<1x128xf32>
    %9 = arith.maximumf %7, %8 : vector<1x128xf32>
    %c0_5 = arith.constant 0 : index
    %c0_6 = arith.constant 0 : index
    %10 = vector.load %arg4[%c0_5, %c0_6] : memref<1x128xf32, #tpu.memory_space<vmem>>, vector<1x128xf32>
    %cst_7 = arith.constant 9.99999974E-6 : f32
    %11 = vector.broadcast %cst_7 : f32 to vector<1x128xf32>
    %12 = arith.addf %9, %11 : vector<1x128xf32>
    %13 = math.rsqrt %12 : vector<1x128xf32>
    %14 = arith.mulf %10, %13 : vector<1x128xf32>
    %c0_8 = arith.constant 0 : index
    %c0_9 = arith.constant 0 : index
    %15 = vector.load %arg5[%c0_8, %c0_9] : memref<1x128xf32, #tpu.memory_space<vmem>>, vector<1x128xf32>
    %16 = arith.mulf %2, %14 : vector<1x128xf32>
    %17 = arith.subf %15, %16 : vector<1x128xf32>
    %c0_10 = arith.constant 0 : index
    %c0_11 = arith.constant 0 : index
    %18 = vector.load %arg1[%c0_10, %c0_11] : memref<32x128xbf16, #tpu.memory_space<vmem>>, vector<32x128xbf16>
    %19 = arith.extf %18 : vector<32x128xbf16> to vector<32x128xf32>
    %20 = vector.broadcast %14 : vector<1x128xf32> to vector<32x128xf32>
    %21 = arith.mulf %19, %20 : vector<32x128xf32>
    %22 = vector.broadcast %17 : vector<1x128xf32> to vector<32x128xf32>
    %23 = arith.addf %21, %22 : vector<32x128xf32>
    %cst_12 = arith.constant 0.000000e+00 : f32
    %24 = vector.broadcast %cst_12 : f32 to vector<32x128xf32>
    %25 = arith.cmpf oge, %23, %24 : vector<32x128xf32>
    %cst_13 = arith.constant 2.000000e-01 : f32
    %26 = vector.broadcast %cst_13 : f32 to vector<32x128xf32>
    %27 = arith.mulf %26, %23 : vector<32x128xf32>
    %28 = arith.select %25, %23, %27 : vector<32x128xi1>, vector<32x128xf32>
    %29 = arith.truncf %28 : vector<32x128xf32> to vector<32x128xbf16>
    %c0_14 = arith.constant 0 : index
    %c0_15 = arith.constant 0 : index
    %30 = vector.load %arg6[%c0_14, %c0_15] : memref<32x128xbf16, #tpu.memory_space<vmem>>, vector<32x128xbf16>
    tpu.vector_store %arg6[%c0_14, %c0_15], %29 {strides = array<i32>} : memref<32x128xbf16, #tpu.memory_space<vmem>>, vector<32x128xbf16>,
    return
  }
  func.func @transform_0(%arg0: i32) -> (i32, i32) {
    %c0_i32 = arith.constant 0 : i32
    %c0_i32_0 = arith.constant 0 : i32
    return %arg0, %c0_i32 : i32, i32
  }
  func.func @transform_1(%arg0: i32) -> (i32, i32) {
    %c0_i32 = arith.constant 0 : i32
    %c0_i32_0 = arith.constant 0 : i32
    %c0_i32_1 = arith.constant 0 : i32
    return %c0_i32, %c0_i32_0 : i32, i32
  }
  func.func @transform_2(%arg0: i32) -> (i32, i32) {
    %c0_i32 = arith.constant 0 : i32
    %c0_i32_0 = arith.constant 0 : i32
    %c0_i32_1 = arith.constant 0 : i32
    return %c0_i32, %c0_i32_0 : i32, i32
  }
  func.func @transform_3(%arg0: i32) -> (i32, i32) {
    %c0_i32 = arith.constant 0 : i32
    %c0_i32_0 = arith.constant 0 : i32
    %c0_i32_1 = arith.constant 0 : i32
    return %c0_i32, %c0_i32_0 : i32, i32
  }
  func.func @transform_4(%arg0: i32) -> (i32, i32) {
    %c0_i32 = arith.constant 0 : i32
    %c0_i32_0 = arith.constant 0 : i32
    %c0_i32_1 = arith.constant 0 : i32
    return %c0_i32, %c0_i32_0 : i32, i32
  }
  func.func @transform_5(%arg0: i32) -> (i32, i32) {
    %c0_i32 = arith.constant 0 : i32
    %c0_i32_0 = arith.constant 0 : i32
    return %arg0, %c0_i32 : i32, i32
  }
}

module attributes {stable_mosaic.version = 11 : i64} {
  func.func @_gemm_stats_kernel(%arg0: i32, %arg1: memref<32x512xbf16, #tpu.memory_space<vmem>>, %arg2: memref<512x128xbf16, #tpu.memory_space<vmem>>, %arg3: memref<32x128xbf16, #tpu.memory_space<vmem>>, %arg4: memref<1x128xf32, #tpu.memory_space<vmem>>, %arg5: memref<1x128xf32, #tpu.memory_space<vmem>>) attributes {dimension_semantics = [#tpu.dimension_semantics<arbitrary>], iteration_bounds = array<i64: 1>, scalar_prefetch = 0 : i64, scratch_operands = 0 : i64, tpu.core_type = #tpu.core_type<tc>, window_params = [{transform_indices = @transform_0, window_bounds = array<i64: 32, 512>}, {pipeline_mode = #tpu.pipeline_mode<synchronous>, transform_indices = @transform_1, window_bounds = array<i64: 512, 128>}, {transform_indices = @transform_2, window_bounds = array<i64: 32, 128>}, {pipeline_mode = #tpu.pipeline_mode<synchronous>, transform_indices = @transform_3, window_bounds = array<i64: 1, 128>}, {pipeline_mode = #tpu.pipeline_mode<synchronous>, transform_indices = @transform_4, window_bounds = array<i64: 1, 128>}]} {
    %c0_i32 = arith.constant 0 : i32
    %0 = arith.cmpi eq, %arg0, %c0_i32 : i32
    %1 = arith.extui %0 : i1 to i32
    %c0_i32_0 = arith.constant 0 : i32
    %2 = arith.cmpi ne, %1, %c0_i32_0 : i32
    scf.if %2 {
      %cst_16 = arith.constant 0.000000e+00 : f32
      %19 = vector.broadcast %cst_16 : f32 to vector<1x128xf32>
      %c0_17 = arith.constant 0 : index
      %c0_18 = arith.constant 0 : index
      %20 = vector.load %arg4[%c0_17, %c0_18] : memref<1x128xf32, #tpu.memory_space<vmem>>, vector<1x128xf32>
      tpu.vector_store %arg4[%c0_17, %c0_18], %19 {strides = array<i32>} : memref<1x128xf32, #tpu.memory_space<vmem>>, vector<1x128xf32>,
      %cst_19 = arith.constant 0.000000e+00 : f32
      %21 = vector.broadcast %cst_19 : f32 to vector<1x128xf32>
      %c0_20 = arith.constant 0 : index
      %c0_21 = arith.constant 0 : index
      %22 = vector.load %arg5[%c0_20, %c0_21] : memref<1x128xf32, #tpu.memory_space<vmem>>, vector<1x128xf32>
      tpu.vector_store %arg5[%c0_20, %c0_21], %21 {strides = array<i32>} : memref<1x128xf32, #tpu.memory_space<vmem>>, vector<1x128xf32>,
    } else {
    }
    %c0 = arith.constant 0 : index
    %c0_1 = arith.constant 0 : index
    %3 = vector.load %arg1[%c0, %c0_1] : memref<32x512xbf16, #tpu.memory_space<vmem>>, vector<32x512xbf16>
    %c0_2 = arith.constant 0 : index
    %c0_3 = arith.constant 0 : index
    %4 = vector.load %arg2[%c0_2, %c0_3] : memref<512x128xbf16, #tpu.memory_space<vmem>>, vector<512x128xbf16>
    %cst = arith.constant dense<0.000000e+00> : vector<32x128xf32>
    %5 = tpu.matmul %3, %4, %cst {dimension_numbers = #tpu.dot_dimension_numbers<[1], [0], [0], [1], [0, 0, 1, 1], [], []>} : vector<32x512xbf16>, vector<512x128xbf16>, vector<32x128xf32> -> vector<32x128xf32>
    %6 = arith.truncf %5 : vector<32x128xf32> to vector<32x128xbf16>
    %c0_4 = arith.constant 0 : index
    %c0_5 = arith.constant 0 : index
    %7 = vector.load %arg3[%c0_4, %c0_5] : memref<32x128xbf16, #tpu.memory_space<vmem>>, vector<32x128xbf16>
    tpu.vector_store %arg3[%c0_4, %c0_5], %6 {strides = array<i32>} : memref<32x128xbf16, #tpu.memory_space<vmem>>, vector<32x128xbf16>,
    %c0_6 = arith.constant 0 : index
    %c0_7 = arith.constant 0 : index
    %8 = vector.load %arg4[%c0_6, %c0_7] : memref<1x128xf32, #tpu.memory_space<vmem>>, vector<1x128xf32>
    %cst_8 = arith.constant dense<0.000000e+00> : vector<128xf32>
    %9 = vector.multi_reduction <add>, %5, %cst_8 [0] : vector<32x128xf32> to vector<128xf32>
    %10 = vector.shape_cast %9 : vector<128xf32> to vector<1x128xf32>
    %11 = arith.addf %8, %10 : vector<1x128xf32>
    %c0_9 = arith.constant 0 : index
    %c0_10 = arith.constant 0 : index
    %12 = vector.load %arg4[%c0_9, %c0_10] : memref<1x128xf32, #tpu.memory_space<vmem>>, vector<1x128xf32>
    tpu.vector_store %arg4[%c0_9, %c0_10], %11 {strides = array<i32>} : memref<1x128xf32, #tpu.memory_space<vmem>>, vector<1x128xf32>,
    %c0_11 = arith.constant 0 : index
    %c0_12 = arith.constant 0 : index
    %13 = vector.load %arg5[%c0_11, %c0_12] : memref<1x128xf32, #tpu.memory_space<vmem>>, vector<1x128xf32>
    %14 = arith.mulf %5, %5 : vector<32x128xf32>
    %cst_13 = arith.constant dense<0.000000e+00> : vector<128xf32>
    %15 = vector.multi_reduction <add>, %14, %cst_13 [0] : vector<32x128xf32> to vector<128xf32>
    %16 = vector.shape_cast %15 : vector<128xf32> to vector<1x128xf32>
    %17 = arith.addf %13, %16 : vector<1x128xf32>
    %c0_14 = arith.constant 0 : index
    %c0_15 = arith.constant 0 : index
    %18 = vector.load %arg5[%c0_14, %c0_15] : memref<1x128xf32, #tpu.memory_space<vmem>>, vector<1x128xf32>
    tpu.vector_store %arg5[%c0_14, %c0_15], %17 {strides = array<i32>} : memref<1x128xf32, #tpu.memory_space<vmem>>, vector<1x128xf32>,
    return
  }
  func.func @transform_0(%arg0: i32) -> (i32, i32) {
    %c0_i32 = arith.constant 0 : i32
    %c0_i32_0 = arith.constant 0 : i32
    return %arg0, %c0_i32 : i32, i32
  }
  func.func @transform_1(%arg0: i32) -> (i32, i32) {
    %c0_i32 = arith.constant 0 : i32
    %c0_i32_0 = arith.constant 0 : i32
    %c0_i32_1 = arith.constant 0 : i32
    return %c0_i32, %c0_i32_0 : i32, i32
  }
  func.func @transform_2(%arg0: i32) -> (i32, i32) {
    %c0_i32 = arith.constant 0 : i32
    %c0_i32_0 = arith.constant 0 : i32
    return %arg0, %c0_i32 : i32, i32
  }
  func.func @transform_3(%arg0: i32) -> (i32, i32) {
    %c0_i32 = arith.constant 0 : i32
    %c0_i32_0 = arith.constant 0 : i32
    %c0_i32_1 = arith.constant 0 : i32
    return %c0_i32, %c0_i32_0 : i32, i32
  }
  func.func @transform_4(%arg0: i32) -> (i32, i32) {
    %c0_i32 = arith.constant 0 : i32
    %c0_i32_0 = arith.constant 0 : i32
    %c0_i32_1 = arith.constant 0 : i32
    return %c0_i32, %c0_i32_0 : i32, i32
  }
}

module attributes {stable_mosaic.version = 11 : i64} {
  func.func @_gemm_bias_sigmoid_kernel(%arg0: i32, %arg1: memref<8x1024xbf16, #tpu.memory_space<vmem>>, %arg2: memref<1024x128xbf16, #tpu.memory_space<vmem>>, %arg3: memref<1x128xf32, #tpu.memory_space<vmem>>, %arg4: memref<8x128xf32, #tpu.memory_space<vmem>>) attributes {dimension_semantics = [#tpu.dimension_semantics<arbitrary>], iteration_bounds = array<i64: 1>, scalar_prefetch = 0 : i64, scratch_operands = 0 : i64, tpu.core_type = #tpu.core_type<tc>, window_params = [{pipeline_mode = #tpu.pipeline_mode<synchronous>, transform_indices = @transform_0, window_bounds = array<i64: 8, 1024>}, {pipeline_mode = #tpu.pipeline_mode<synchronous>, transform_indices = @transform_1, window_bounds = array<i64: 1024, 128>}, {pipeline_mode = #tpu.pipeline_mode<synchronous>, transform_indices = @transform_2, window_bounds = array<i64: 1, 128>}, {pipeline_mode = #tpu.pipeline_mode<synchronous>, transform_indices = @transform_3, window_bounds = array<i64: 8, 128>}]} {
    %c0 = arith.constant 0 : index
    %c0_0 = arith.constant 0 : index
    %0 = vector.load %arg1[%c0, %c0_0] : memref<8x1024xbf16, #tpu.memory_space<vmem>>, vector<8x1024xbf16>
    %c0_1 = arith.constant 0 : index
    %c0_2 = arith.constant 0 : index
    %1 = vector.load %arg2[%c0_1, %c0_2] : memref<1024x128xbf16, #tpu.memory_space<vmem>>, vector<1024x128xbf16>
    %cst = arith.constant dense<0.000000e+00> : vector<8x128xf32>
    %2 = tpu.matmul %0, %1, %cst {dimension_numbers = #tpu.dot_dimension_numbers<[1], [0], [0], [1], [0, 0, 1, 1], [], []>} : vector<8x1024xbf16>, vector<1024x128xbf16>, vector<8x128xf32> -> vector<8x128xf32>
    %c0_3 = arith.constant 0 : index
    %c0_4 = arith.constant 0 : index
    %3 = vector.load %arg3[%c0_3, %c0_4] : memref<1x128xf32, #tpu.memory_space<vmem>>, vector<1x128xf32>
    %4 = vector.broadcast %3 : vector<1x128xf32> to vector<8x128xf32>
    %5 = arith.addf %2, %4 : vector<8x128xf32>
    %6 = arith.negf %5 : vector<8x128xf32>
    %7 = math.exp %6 : vector<8x128xf32>
    %cst_5 = arith.constant 1.000000e+00 : f32
    %8 = vector.broadcast %cst_5 : f32 to vector<8x128xf32>
    %9 = arith.addf %8, %7 : vector<8x128xf32>
    %10 = arith.divf %8, %9 : vector<8x128xf32>
    %c0_6 = arith.constant 0 : index
    %c0_7 = arith.constant 0 : index
    %11 = vector.load %arg4[%c0_6, %c0_7] : memref<8x128xf32, #tpu.memory_space<vmem>>, vector<8x128xf32>
    tpu.vector_store %arg4[%c0_6, %c0_7], %10 {strides = array<i32>} : memref<8x128xf32, #tpu.memory_space<vmem>>, vector<8x128xf32>,
    return
  }
  func.func @transform_0(%arg0: i32) -> (i32, i32) {
    %c0_i32 = arith.constant 0 : i32
    %c0_i32_0 = arith.constant 0 : i32
    %c0_i32_1 = arith.constant 0 : i32
    return %c0_i32, %c0_i32_0 : i32, i32
  }
  func.func @transform_1(%arg0: i32) -> (i32, i32) {
    %c0_i32 = arith.constant 0 : i32
    %c0_i32_0 = arith.constant 0 : i32
    %c0_i32_1 = arith.constant 0 : i32
    return %c0_i32, %c0_i32_0 : i32, i32
  }
  func.func @transform_2(%arg0: i32) -> (i32, i32) {
    %c0_i32 = arith.constant 0 : i32
    %c0_i32_0 = arith.constant 0 : i32
    %c0_i32_1 = arith.constant 0 : i32
    return %c0_i32, %c0_i32_0 : i32, i32
  }
  func.func @transform_3(%arg0: i32) -> (i32, i32) {
    %c0_i32 = arith.constant 0 : i32
    %c0_i32_0 = arith.constant 0 : i32
    %c0_i32_1 = arith.constant 0 : i32
    return %c0_i32, %c0_i32_0 : i32, i32
  }
}

</mosaic_0001>

<llo_original>
// kernel: discriminator_forward.10
$region0: #{discriminator_forward.10}
  #allocation0 [shape = 'u32[]', space=smem, size = 0x4, offset = 0x4, fixed_abs, tag = 'smem constant byte address 0x4 - core index']
  #allocation1 [shape = 'u32[72,128]{1,0:T(1,128)}', space=vmem, size = 0x9000, scoped, tag = 'internal scratch']
  %s0 = inlined_call_operand.vmem [shape: bf16[2048,128], index: 0, kind: input, shape index: {}]
  %s1 = inlined_call_operand.vmem [shape: f32[1,128], index: 1, kind: input, shape index: {}]
  %s2 = inlined_call_operand.vmem [shape: f32[1,128], index: 2, kind: input, shape index: {}]
  %s3 = inlined_call_operand.vmem [shape: f32[1,128], index: 3, kind: input, shape index: {}]
  %s4 = inlined_call_operand.vmem [shape: f32[1,128], index: 4, kind: input, shape index: {}]
  %s5 = inlined_call_operand.vmem [shape: bf16[2048,128], index: 5, kind: output, shape index: {}]
  %s6 = sld [smem:[#allocation0]]
  $region53: #{discriminator_forward.10} parent=0
    _
  %s8 = ssub.s32 1, %s6
  %s9 = scalar_select 0, %s8, %s6
  loop: start=0, step=1, limit=6
  $region2: #{discriminator_forward.10} parent=0 // loop_pre_header
    _
  $region3: #{discriminator_forward.10} parent=0 // loop_header
    %s11 = sphi 0, %s15
    %p12 = scmp.ge.s32.totalorder %s11, 6
    %s21 = sphi 0, %s23
    %s24 = sphi 0, %s21
    %s25 = sphi 0, %s24
    %s41 = sphi 0, %s25
    %s45 = sphi 0, %s45
    %s47 = sphi 0, %s45
    %s48 = sphi 0, %s47
    %s62 = sphi 0, %s48
    %s66 = sphi 0, %s66
    %s68 = sphi 0, %s66
    %s69 = sphi 0, %s68
    %s83 = sphi 0, %s69
    %s87 = sphi 0, %s87
    %s89 = sphi 0, %s87
    %s90 = sphi 0, %s89
    %s104 = sphi 0, %s90
    %s108 = sphi 0, %s108
    %s110 = sphi 0, %s108
    %s111 = sphi 0, %s110
    %s125 = sphi 0, %s111
    %s131 = sphi 0, %s133
    %s134 = sphi 0, %s131
    %s135 = sphi 0, %s134
    %s151 = sphi 0, %s135
  $region4: #{discriminator_forward.10} parent=0 // loop_header_branch
    %14 = sbr.rel (%p12) target = $region8
  $region5: #{discriminator_forward.10} parent=0 // loop_body
    %s16 = ssub.s32 %s11, 1
    %s17 = ssub.s32 %s11, 2
    %s18 = sadd.s32 %s11, 1
    %s19 = ssub.s32 %s11, %s18
    %p20 = scmp.eq.s32.totalorder %s19, 0
    %s22 = sadd.s32 %s21, 1
    %s23 = scalar_select %p20, %s21, %s22
    %p26 = pneg %p20
    %p27 = scmp.eq.s32.totalorder %s11, 3
    %p28 = por %p26, %p27
    %p29 = scmp.ne.s32.totalorder %s21, %s24
    %p30 = scmp.eq.s32.totalorder %s11, 0
    %p31 = por %p29, %p30
    %p32 = scmp.ne.s32.totalorder %s21, %s24
    %p33 = scmp.eq.s32.totalorder %s16, 3
    %p34 = por %p32, %p33
    %p35 = scmp.ne.s32.totalorder %s24, %s25
    %p36 = scmp.eq.s32.totalorder %s16, 0
    %p37 = por %p35, %p36
    %p38 = scmp.ne.s32.totalorder %s24, %s25
    %p39 = scmp.eq.s32.totalorder %s17, 3
    %p40 = por %p38, %p39
    %p42 = scmp.ne.s32.totalorder %s25, %s41
    %p43 = scmp.eq.s32.totalorder %s17, 0
    %p44 = por %p42, %p43
    %s46 = sadd.s32 %s45, 1
    %p49 = scmp.eq.s32.totalorder %s11, 3
    %p50 = scmp.ne.s32.totalorder %s45, %s47
    %p51 = scmp.eq.s32.totalorder %s11, 0
    %p52 = por %p50, %p51
    %p53 = scmp.ne.s32.totalorder %s45, %s47
    %p54 = scmp.eq.s32.totalorder %s16, 3
    %p55 = por %p53, %p54
    %p56 = scmp.ne.s32.totalorder %s47, %s48
    %p57 = scmp.eq.s32.totalorder %s16, 0
    %p58 = por %p56, %p57
    %p59 = scmp.ne.s32.totalorder %s47, %s48
    %p60 = scmp.eq.s32.totalorder %s17, 3
    %p61 = por %p59, %p60
    %p63 = scmp.ne.s32.totalorder %s48, %s62
    %p64 = scmp.eq.s32.totalorder %s17, 0
    %p65 = por %p63, %p64
    %s67 = sadd.s32 %s66, 1
    %p70 = scmp.eq.s32.totalorder %s11, 3
    %p71 = scmp.ne.s32.totalorder %s66, %s68
    %p72 = scmp.eq.s32.totalorder %s11, 0
    %p73 = por %p71, %p72
    %p74 = scmp.ne.s32.totalorder %s66, %s68
    %p75 = scmp.eq.s32.totalorder %s16, 3
    %p76 = por %p74, %p75
    %p77 = scmp.ne.s32.totalorder %s68, %s69
    %p78 = scmp.eq.s32.totalorder %s16, 0
    %p79 = por %p77, %p78
    %p80 = scmp.ne.s32.totalorder %s68, %s69
    %p81 = scmp.eq.s32.totalorder %s17, 3
    %p82 = por %p80, %p81
    %p84 = scmp.ne.s32.totalorder %s69, %s83
    %p85 = scmp.eq.s32.totalorder %s17, 0
    %p86 = por %p84, %p85
    %s88 = sadd.s32 %s87, 1
    %p91 = scmp.eq.s32.totalorder %s11, 3
    %p92 = scmp.ne.s32.totalorder %s87, %s89
    %p93 = scmp.eq.s32.totalorder %s11, 0
    %p94 = por %p92, %p93
    %p95 = scmp.ne.s32.totalorder %s87, %s89
    %p96 = scmp.eq.s32.totalorder %s16, 3
    %p97 = por %p95, %p96
    %p98 = scmp.ne.s32.totalorder %s89, %s90
    %p99 = scmp.eq.s32.totalorder %s16, 0
    %p100 = por %p98, %p99
    %p101 = scmp.ne.s32.totalorder %s89, %s90
    %p102 = scmp.eq.s32.totalorder %s17, 3
    %p103 = por %p101, %p102
    %p105 = scmp.ne.s32.totalorder %s90, %s104
    %p106 = scmp.eq.s32.totalorder %s17, 0
    %p107 = por %p105, %p106
    %s109 = sadd.s32 %s108, 1
    %p112 = scmp.eq.s32.totalorder %s11, 3
    %p113 = scmp.ne.s32.totalorder %s108, %s110
    %p114 = scmp.eq.s32.totalorder %s11, 0
    %p115 = por %p113, %p114
    %p116 = scmp.ne.s32.totalorder %s108, %s110
    %p117 = scmp.eq.s32.totalorder %s16, 3
    %p118 = por %p116, %p117
    %p119 = scmp.ne.s32.totalorder %s110, %s111
    %p120 = scmp.eq.s32.totalorder %s16, 0
    %p121 = por %p119, %p120
    %p122 = scmp.ne.s32.totalorder %s110, %s111
    %p123 = scmp.eq.s32.totalorder %s17, 3
    %p124 = por %p122, %p123
    %p126 = scmp.ne.s32.totalorder %s111, %s125
    %p127 = scmp.eq.s32.totalorder %s17, 0
    %p128 = por %p126, %p127
    %s129 = ssub.s32 %s11, %s18
    %p130 = scmp.eq.s32.totalorder %s129, 0
    %s132 = sadd.s32 %s131, 1
    %s133 = scalar_select %p130, %s131, %s132
    %p136 = pneg %p130
    %p137 = scmp.eq.s32.totalorder %s11, 3
    %p138 = por %p136, %p137
    %p139 = scmp.ne.s32.totalorder %s131, %s134
    %p140 = scmp.eq.s32.totalorder %s11, 0
    %p141 = por %p139, %p140
    %p142 = scmp.ne.s32.totalorder %s131, %s134
    %p143 = scmp.eq.s32.totalorder %s16, 3
    %p144 = por %p142, %p143
    %p145 = scmp.ne.s32.totalorder %s134, %s135
    %p146 = scmp.eq.s32.totalorder %s16, 0
    %p147 = por %p145, %p146
    %p148 = scmp.ne.s32.totalorder %s134, %s135
    %p149 = scmp.eq.s32.totalorder %s17, 3
    %p150 = por %p148, %p149
    %p152 = scmp.ne.s32.totalorder %s135, %s151
    %p153 = scmp.eq.s32.totalorder %s17, 0
    %p154 = por %p152, %p153
    %p155 = scmp.le.s32.totalorder 1, %s11
    %p156 = scmp.lt.s32.totalorder %s11, 5
    %p157 = pnand %p155, %p156
    %p158 = pneg %p157
    // Predicated region
    $region9: #{discriminator_forward.10} parent=5 // pred_check
      _
    $region10: #{discriminator_forward.10} parent=5 // pred_check_branch
      %160 = sbr.rel (%p157) target = $region12
    $region11: #{discriminator_forward.10} parent=5 // pred_region
      %s161 = ssub.s32 %s11, 1
      // Predicated region
      $region13: #{discriminator_forward.10} parent=11 // pred_check
        %p162 = pneg %p58
      $region14: #{discriminator_forward.10} parent=11 // pred_check_branch
        %164 = sbr.rel (%p162) target = $region16
      $region15: #{discriminator_forward.10} parent=11 // pred_region
        _
      $region16: #{discriminator_forward.10} parent=11 // pred_fallthru
        _
      // Predicated region
      $region17: #{discriminator_forward.10} parent=11 // pred_check
        %p165 = pneg %p79
      $region18: #{discriminator_forward.10} parent=11 // pred_check_branch
        %167 = sbr.rel (%p165) target = $region20
      $region19: #{discriminator_forward.10} parent=11 // pred_region
        _
      $region20: #{discriminator_forward.10} parent=11 // pred_fallthru
        _
      // Predicated region
      $region21: #{discriminator_forward.10} parent=11 // pred_check
        %p168 = pneg %p100
      $region22: #{discriminator_forward.10} parent=11 // pred_check_branch
        %170 = sbr.rel (%p168) target = $region24
      $region23: #{discriminator_forward.10} parent=11 // pred_region
        _
      $region24: #{discriminator_forward.10} parent=11 // pred_fallthru
        _
      // Predicated region
      $region25: #{discriminator_forward.10} parent=11 // pred_check
        %p171 = pneg %p121
      $region26: #{discriminator_forward.10} parent=11 // pred_check_branch
        %173 = sbr.rel (%p171) target = $region28
      $region27: #{discriminator_forward.10} parent=11 // pred_region
        _
      $region28: #{discriminator_forward.10} parent=11 // pred_fallthru
        _
    $region12: #{discriminator_forward.10} parent=5 // pred_fallthru
      _
    %p174 = scmp.lt.s32.totalorder %s11, 4
    // Predicated region
    $region29: #{discriminator_forward.10} parent=5 // pred_check
      %p175 = pneg %p174
    $region30: #{discriminator_forward.10} parent=5 // pred_check_branch
      %177 = sbr.rel (%p175) target = $region32
    $region31: #{discriminator_forward.10} parent=5 // pred_region
      // Predicated region
      $region33: #{discriminator_forward.10} parent=31 // pred_check
        %p178 = pneg %p31
      $region34: #{discriminator_forward.10} parent=31 // pred_check_branch
        %180 = sbr.rel (%p178) target = $region36
      $region35: #{discriminator_forward.10} parent=31 // pred_region
        %s181 = smul.u32 64, %s11
        %p182 = scmp.lt.s32.totalorder %s181, 255
        %s183 = scalar_select %p182, %s181, 255
        %s184 = smul.addr %s183, 4
        %s185 = scalar_lea.vmem %s0, %s184
        %s186 = smul.u32 64, %s11
      $region36: #{discriminator_forward.10} parent=31 // pred_fallthru
        _
    $region32: #{discriminator_forward.10} parent=5 // pred_fallthru
      _
    %p187 = scmp.le.s32.totalorder 1, %s11
    %p188 = scmp.lt.s32.totalorder %s11, 5
    %p189 = pnand %p187, %p188
    %p190 = pneg %p189
    // Predicated region
    $region37: #{discriminator_forward.10} parent=5 // pred_check
      _
    $region38: #{discriminator_forward.10} parent=5 // pred_check_branch
      %192 = sbr.rel (%p189) target = $region40
    $region39: #{discriminator_forward.10} parent=5 // pred_region
      %s193 = ssub.s32 %s11, 1
      %s194 = smul.u32 64, %s16
      %p195 = scmp.lt.s32.totalorder %s194, 255
      %s196 = scalar_select %p195, %s194, 255
      %s197 = smul.addr %s196, 4
      %s198 = scalar_lea.vmem %s0, %s197
      %p199 = pneg %p37
      %p200 = pneg %p34
      %p201 = pneg %p58
      %p202 = pneg %p55
      %p203 = pneg %p79
      %p204 = pneg %p76
      %p205 = pneg %p100
      %p206 = pneg %p97
      %p207 = pneg %p121
      %p208 = pneg %p118
      %p209 = pneg %p147
      %p210 = pneg %p144
      %s211 = smul.u32 64, %s16
      %p212 = scmp.lt.s32.totalorder %s211, 255
      %s213 = scalar_select %p212, %s211, 255
      %s214 = smul.addr %s213, 4
      %s215 = scalar_lea.vmem %s5, %s214
      %s216 = smul.u32 64, %s16
      %p217 = scmp.lt.s32.totalorder %s216, 255
      %s218 = scalar_select %p217, %s216, 255
      %s219 = smul.addr %s218, 4
      %s220 = scalar_lea.vmem %s0, %s219
      %s221 = smul.u32 64, %s16
      %s222 = smul.u32 64, %s16
      %p223 = scmp.lt.s32.totalorder %s222, 255
      %s224 = scalar_select %p223, %s222, 255
      %s225 = smul.addr %s224, 4
      %s226 = scalar_lea.vmem %s5, %s225
      %s227 = smul.u32 64, %s16
      %v228 = vld [vmem:[%s1] sm:$0x1]
      %v229 = vmul.f32 %v228, 0.00048828125
      %v230 = vld [vmem:[%s2] sm:$0x1]
      %v231 = vmul.f32 %v230, 0.00048828125
      %v232 = vmul.f32 %v229, %v229
      %v233 = vsub.f32 %v231, %v232
      %v234 = vmax.f32 %v233, 0.0
      %v235 = vld [vmem:[%s3] sm:$0x1]
      %v236 = vadd.f32 %v234, 1e-05
      %v237 = vrsqrt.pop %v236
      %v238 = vmul.f32 %v237, %v236
      %v239 = vmul.f32 %v238, %v237
      %v240 = vmul.f32 0.5, %v239
      %v241 = vsub.f32 1.5, %v240
      %v242 = vmul.f32 %v237, %v241
      %vm243 = vweird.f32 %v236
      %vm244 = vweird.f32 %v237
      %vm245 = vmor %vm243, %vm244
      %v246 = vsel %vm245, %v237, %v242
      %v247 = vmul.f32 %v235, %v246
      %v248 = vld [vmem:[%s4] sm:$0x1]
      %v249 = vmul.f32 %v229, %v247
      %v250 = vsub.f32 %v248, %v249
      %v251 = vld [vmem:[%s220] sm:$0xf]
      %v252 = vld [vmem:[%s220 + $0x4] sm:$0xf]
      %v253 = vld [vmem:[%s220 + $0x8] sm:$0xf]
      %v254 = vld [vmem:[%s220 + $0xc] sm:$0xf]
      %v255 = vld [vmem:[%s220 + $0x10] sm:$0xf]
      %v256 = vld [vmem:[%s220 + $0x14] sm:$0xf]
      %v257 = vld [vmem:[%s220 + $0x18] sm:$0xf]
      %v258 = vld [vmem:[%s220 + $0x1c] sm:$0xf]
      %v259 = vld [vmem:[%s220 + $0x20] sm:$0xf]
      %v260 = vld [vmem:[%s220 + $0x24] sm:$0xf]
      %v261 = vld [vmem:[%s220 + $0x28] sm:$0xf]
      %v262 = vld [vmem:[%s220 + $0x2c] sm:$0xf]
      %v263 = vld [vmem:[%s220 + $0x30] sm:$0xf]
      %v264 = vld [vmem:[%s220 + $0x34] sm:$0xf]
      %v265 = vld [vmem:[%s220 + $0x38] sm:$0xf]
      %v266 = vld [vmem:[%s220 + $0x3c] sm:$0xf]
      %v267 = vld [vmem:[%s220 + $0x40] sm:$0xf]
      %v268 = vld [vmem:[%s220 + $0x44] sm:$0xf]
      %v269 = vld [vmem:[%s220 + $0x48] sm:$0xf]
      %v270 = vld [vmem:[%s220 + $0x4c] sm:$0xf]
      %v271 = vld [vmem:[%s220 + $0x50] sm:$0xf]
      %v272 = vld [vmem:[%s220 + $0x54] sm:$0xf]
      %v273 = vld [vmem:[%s220 + $0x58] sm:$0xf]
      %v274 = vld [vmem:[%s220 + $0x5c] sm:$0xf]
      %v275 = vld [vmem:[%s220 + $0x60] sm:$0xf]
      %v276 = vld [vmem:[%s220 + $0x64] sm:$0xf]
      %v277 = vld [vmem:[%s220 + $0x68] sm:$0xf]
      %v278 = vld [vmem:[%s220 + $0x6c] sm:$0xf]
      %v279 = vld [vmem:[%s220 + $0x70] sm:$0xf]
      %v280 = vld [vmem:[%s220 + $0x74] sm:$0xf]
      %v281 = vld [vmem:[%s220 + $0x78] sm:$0xf]
      %v282 = vld [vmem:[%s220 + $0x7c] sm:$0xf]
      %v283 = vld [vmem:[%s220 + $0x80] sm:$0xf]
      %v284 = vld [vmem:[%s220 + $0x84] sm:$0xf]
      %v285 = vld [vmem:[%s220 + $0x88] sm:$0xf]
      %v286 = vld [vmem:[%s220 + $0x8c] sm:$0xf]
      %v287 = vld [vmem:[%s220 + $0x90] sm:$0xf]
      %v288 = vld [vmem:[%s220 + $0x94] sm:$0xf]
      %v289 = vld [vmem:[%s220 + $0x98] sm:$0xf]
      %v290 = vld [vmem:[%s220 + $0x9c] sm:$0xf]
      %v291 = vld [vmem:[%s220 + $0xa0] sm:$0xf]
      %v292 = vld [vmem:[%s220 + $0xa4] sm:$0xf]
      %v293 = vld [vmem:[%s220 + $0xa8] sm:$0xf]
      %v294 = vld [vmem:[%s220 + $0xac] sm:$0xf]
      %v295 = vld [vmem:[%s220 + $0xb0] sm:$0xf]
      %v296 = vld [vmem:[%s220 + $0xb4] sm:$0xf]
      %v297 = vld [vmem:[%s220 + $0xb8] sm:$0xf]
      %v298 = vld [vmem:[%s220 + $0xbc] sm:$0xf]
      %v299 = vld [vmem:[%s220 + $0xc0] sm:$0xf]
      %v300 = vld [vmem:[%s220 + $0xc4] sm:$0xf]
      %v301 = vld [vmem:[%s220 + $0xc8] sm:$0xf]
      %v302 = vld [vmem:[%s220 + $0xcc] sm:$0xf]
      %v303 = vld [vmem:[%s220 + $0xd0] sm:$0xf]
      %v304 = vld [vmem:[%s220 + $0xd4] sm:$0xf]
      %v305 = vld [vmem:[%s220 + $0xd8] sm:$0xf]
      %v306 = vld [vmem:[%s220 + $0xdc] sm:$0xf]
      %v307 = vld [vmem:[%s220 + $0xe0] sm:$0xf]
      %v308 = vld [vmem:[%s220 + $0xe4] sm:$0xf]
      %v309 = vld [vmem:[%s220 + $0xe8] sm:$0xf]
      %v310 = vld [vmem:[%s220 + $0xec] sm:$0xf]
      %v311 = vld [vmem:[%s220 + $0xf0] sm:$0xf]
      %v312 = vld [vmem:[%s220 + $0xf4] sm:$0xf]
      %v313 = vld [vmem:[%s220 + $0xf8] sm:$0xf]
      %v314 = vld [vmem:[%s220 + $0xfc] sm:$0xf]
      %v315 = vunpack.c.l.bf16 %v251
      %v316 = vunpack.c.l.bf16 %v252
      %v317 = vunpack.c.l.bf16 %v253
      %v318 = vunpack.c.l.bf16 %v254
      %v319 = vunpack.c.l.bf16 %v255
      %v320 = vunpack.c.l.bf16 %v256
      %v321 = vunpack.c.l.bf16 %v257
      %v322 = vunpack.c.l.bf16 %v258
      %v323 = vunpack.c.l.bf16 %v259
      %v324 = vunpack.c.l.bf16 %v260
      %v325 = vunpack.c.l.bf16 %v261
      %v326 = vunpack.c.l.bf16 %v262
      %v327 = vunpack.c.l.bf16 %v263
      %v328 = vunpack.c.l.bf16 %v264
      %v329 = vunpack.c.l.bf16 %v265
      %v330 = vunpack.c.l.bf16 %v266
      %v331 = vunpack.c.l.bf16 %v267
      %v332 = vunpack.c.l.bf16 %v268
      %v333 = vunpack.c.l.bf16 %v269
      %v334 = vunpack.c.l.bf16 %v270
      %v335 = vunpack.c.l.bf16 %v271
      %v336 = vunpack.c.l.bf16 %v272
      %v337 = vunpack.c.l.bf16 %v273
      %v338 = vunpack.c.l.bf16 %v274
      %v339 = vunpack.c.l.bf16 %v275
      %v340 = vunpack.c.l.bf16 %v276
      %v341 = vunpack.c.l.bf16 %v277
      %v342 = vunpack.c.l.bf16 %v278
      %v343 = vunpack.c.l.bf16 %v279
      %v344 = vunpack.c.l.bf16 %v280
      %v345 = vunpack.c.l.bf16 %v281
      %v346 = vunpack.c.l.bf16 %v282
      %v347 = vunpack.c.l.bf16 %v283
      %v348 = vunpack.c.l.bf16 %v284
      %v349 = vunpack.c.l.bf16 %v285
      %v350 = vunpack.c.l.bf16 %v286
      %v351 = vunpack.c.l.bf16 %v287
      %v352 = vunpack.c.l.bf16 %v288
      %v353 = vunpack.c.l.bf16 %v289
      %v354 = vunpack.c.l.bf16 %v290
      %v355 = vunpack.c.l.bf16 %v291
      %v356 = vunpack.c.l.bf16 %v292
      %v357 = vunpack.c.l.bf16 %v293
      %v358 = vunpack.c.l.bf16 %v294
      %v359 = vunpack.c.l.bf16 %v295
      %v360 = vunpack.c.l.bf16 %v296
      %v361 = vunpack.c.l.bf16 %v297
      %v362 = vunpack.c.l.bf16 %v298
      %v363 = vunpack.c.l.bf16 %v299
      %v364 = vunpack.c.l.bf16 %v300
      %v365 = vunpack.c.l.bf16 %v301
      %v366 = vunpack.c.l.bf16 %v302
      %v367 = vunpack.c.l.bf16 %v303
      %v368 = vunpack.c.l.bf16 %v304
      %v369 = vunpack.c.l.bf16 %v305
      %v370 = vunpack.c.l.bf16 %v306
      %v371 = vunpack.c.l.bf16 %v307
      %v372 = vunpack.c.l.bf16 %v308
      %v373 = vunpack.c.l.bf16 %v309
      %v374 = vunpack.c.l.bf16 %v310
      %v375 = vunpack.c.l.bf16 %v311
      %v376 = vunpack.c.l.bf16 %v312
      %v377 = vunpack.c.l.bf16 %v313
      %v378 = vunpack.c.l.bf16 %v314
      %v380 = vperm.slane %v247, 0
      %v382 = vmul.f32 %v315, %v380
      %v383 = vmul.f32 %v316, %v380
      %v384 = vmul.f32 %v317, %v380
      %v385 = vmul.f32 %v318, %v380
      %v386 = vmul.f32 %v319, %v380
      %v387 = vmul.f32 %v320, %v380
      %v388 = vmul.f32 %v321, %v380
      %v389 = vmul.f32 %v322, %v380
      %v390 = vmul.f32 %v323, %v380
      %v391 = vmul.f32 %v324, %v380
      %v392 = vmul.f32 %v325, %v380
      %v393 = vmul.f32 %v326, %v380
      %v394 = vmul.f32 %v327, %v380
      %v395 = vmul.f32 %v328, %v380
      %v396 = vmul.f32 %v329, %v380
      %v397 = vmul.f32 %v330, %v380
      %v398 = vmul.f32 %v331, %v380
      %v399 = vmul.f32 %v332, %v380
      %v400 = vmul.f32 %v333, %v380
      %v401 = vmul.f32 %v334, %v380
      %v402 = vmul.f32 %v335, %v380
      %v403 = vmul.f32 %v336, %v380
      %v404 = vmul.f32 %v337, %v380
      %v405 = vmul.f32 %v338, %v380
      %v406 = vmul.f32 %v339, %v380
      %v407 = vmul.f32 %v340, %v380
      %v408 = vmul.f32 %v341, %v380
      %v409 = vmul.f32 %v342, %v380
      %v410 = vmul.f32 %v343, %v380
      %v411 = vmul.f32 %v344, %v380
      %v412 = vmul.f32 %v345, %v380
      %v413 = vmul.f32 %v346, %v380
      %v414 = vmul.f32 %v347, %v380
      %v415 = vmul.f32 %v348, %v380
      %v416 = vmul.f32 %v349, %v380
      %v417 = vmul.f32 %v350, %v380
      %v418 = vmul.f32 %v351, %v380
      %v419 = vmul.f32 %v352, %v380
      %v420 = vmul.f32 %v353, %v380
      %v421 = vmul.f32 %v354, %v380
      %v422 = vmul.f32 %v355, %v380
      %v423 = vmul.f32 %v356, %v380
      %v424 = vmul.f32 %v357, %v380
      %v425 = vmul.f32 %v358, %v380
      %v426 = vmul.f32 %v359, %v380
      %v427 = vmul.f32 %v360, %v380
      %v428 = vmul.f32 %v361, %v380
      %v429 = vmul.f32 %v362, %v380
      %v430 = vmul.f32 %v363, %v380
      %v431 = vmul.f32 %v364, %v380
      %v432 = vmul.f32 %v365, %v380
      %v433 = vmul.f32 %v366, %v380
      %v434 = vmul.f32 %v367, %v380
      %v435 = vmul.f32 %v368, %v380
      %v436 = vmul.f32 %v369, %v380
      %v437 = vmul.f32 %v370, %v380
      %v438 = vmul.f32 %v371, %v380
      %v439 = vmul.f32 %v372, %v380
      %v440 = vmul.f32 %v373, %v380
      %v441 = vmul.f32 %v374, %v380
      %v442 = vmul.f32 %v375, %v380
      %v443 = vmul.f32 %v376, %v380
      %v444 = vmul.f32 %v377, %v380
      %v445 = vmul.f32 %v378, %v380
      %v447 = vperm.slane %v250, 0
      %v449 = vadd.f32 %v382, %v447
      %v450 = vadd.f32 %v383, %v447
      %v451 = vadd.f32 %v384, %v447
      %v452 = vadd.f32 %v385, %v447
      %v453 = vadd.f32 %v386, %v447
      %v454 = vadd.f32 %v387, %v447
      %v455 = vadd.f32 %v388, %v447
      %v456 = vadd.f32 %v389, %v447
      %v457 = vadd.f32 %v390, %v447
      %v458 = vadd.f32 %v391, %v447
      %v459 = vadd.f32 %v392, %v447
      %v460 = vadd.f32 %v393, %v447
      %v461 = vadd.f32 %v394, %v447
      %v462 = vadd.f32 %v395, %v447
      %v463 = vadd.f32 %v396, %v447
      %v464 = vadd.f32 %v397, %v447
      %v465 = vadd.f32 %v398, %v447
      %v466 = vadd.f32 %v399, %v447
      %v467 = vadd.f32 %v400, %v447
      %v468 = vadd.f32 %v401, %v447
      %v469 = vadd.f32 %v402, %v447
      %v470 = vadd.f32 %v403, %v447
      %v471 = vadd.f32 %v404, %v447
      %v472 = vadd.f32 %v405, %v447
      %v473 = vadd.f32 %v406, %v447
      %v474 = vadd.f32 %v407, %v447
      %v475 = vadd.f32 %v408, %v447
      %v476 = vadd.f32 %v409, %v447
      %v477 = vadd.f32 %v410, %v447
      %v478 = vadd.f32 %v411, %v447
      %v479 = vadd.f32 %v412, %v447
      %v480 = vadd.f32 %v413, %v447
      %v481 = vadd.f32 %v414, %v447
      %v482 = vadd.f32 %v415, %v447
      %v483 = vadd.f32 %v416, %v447
      %v484 = vadd.f32 %v417, %v447
      %v485 = vadd.f32 %v418, %v447
      %v486 = vadd.f32 %v419, %v447
      %v487 = vadd.f32 %v420, %v447
      %v488 = vadd.f32 %v421, %v447
      %v489 = vadd.f32 %v422, %v447
      %v490 = vadd.f32 %v423, %v447
      %v491 = vadd.f32 %v424, %v447
      %v492 = vadd.f32 %v425, %v447
      %v493 = vadd.f32 %v426, %v447
      %v494 = vadd.f32 %v427, %v447
      %v495 = vadd.f32 %v428, %v447
      %v496 = vadd.f32 %v429, %v447
      %v497 = vadd.f32 %v430, %v447
      %v498 = vadd.f32 %v431, %v447
      %v499 = vadd.f32 %v432, %v447
      %v500 = vadd.f32 %v433, %v447
      %v501 = vadd.f32 %v434, %v447
      %v502 = vadd.f32 %v435, %v447
      %v503 = vadd.f32 %v436, %v447
      %v504 = vadd.f32 %v437, %v447
      %v505 = vadd.f32 %v438, %v447
      %v506 = vadd.f32 %v439, %v447
      %v507 = vadd.f32 %v440, %v447
      %v508 = vadd.f32 %v441, %v447
      %v509 = vadd.f32 %v442, %v447
      %v510 = vadd.f32 %v443, %v447
      %v511 = vadd.f32 %v444, %v447
      %v512 = vadd.f32 %v445, %v447
      %vm513 = vcmp.ge.f32.partialorder %v449, 0.0
      %vm514 = vcmp.ge.f32.partialorder %v450, 0.0
      %vm515 = vcmp.ge.f32.partialorder %v451, 0.0
      %vm516 = vcmp.ge.f32.partialorder %v452, 0.0
      %vm517 = vcmp.ge.f32.partialorder %v453, 0.0
      %vm518 = vcmp.ge.f32.partialorder %v454, 0.0
      %vm519 = vcmp.ge.f32.partialorder %v455, 0.0
      %vm520 = vcmp.ge.f32.partialorder %v456, 0.0
      %vm521 = vcmp.ge.f32.partialorder %v457, 0.0
      %vm522 = vcmp.ge.f32.partialorder %v458, 0.0
      %vm523 = vcmp.ge.f32.partialorder %v459, 0.0
      %vm524 = vcmp.ge.f32.partialorder %v460, 0.0
      %vm525 = vcmp.ge.f32.partialorder %v461, 0.0
      %vm526 = vcmp.ge.f32.partialorder %v462, 0.0
      %vm527 = vcmp.ge.f32.partialorder %v463, 0.0
      %vm528 = vcmp.ge.f32.partialorder %v464, 0.0
      %vm529 = vcmp.ge.f32.partialorder %v465, 0.0
      %vm530 = vcmp.ge.f32.partialorder %v466, 0.0
      %vm531 = vcmp.ge.f32.partialorder %v467, 0.0
      %vm532 = vcmp.ge.f32.partialorder %v468, 0.0
      %vm533 = vcmp.ge.f32.partialorder %v469, 0.0
      %vm534 = vcmp.ge.f32.partialorder %v470, 0.0
      %vm535 = vcmp.ge.f32.partialorder %v471, 0.0
      %vm536 = vcmp.ge.f32.partialorder %v472, 0.0
      %vm537 = vcmp.ge.f32.partialorder %v473, 0.0
      %vm538 = vcmp.ge.f32.partialorder %v474, 0.0
      %vm539 = vcmp.ge.f32.partialorder %v475, 0.0
      %vm540 = vcmp.ge.f32.partialorder %v476, 0.0
      %vm541 = vcmp.ge.f32.partialorder %v477, 0.0
      %vm542 = vcmp.ge.f32.partialorder %v478, 0.0
      %vm543 = vcmp.ge.f32.partialorder %v479, 0.0
      %vm544 = vcmp.ge.f32.partialorder %v480, 0.0
      %vm545 = vcmp.ge.f32.partialorder %v481, 0.0
      %vm546 = vcmp.ge.f32.partialorder %v482, 0.0
      %vm547 = vcmp.ge.f32.partialorder %v483, 0.0
      %vm548 = vcmp.ge.f32.partialorder %v484, 0.0
      %vm549 = vcmp.ge.f32.partialorder %v485, 0.0
      %vm550 = vcmp.ge.f32.partialorder %v486, 0.0
      %vm551 = vcmp.ge.f32.partialorder %v487, 0.0
      %vm552 = vcmp.ge.f32.partialorder %v488, 0.0
      %vm553 = vcmp.ge.f32.partialorder %v489, 0.0
      %vm554 = vcmp.ge.f32.partialorder %v490, 0.0
      %vm555 = vcmp.ge.f32.partialorder %v491, 0.0
      %vm556 = vcmp.ge.f32.partialorder %v492, 0.0
      %vm557 = vcmp.ge.f32.partialorder %v493, 0.0
      %vm558 = vcmp.ge.f32.partialorder %v494, 0.0
      %vm559 = vcmp.ge.f32.partialorder %v495, 0.0
      %vm560 = vcmp.ge.f32.partialorder %v496, 0.0
      %vm561 = vcmp.ge.f32.partialorder %v497, 0.0
      %vm562 = vcmp.ge.f32.partialorder %v498, 0.0
      %vm563 = vcmp.ge.f32.partialorder %v499, 0.0
      %vm564 = vcmp.ge.f32.partialorder %v500, 0.0
      %vm565 = vcmp.ge.f32.partialorder %v501, 0.0
      %vm566 = vcmp.ge.f32.partialorder %v502, 0.0
      %vm567 = vcmp.ge.f32.partialorder %v503, 0.0
      %vm568 = vcmp.ge.f32.partialorder %v504, 0.0
      %vm569 = vcmp.ge.f32.partialorder %v505, 0.0
      %vm570 = vcmp.ge.f32.partialorder %v506, 0.0
      %vm571 = vcmp.ge.f32.partialorder %v507, 0.0
      %vm572 = vcmp.ge.f32.partialorder %v508, 0.0
      %vm573 = vcmp.ge.f32.partialorder %v509, 0.0
      %vm574 = vcmp.ge.f32.partialorder %v510, 0.0
      %vm575 = vcmp.ge.f32.partialorder %v511, 0.0
      %vm576 = vcmp.ge.f32.partialorder %v512, 0.0
      %v577 = vmul.f32 %v449, 0.2
      %v578 = vmul.f32 %v450, 0.2
      %v579 = vmul.f32 %v451, 0.2
      %v580 = vmul.f32 %v452, 0.2
      %v581 = vmul.f32 %v453, 0.2
      %v582 = vmul.f32 %v454, 0.2
      %v583 = vmul.f32 %v455, 0.2
      %v584 = vmul.f32 %v456, 0.2
      %v585 = vmul.f32 %v457, 0.2
      %v586 = vmul.f32 %v458, 0.2
      %v587 = vmul.f32 %v459, 0.2
      %v588 = vmul.f32 %v460, 0.2
      %v589 = vmul.f32 %v461, 0.2
      %v590 = vmul.f32 %v462, 0.2
      %v591 = vmul.f32 %v463, 0.2
      %v592 = vmul.f32 %v464, 0.2
      %v593 = vmul.f32 %v465, 0.2
      %v594 = vmul.f32 %v466, 0.2
      %v595 = vmul.f32 %v467, 0.2
      %v596 = vmul.f32 %v468, 0.2
      %v597 = vmul.f32 %v469, 0.2
      %v598 = vmul.f32 %v470, 0.2
      %v599 = vmul.f32 %v471, 0.2
      %v600 = vmul.f32 %v472, 0.2
      %v601 = vmul.f32 %v473, 0.2
      %v602 = vmul.f32 %v474, 0.2
      %v603 = vmul.f32 %v475, 0.2
      %v604 = vmul.f32 %v476, 0.2
      %v605 = vmul.f32 %v477, 0.2
      %v606 = vmul.f32 %v478, 0.2
      %v607 = vmul.f32 %v479, 0.2
      %v608 = vmul.f32 %v480, 0.2
      %v609 = vmul.f32 %v481, 0.2
      %v610 = vmul.f32 %v482, 0.2
      %v611 = vmul.f32 %v483, 0.2
      %v612 = vmul.f32 %v484, 0.2
      %v613 = vmul.f32 %v485, 0.2
      %v614 = vmul.f32 %v486, 0.2
      %v615 = vmul.f32 %v487, 0.2
      %v616 = vmul.f32 %v488, 0.2
      %v617 = vmul.f32 %v489, 0.2
      %v618 = vmul.f32 %v490, 0.2
      %v619 = vmul.f32 %v491, 0.2
      %v620 = vmul.f32 %v492, 0.2
      %v621 = vmul.f32 %v493, 0.2
      %v622 = vmul.f32 %v494, 0.2
      %v623 = vmul.f32 %v495, 0.2
      %v624 = vmul.f32 %v496, 0.2
      %v625 = vmul.f32 %v497, 0.2
      %v626 = vmul.f32 %v498, 0.2
      %v627 = vmul.f32 %v499, 0.2
      %v628 = vmul.f32 %v500, 0.2
      %v629 = vmul.f32 %v501, 0.2
      %v630 = vmul.f32 %v502, 0.2
      %v631 = vmul.f32 %v503, 0.2
      %v632 = vmul.f32 %v504, 0.2
      %v633 = vmul.f32 %v505, 0.2
      %v634 = vmul.f32 %v506, 0.2
      %v635 = vmul.f32 %v507, 0.2
      %v636 = vmul.f32 %v508, 0.2
      %v637 = vmul.f32 %v509, 0.2
      %v638 = vmul.f32 %v510, 0.2
      %v639 = vmul.f32 %v511, 0.2
      %v640 = vmul.f32 %v512, 0.2
      %v641 = vsel %vm513, %v449, %v577
      %v642 = vsel %vm514, %v450, %v578
      %v643 = vsel %vm515, %v451, %v579
      %v644 = vsel %vm516, %v452, %v580
      %v645 = vsel %vm517, %v453, %v581
      %v646 = vsel %vm518, %v454, %v582
      %v647 = vsel %vm519, %v455, %v583
      %v648 = vsel %vm520, %v456, %v584
      %v649 = vsel %vm521, %v457, %v585
      %v650 = vsel %vm522, %v458, %v586
      %v651 = vsel %vm523, %v459, %v587
      %v652 = vsel %vm524, %v460, %v588
      %v653 = vsel %vm525, %v461, %v589
      %v654 = vsel %vm526, %v462, %v590
      %v655 = vsel %vm527, %v463, %v591
      %v656 = vsel %vm528, %v464, %v592
      %v657 = vsel %vm529, %v465, %v593
      %v658 = vsel %vm530, %v466, %v594
      %v659 = vsel %vm531, %v467, %v595
      %v660 = vsel %vm532, %v468, %v596
      %v661 = vsel %vm533, %v469, %v597
      %v662 = vsel %vm534, %v470, %v598
      %v663 = vsel %vm535, %v471, %v599
      %v664 = vsel %vm536, %v472, %v600
      %v665 = vsel %vm537, %v473, %v601
      %v666 = vsel %vm538, %v474, %v602
      %v667 = vsel %vm539, %v475, %v603
      %v668 = vsel %vm540, %v476, %v604
      %v669 = vsel %vm541, %v477, %v605
      %v670 = vsel %vm542, %v478, %v606
      %v671 = vsel %vm543, %v479, %v607
      %v672 = vsel %vm544, %v480, %v608
      %v673 = vsel %vm545, %v481, %v609
      %v674 = vsel %vm546, %v482, %v610
      %v675 = vsel %vm547, %v483, %v611
      %v676 = vsel %vm548, %v484, %v612
      %v677 = vsel %vm549, %v485, %v613
      %v678 = vsel %vm550, %v486, %v614
      %v679 = vsel %vm551, %v487, %v615
      %v680 = vsel %vm552, %v488, %v616
      %v681 = vsel %vm553, %v489, %v617
      %v682 = vsel %vm554, %v490, %v618
      %v683 = vsel %vm555, %v491, %v619
      %v684 = vsel %vm556, %v492, %v620
      %v685 = vsel %vm557, %v493, %v621
      %v686 = vsel %vm558, %v494, %v622
      %v687 = vsel %vm559, %v495, %v623
      %v688 = vsel %vm560, %v496, %v624
      %v689 = vsel %vm561, %v497, %v625
      %v690 = vsel %vm562, %v498, %v626
      %v691 = vsel %vm563, %v499, %v627
      %v692 = vsel %vm564, %v500, %v628
      %v693 = vsel %vm565, %v501, %v629
      %v694 = vsel %vm566, %v502, %v630
      %v695 = vsel %vm567, %v503, %v631
      %v696 = vsel %vm568, %v504, %v632
      %v697 = vsel %vm569, %v505, %v633
      %v698 = vsel %vm570, %v506, %v634
      %v699 = vsel %vm571, %v507, %v635
      %v700 = vsel %vm572, %v508, %v636
      %v701 = vsel %vm573, %v509, %v637
      %v702 = vsel %vm574, %v510, %v638
      %v703 = vsel %vm575, %v511, %v639
      %v704 = vsel %vm576, %v512, %v640
      %v705 = vpack.c.bf16 %v641, %v641
      %v706 = vpack.c.bf16 %v642, %v642
      %v707 = vpack.c.bf16 %v643, %v643
      %v708 = vpack.c.bf16 %v644, %v644
      %v709 = vpack.c.bf16 %v645, %v645
      %v710 = vpack.c.bf16 %v646, %v646
      %v711 = vpack.c.bf16 %v647, %v647
      %v712 = vpack.c.bf16 %v648, %v648
      %v713 = vpack.c.bf16 %v649, %v649
      %v714 = vpack.c.bf16 %v650, %v650
      %v715 = vpack.c.bf16 %v651, %v651
      %v716 = vpack.c.bf16 %v652, %v652
      %v717 = vpack.c.bf16 %v653, %v653
      %v718 = vpack.c.bf16 %v654, %v654
      %v719 = vpack.c.bf16 %v655, %v655
      %v720 = vpack.c.bf16 %v656, %v656
      %v721 = vpack.c.bf16 %v657, %v657
      %v722 = vpack.c.bf16 %v658, %v658
      %v723 = vpack.c.bf16 %v659, %v659
      %v724 = vpack.c.bf16 %v660, %v660
      %v725 = vpack.c.bf16 %v661, %v661
      %v726 = vpack.c.bf16 %v662, %v662
      %v727 = vpack.c.bf16 %v663, %v663
      %v728 = vpack.c.bf16 %v664, %v664
      %v729 = vpack.c.bf16 %v665, %v665
      %v730 = vpack.c.bf16 %v666, %v666
      %v731 = vpack.c.bf16 %v667, %v667
      %v732 = vpack.c.bf16 %v668, %v668
      %v733 = vpack.c.bf16 %v669, %v669
      %v734 = vpack.c.bf16 %v670, %v670
      %v735 = vpack.c.bf16 %v671, %v671
      %v736 = vpack.c.bf16 %v672, %v672
      %v737 = vpack.c.bf16 %v673, %v673
      %v738 = vpack.c.bf16 %v674, %v674
      %v739 = vpack.c.bf16 %v675, %v675
      %v740 = vpack.c.bf16 %v676, %v676
      %v741 = vpack.c.bf16 %v677, %v677
      %v742 = vpack.c.bf16 %v678, %v678
      %v743 = vpack.c.bf16 %v679, %v679
      %v744 = vpack.c.bf16 %v680, %v680
      %v745 = vpack.c.bf16 %v681, %v681
      %v746 = vpack.c.bf16 %v682, %v682
      %v747 = vpack.c.bf16 %v683, %v683
      %v748 = vpack.c.bf16 %v684, %v684
      %v749 = vpack.c.bf16 %v685, %v685
      %v750 = vpack.c.bf16 %v686, %v686
      %v751 = vpack.c.bf16 %v687, %v687
      %v752 = vpack.c.bf16 %v688, %v688
      %v753 = vpack.c.bf16 %v689, %v689
      %v754 = vpack.c.bf16 %v690, %v690
      %v755 = vpack.c.bf16 %v691, %v691
      %v756 = vpack.c.bf16 %v692, %v692
      %v757 = vpack.c.bf16 %v693, %v693
      %v758 = vpack.c.bf16 %v694, %v694
      %v759 = vpack.c.bf16 %v695, %v695
      %v760 = vpack.c.bf16 %v696, %v696
      %v761 = vpack.c.bf16 %v697, %v697
      %v762 = vpack.c.bf16 %v698, %v698
      %v763 = vpack.c.bf16 %v699, %v699
      %v764 = vpack.c.bf16 %v700, %v700
      %v765 = vpack.c.bf16 %v701, %v701
      %v766 = vpack.c.bf16 %v702, %v702
      %v767 = vpack.c.bf16 %v703, %v703
      %v768 = vpack.c.bf16 %v704, %v704
      %769 = vst [vmem:[%s226] sm:$0xf] %v705
      %770 = vst [vmem:[%s226 + $0x4] sm:$0xf] %v706
      %771 = vst [vmem:[%s226 + $0x8] sm:$0xf] %v707
      %772 = vst [vmem:[%s226 + $0xc] sm:$0xf] %v708
      %773 = vst [vmem:[%s226 + $0x10] sm:$0xf] %v709
      %774 = vst [vmem:[%s226 + $0x14] sm:$0xf] %v710
      %775 = vst [vmem:[%s226 + $0x18] sm:$0xf] %v711
      %776 = vst [vmem:[%s226 + $0x1c] sm:$0xf] %v712
      %777 = vst [vmem:[%s226 + $0x20] sm:$0xf] %v713
      %778 = vst [vmem:[%s226 + $0x24] sm:$0xf] %v714
      %779 = vst [vmem:[%s226 + $0x28] sm:$0xf] %v715
      %780 = vst [vmem:[%s226 + $0x2c] sm:$0xf] %v716
      %781 = vst [vmem:[%s226 + $0x30] sm:$0xf] %v717
      %782 = vst [vmem:[%s226 + $0x34] sm:$0xf] %v718
      %783 = vst [vmem:[%s226 + $0x38] sm:$0xf] %v719
      %784 = vst [vmem:[%s226 + $0x3c] sm:$0xf] %v720
      %785 = vst [vmem:[%s226 + $0x40] sm:$0xf] %v721
      %786 = vst [vmem:[%s226 + $0x44] sm:$0xf] %v722
      %787 = vst [vmem:[%s226 + $0x48] sm:$0xf] %v723
      %788 = vst [vmem:[%s226 + $0x4c] sm:$0xf] %v724
      %789 = vst [vmem:[%s226 + $0x50] sm:$0xf] %v725
      %790 = vst [vmem:[%s226 + $0x54] sm:$0xf] %v726
      %791 = vst [vmem:[%s226 + $0x58] sm:$0xf] %v727
      %792 = vst [vmem:[%s226 + $0x5c] sm:$0xf] %v728
      %793 = vst [vmem:[%s226 + $0x60] sm:$0xf] %v729
      %794 = vst [vmem:[%s226 + $0x64] sm:$0xf] %v730
      %795 = vst [vmem:[%s226 + $0x68] sm:$0xf] %v731
      %796 = vst [vmem:[%s226 + $0x6c] sm:$0xf] %v732
      %797 = vst [vmem:[%s226 + $0x70] sm:$0xf] %v733
      %798 = vst [vmem:[%s226 + $0x74] sm:$0xf] %v734
      %799 = vst [vmem:[%s226 + $0x78] sm:$0xf] %v735
      %800 = vst [vmem:[%s226 + $0x7c] sm:$0xf] %v736
      %801 = vst [vmem:[%s226 + $0x80] sm:$0xf] %v737
      %802 = vst [vmem:[%s226 + $0x84] sm:$0xf] %v738
      %803 = vst [vmem:[%s226 + $0x88] sm:$0xf] %v739
      %804 = vst [vmem:[%s226 + $0x8c] sm:$0xf] %v740
      %805 = vst [vmem:[%s226 + $0x90] sm:$0xf] %v741
      %806 = vst [vmem:[%s226 + $0x94] sm:$0xf] %v742
      %807 = vst [vmem:[%s226 + $0x98] sm:$0xf] %v743
      %808 = vst [vmem:[%s226 + $0x9c] sm:$0xf] %v744
      %809 = vst [vmem:[%s226 + $0xa0] sm:$0xf] %v745
      %810 = vst [vmem:[%s226 + $0xa4] sm:$0xf] %v746
      %811 = vst [vmem:[%s226 + $0xa8] sm:$0xf] %v747
      %812 = vst [vmem:[%s226 + $0xac] sm:$0xf] %v748
      %813 = vst [vmem:[%s226 + $0xb0] sm:$0xf] %v749
      %814 = vst [vmem:[%s226 + $0xb4] sm:$0xf] %v750
      %815 = vst [vmem:[%s226 + $0xb8] sm:$0xf] %v751
      %816 = vst [vmem:[%s226 + $0xbc] sm:$0xf] %v752
      %817 = vst [vmem:[%s226 + $0xc0] sm:$0xf] %v753
      %818 = vst [vmem:[%s226 + $0xc4] sm:$0xf] %v754
      %819 = vst [vmem:[%s226 + $0xc8] sm:$0xf] %v755
      %820 = vst [vmem:[%s226 + $0xcc] sm:$0xf] %v756
      %821 = vst [vmem:[%s226 + $0xd0] sm:$0xf] %v757
      %822 = vst [vmem:[%s226 + $0xd4] sm:$0xf] %v758
      %823 = vst [vmem:[%s226 + $0xd8] sm:$0xf] %v759
      %824 = vst [vmem:[%s226 + $0xdc] sm:$0xf] %v760
      %825 = vst [vmem:[%s226 + $0xe0] sm:$0xf] %v761
      %826 = vst [vmem:[%s226 + $0xe4] sm:$0xf] %v762
      %827 = vst [vmem:[%s226 + $0xe8] sm:$0xf] %v763
      %828 = vst [vmem:[%s226 + $0xec] sm:$0xf] %v764
      %829 = vst [vmem:[%s226 + $0xf0] sm:$0xf] %v765
      %830 = vst [vmem:[%s226 + $0xf4] sm:$0xf] %v766
      %831 = vst [vmem:[%s226 + $0xf8] sm:$0xf] %v767
      %832 = vst [vmem:[%s226 + $0xfc] sm:$0xf] %v768
      %s833 = smul.u32 64, %s16
      %p834 = scmp.lt.s32.totalorder %s833, 255
      %s835 = scalar_select %p834, %s833, 255
      %s836 = smul.addr %s835, 4
      %s837 = scalar_lea.vmem %s5, %s836
      // Predicated region
      $region41: #{discriminator_forward.10} parent=39 // pred_check
        %p838 = pneg %p144
      $region42: #{discriminator_forward.10} parent=39 // pred_check_branch
        %840 = sbr.rel (%p838) target = $region44
      $region43: #{discriminator_forward.10} parent=39 // pred_region
        %s841 = smul.u32 64, %s16
      $region44: #{discriminator_forward.10} parent=39 // pred_fallthru
        _
    $region40: #{discriminator_forward.10} parent=5 // pred_fallthru
      _
    %p842 = scmp.le.s32.totalorder 2, %s11
    // Predicated region
    $region45: #{discriminator_forward.10} parent=5 // pred_check
      %p843 = pneg %p842
    $region46: #{discriminator_forward.10} parent=5 // pred_check_branch
      %845 = sbr.rel (%p843) target = $region48
    $region47: #{discriminator_forward.10} parent=5 // pred_region
      %s846 = ssub.s32 %s11, 2
      // Predicated region
      $region49: #{discriminator_forward.10} parent=47 // pred_check
        %p847 = pneg %p150
      $region50: #{discriminator_forward.10} parent=47 // pred_check_branch
        %849 = sbr.rel (%p847) target = $region52
      $region51: #{discriminator_forward.10} parent=47 // pred_region
        %s850 = smul.u32 64, %s17
        %p851 = scmp.lt.s32.totalorder %s850, 255
        %s852 = scalar_select %p851, %s850, 255
        %s853 = smul.addr %s852, 4
        %s854 = scalar_lea.vmem %s5, %s853
      $region52: #{discriminator_forward.10} parent=47 // pred_fallthru
        _
    $region48: #{discriminator_forward.10} parent=5 // pred_fallthru
      _
  $region6: #{discriminator_forward.10} parent=0 // loop_footer
    %s15 = sadd.s32 1, %s11
  $region7: #{discriminator_forward.10} parent=0 // loop_footer_branch
    %10 = sbr.rel target = $region3
  $region8: #{discriminator_forward.10} parent=0 // loop_exit
    _

// kernel: discriminator_forward.9
$region0: #{discriminator_forward.9}
  #allocation0 [shape = 'u32[]', space=smem, size = 0x4, offset = 0x4, fixed_abs, tag = 'smem constant byte address 0x4 - core index']
  #allocation1 [shape = 'u32[72,128]{1,0:T(1,128)}', space=vmem, size = 0x9000, scoped, tag = 'internal scratch']
  %s0 = inlined_call_operand.vmem [shape: bf16[2048,128], index: 0, kind: input, shape index: {}]
  %s1 = inlined_call_operand.vmem [shape: bf16[128,128], index: 1, kind: input, shape index: {}]
  %s2 = inlined_call_operand.vmem [shape: bf16[2048,128], index: 2, kind: output, shape index: {0}]
  %s3 = inlined_call_operand.vmem [shape: f32[1,128], index: 3, kind: output, shape index: {1}]
  %s4 = inlined_call_operand.vmem [shape: f32[1,128], index: 4, kind: output, shape index: {2}]
  %5 = xla_tuple %s2, %s3, %s4
  %s6 = sld [smem:[#allocation0]]
  $region61: #{discriminator_forward.9} parent=0
    _
  %s8 = ssub.s32 1, %s6
  %s9 = scalar_select 0, %s8, %s6
  loop: start=0, step=1, limit=6
  $region2: #{discriminator_forward.9} parent=0 // loop_pre_header
    _
  $region3: #{discriminator_forward.9} parent=0 // loop_header
    %s11 = sphi 0, %s15
    %p12 = scmp.ge.s32.totalorder %s11, 6
    %s21 = sphi 0, %s23
    %s24 = sphi 0, %s21
    %s25 = sphi 0, %s24
    %s41 = sphi 0, %s25
    %s45 = sphi 0, %s45
    %s47 = sphi 0, %s45
    %s48 = sphi 0, %s47
    %s62 = sphi 0, %s48
    %s68 = sphi 0, %s70
    %s71 = sphi 0, %s68
    %s72 = sphi 0, %s71
    %s88 = sphi 0, %s72
    %s92 = sphi 0, %s92
    %s94 = sphi 0, %s92
    %s95 = sphi 0, %s94
    %s109 = sphi 0, %s95
    %s113 = sphi 0, %s113
    %s115 = sphi 0, %s113
    %s116 = sphi 0, %s115
    %s130 = sphi 0, %s116
  $region4: #{discriminator_forward.9} parent=0 // loop_header_branch
    %14 = sbr.rel (%p12) target = $region8
  $region5: #{discriminator_forward.9} parent=0 // loop_body
    %s16 = ssub.s32 %s11, 1
    %s17 = ssub.s32 %s11, 2
    %s18 = sadd.s32 %s11, 1
    %s19 = ssub.s32 %s11, %s18
    %p20 = scmp.eq.s32.totalorder %s19, 0
    %s22 = sadd.s32 %s21, 1
    %s23 = scalar_select %p20, %s21, %s22
    %p26 = pneg %p20
    %p27 = scmp.eq.s32.totalorder %s11, 3
    %p28 = por %p26, %p27
    %p29 = scmp.ne.s32.totalorder %s21, %s24
    %p30 = scmp.eq.s32.totalorder %s11, 0
    %p31 = por %p29, %p30
    %p32 = scmp.ne.s32.totalorder %s21, %s24
    %p33 = scmp.eq.s32.totalorder %s16, 3
    %p34 = por %p32, %p33
    %p35 = scmp.ne.s32.totalorder %s24, %s25
    %p36 = scmp.eq.s32.totalorder %s16, 0
    %p37 = por %p35, %p36
    %p38 = scmp.ne.s32.totalorder %s24, %s25
    %p39 = scmp.eq.s32.totalorder %s17, 3
    %p40 = por %p38, %p39
    %p42 = scmp.ne.s32.totalorder %s25, %s41
    %p43 = scmp.eq.s32.totalorder %s17, 0
    %p44 = por %p42, %p43
    %s46 = sadd.s32 %s45, 1
    %p49 = scmp.eq.s32.totalorder %s11, 3
    %p50 = scmp.ne.s32.totalorder %s45, %s47
    %p51 = scmp.eq.s32.totalorder %s11, 0
    %p52 = por %p50, %p51
    %p53 = scmp.ne.s32.totalorder %s45, %s47
    %p54 = scmp.eq.s32.totalorder %s16, 3
    %p55 = por %p53, %p54
    %p56 = scmp.ne.s32.totalorder %s47, %s48
    %p57 = scmp.eq.s32.totalorder %s16, 0
    %p58 = por %p56, %p57
    %p59 = scmp.ne.s32.totalorder %s47, %s48
    %p60 = scmp.eq.s32.totalorder %s17, 3
    %p61 = por %p59, %p60
    %p63 = scmp.ne.s32.totalorder %s48, %s62
    %p64 = scmp.eq.s32.totalorder %s17, 0
    %p65 = por %p63, %p64
    %s66 = ssub.s32 %s11, %s18
    %p67 = scmp.eq.s32.totalorder %s66, 0
    %s69 = sadd.s32 %s68, 1
    %s70 = scalar_select %p67, %s68, %s69
    %p73 = pneg %p67
    %p74 = scmp.eq.s32.totalorder %s11, 3
    %p75 = por %p73, %p74
    %p76 = scmp.ne.s32.totalorder %s68, %s71
    %p77 = scmp.eq.s32.totalorder %s11, 0
    %p78 = por %p76, %p77
    %p79 = scmp.ne.s32.totalorder %s68, %s71
    %p80 = scmp.eq.s32.totalorder %s16, 3
    %p81 = por %p79, %p80
    %p82 = scmp.ne.s32.totalorder %s71, %s72
    %p83 = scmp.eq.s32.totalorder %s16, 0
    %p84 = por %p82, %p83
    %p85 = scmp.ne.s32.totalorder %s71, %s72
    %p86 = scmp.eq.s32.totalorder %s17, 3
    %p87 = por %p85, %p86
    %p89 = scmp.ne.s32.totalorder %s72, %s88
    %p90 = scmp.eq.s32.totalorder %s17, 0
    %p91 = por %p89, %p90
    %s93 = sadd.s32 %s92, 1
    %p96 = scmp.eq.s32.totalorder %s11, 3
    %p97 = scmp.ne.s32.totalorder %s92, %s94
    %p98 = scmp.eq.s32.totalorder %s11, 0
    %p99 = por %p97, %p98
    %p100 = scmp.ne.s32.totalorder %s92, %s94
    %p101 = scmp.eq.s32.totalorder %s16, 3
    %p102 = por %p100, %p101
    %p103 = scmp.ne.s32.totalorder %s94, %s95
    %p104 = scmp.eq.s32.totalorder %s16, 0
    %p105 = por %p103, %p104
    %p106 = scmp.ne.s32.totalorder %s94, %s95
    %p107 = scmp.eq.s32.totalorder %s17, 3
    %p108 = por %p106, %p107
    %p110 = scmp.ne.s32.totalorder %s95, %s109
    %p111 = scmp.eq.s32.totalorder %s17, 0
    %p112 = por %p110, %p111
    %s114 = sadd.s32 %s113, 1
    %p117 = scmp.eq.s32.totalorder %s11, 3
    %p118 = scmp.ne.s32.totalorder %s113, %s115
    %p119 = scmp.eq.s32.totalorder %s11, 0
    %p120 = por %p118, %p119
    %p121 = scmp.ne.s32.totalorder %s113, %s115
    %p122 = scmp.eq.s32.totalorder %s16, 3
    %p123 = por %p121, %p122
    %p124 = scmp.ne.s32.totalorder %s115, %s116
    %p125 = scmp.eq.s32.totalorder %s16, 0
    %p126 = por %p124, %p125
    %p127 = scmp.ne.s32.totalorder %s115, %s116
    %p128 = scmp.eq.s32.totalorder %s17, 3
    %p129 = por %p127, %p128
    %p131 = scmp.ne.s32.totalorder %s116, %s130
    %p132 = scmp.eq.s32.totalorder %s17, 0
    %p133 = por %p131, %p132
    %p134 = scmp.le.s32.totalorder 1, %s11
    %p135 = scmp.lt.s32.totalorder %s11, 5
    %p136 = pnand %p134, %p135
    %p137 = pneg %p136
    // Predicated region
    $region9: #{discriminator_forward.9} parent=5 // pred_check
      _
    $region10: #{discriminator_forward.9} parent=5 // pred_check_branch
      %139 = sbr.rel (%p136) target = $region12
    $region11: #{discriminator_forward.9} parent=5 // pred_region
      %s140 = ssub.s32 %s11, 1
      // Predicated region
      $region13: #{discriminator_forward.9} parent=11 // pred_check
        %p141 = pneg %p58
      $region14: #{discriminator_forward.9} parent=11 // pred_check_branch
        %143 = sbr.rel (%p141) target = $region16
      $region15: #{discriminator_forward.9} parent=11 // pred_region
        _
      $region16: #{discriminator_forward.9} parent=11 // pred_fallthru
        _
    $region12: #{discriminator_forward.9} parent=5 // pred_fallthru
      _
    %p144 = scmp.lt.s32.totalorder %s11, 4
    // Predicated region
    $region17: #{discriminator_forward.9} parent=5 // pred_check
      %p145 = pneg %p144
    $region18: #{discriminator_forward.9} parent=5 // pred_check_branch
      %147 = sbr.rel (%p145) target = $region20
    $region19: #{discriminator_forward.9} parent=5 // pred_region
      // Predicated region
      $region21: #{discriminator_forward.9} parent=19 // pred_check
        %p148 = pneg %p31
      $region22: #{discriminator_forward.9} parent=19 // pred_check_branch
        %150 = sbr.rel (%p148) target = $region24
      $region23: #{discriminator_forward.9} parent=19 // pred_region
        %s151 = smul.u32 64, %s11
        %p152 = scmp.lt.s32.totalorder %s151, 255
        %s153 = scalar_select %p152, %s151, 255
        %s154 = smul.addr %s153, 4
        %s155 = scalar_lea.vmem %s0, %s154
        %s156 = smul.u32 64, %s11
      $region24: #{discriminator_forward.9} parent=19 // pred_fallthru
        _
    $region20: #{discriminator_forward.9} parent=5 // pred_fallthru
      _
    %p157 = scmp.le.s32.totalorder 1, %s11
    %p158 = scmp.lt.s32.totalorder %s11, 5
    %p159 = pnand %p157, %p158
    %p160 = pneg %p159
    // Predicated region
    $region25: #{discriminator_forward.9} parent=5 // pred_check
      _
    $region26: #{discriminator_forward.9} parent=5 // pred_check_branch
      %162 = sbr.rel (%p159) target = $region28
    $region27: #{discriminator_forward.9} parent=5 // pred_region
      %s163 = ssub.s32 %s11, 1
      %s164 = smul.u32 64, %s16
      %p165 = scmp.lt.s32.totalorder %s164, 255
      %s166 = scalar_select %p165, %s164, 255
      %s167 = smul.addr %s166, 4
      %s168 = scalar_lea.vmem %s0, %s167
      %p169 = pneg %p37
      %p170 = pneg %p34
      %p171 = pneg %p58
      %p172 = pneg %p55
      %p173 = pneg %p84
      %p174 = pneg %p81
      %s175 = smul.u32 64, %s16
      %p176 = scmp.lt.s32.totalorder %s175, 255
      %s177 = scalar_select %p176, %s175, 255
      %s178 = smul.addr %s177, 4
      %s179 = scalar_lea.vmem %s2, %s178
      %p180 = pneg %p105
      %p181 = pneg %p102
      %p182 = pneg %p126
      %p183 = pneg %p123
      %s184 = smul.u32 64, %s16
      %p185 = scmp.lt.s32.totalorder %s184, 255
      %s186 = scalar_select %p185, %s184, 255
      %s187 = smul.addr %s186, 4
      %s188 = scalar_lea.vmem %s0, %s187
      %s189 = smul.u32 64, %s16
      %s190 = smul.u32 64, %s16
      %p191 = scmp.lt.s32.totalorder %s190, 255
      %s192 = scalar_select %p191, %s190, 255
      %s193 = smul.addr %s192, 4
      %s194 = scalar_lea.vmem %s2, %s193
      %s195 = smul.u32 64, %s16
      %p196 = scmp.eq.s32.totalorder %s16, 0
      // Predicated region
      $region29: #{discriminator_forward.9} parent=27 // pred_check
        %p197 = pneg %p196
      $region30: #{discriminator_forward.9} parent=27 // pred_check_branch
        %199 = sbr.rel (%p197) target = $region32
      $region31: #{discriminator_forward.9} parent=27 // pred_region
        %200 = vst [vmem:[%s3] sm:$0x1] 0.0
        %201 = vst [vmem:[%s4] sm:$0x1] 0.0
      $region32: #{discriminator_forward.9} parent=27 // pred_fallthru
        _
      %v202 = vld [vmem:[%s188] sm:$0xf]
      %v203 = vld [vmem:[%s188 + $0x4] sm:$0xf]
      %v204 = vld [vmem:[%s188 + $0x8] sm:$0xf]
      %v205 = vld [vmem:[%s188 + $0xc] sm:$0xf]
      %v206 = vld [vmem:[%s188 + $0x10] sm:$0xf]
      %v207 = vld [vmem:[%s188 + $0x14] sm:$0xf]
      %v208 = vld [vmem:[%s188 + $0x18] sm:$0xf]
      %v209 = vld [vmem:[%s188 + $0x1c] sm:$0xf]
      %v210 = vld [vmem:[%s188 + $0x20] sm:$0xf]
      %v211 = vld [vmem:[%s188 + $0x24] sm:$0xf]
      %v212 = vld [vmem:[%s188 + $0x28] sm:$0xf]
      %v213 = vld [vmem:[%s188 + $0x2c] sm:$0xf]
      %v214 = vld [vmem:[%s188 + $0x30] sm:$0xf]
      %v215 = vld [vmem:[%s188 + $0x34] sm:$0xf]
      %v216 = vld [vmem:[%s188 + $0x38] sm:$0xf]
      %v217 = vld [vmem:[%s188 + $0x3c] sm:$0xf]
      %v218 = vld [vmem:[%s188 + $0x40] sm:$0xf]
      %v219 = vld [vmem:[%s188 + $0x44] sm:$0xf]
      %v220 = vld [vmem:[%s188 + $0x48] sm:$0xf]
      %v221 = vld [vmem:[%s188 + $0x4c] sm:$0xf]
      %v222 = vld [vmem:[%s188 + $0x50] sm:$0xf]
      %v223 = vld [vmem:[%s188 + $0x54] sm:$0xf]
      %v224 = vld [vmem:[%s188 + $0x58] sm:$0xf]
      %v225 = vld [vmem:[%s188 + $0x5c] sm:$0xf]
      %v226 = vld [vmem:[%s188 + $0x60] sm:$0xf]
      %v227 = vld [vmem:[%s188 + $0x64] sm:$0xf]
      %v228 = vld [vmem:[%s188 + $0x68] sm:$0xf]
      %v229 = vld [vmem:[%s188 + $0x6c] sm:$0xf]
      %v230 = vld [vmem:[%s188 + $0x70] sm:$0xf]
      %v231 = vld [vmem:[%s188 + $0x74] sm:$0xf]
      %v232 = vld [vmem:[%s188 + $0x78] sm:$0xf]
      %v233 = vld [vmem:[%s188 + $0x7c] sm:$0xf]
      %v234 = vld [vmem:[%s188 + $0x80] sm:$0xf]
      %v235 = vld [vmem:[%s188 + $0x84] sm:$0xf]
      %v236 = vld [vmem:[%s188 + $0x88] sm:$0xf]
      %v237 = vld [vmem:[%s188 + $0x8c] sm:$0xf]
      %v238 = vld [vmem:[%s188 + $0x90] sm:$0xf]
      %v239 = vld [vmem:[%s188 + $0x94] sm:$0xf]
      %v240 = vld [vmem:[%s188 + $0x98] sm:$0xf]
      %v241 = vld [vmem:[%s188 + $0x9c] sm:$0xf]
      %v242 = vld [vmem:[%s188 + $0xa0] sm:$0xf]
      %v243 = vld [vmem:[%s188 + $0xa4] sm:$0xf]
      %v244 = vld [vmem:[%s188 + $0xa8] sm:$0xf]
      %v245 = vld [vmem:[%s188 + $0xac] sm:$0xf]
      %v246 = vld [vmem:[%s188 + $0xb0] sm:$0xf]
      %v247 = vld [vmem:[%s188 + $0xb4] sm:$0xf]
      %v248 = vld [vmem:[%s188 + $0xb8] sm:$0xf]
      %v249 = vld [vmem:[%s188 + $0xbc] sm:$0xf]
      %v250 = vld [vmem:[%s188 + $0xc0] sm:$0xf]
      %v251 = vld [vmem:[%s188 + $0xc4] sm:$0xf]
      %v252 = vld [vmem:[%s188 + $0xc8] sm:$0xf]
      %v253 = vld [vmem:[%s188 + $0xcc] sm:$0xf]
      %v254 = vld [vmem:[%s188 + $0xd0] sm:$0xf]
      %v255 = vld [vmem:[%s188 + $0xd4] sm:$0xf]
      %v256 = vld [vmem:[%s188 + $0xd8] sm:$0xf]
      %v257 = vld [vmem:[%s188 + $0xdc] sm:$0xf]
      %v258 = vld [vmem:[%s188 + $0xe0] sm:$0xf]
      %v259 = vld [vmem:[%s188 + $0xe4] sm:$0xf]
      %v260 = vld [vmem:[%s188 + $0xe8] sm:$0xf]
      %v261 = vld [vmem:[%s188 + $0xec] sm:$0xf]
      %v262 = vld [vmem:[%s188 + $0xf0] sm:$0xf]
      %v263 = vld [vmem:[%s188 + $0xf4] sm:$0xf]
      %v264 = vld [vmem:[%s188 + $0xf8] sm:$0xf]
      %v265 = vld [vmem:[%s188 + $0xfc] sm:$0xf]
      %v266 = vld [vmem:[%s1] sm:$0xf]
      %v267 = vld [vmem:[%s1 + $0x4] sm:$0xf]
      %v268 = vld [vmem:[%s1 + $0x8] sm:$0xf]
      %v269 = vld [vmem:[%s1 + $0xc] sm:$0xf]
      %v270 = vld [vmem:[%s1 + $0x10] sm:$0xf]
      %v271 = vld [vmem:[%s1 + $0x14] sm:$0xf]
      %v272 = vld [vmem:[%s1 + $0x18] sm:$0xf]
      %v273 = vld [vmem:[%s1 + $0x1c] sm:$0xf]
      %v274 = vld [vmem:[%s1 + $0x20] sm:$0xf]
      %v275 = vld [vmem:[%s1 + $0x24] sm:$0xf]
      %v276 = vld [vmem:[%s1 + $0x28] sm:$0xf]
      %v277 = vld [vmem:[%s1 + $0x2c] sm:$0xf]
      %v278 = vld [vmem:[%s1 + $0x30] sm:$0xf]
      %v279 = vld [vmem:[%s1 + $0x34] sm:$0xf]
      %v280 = vld [vmem:[%s1 + $0x38] sm:$0xf]
      %v281 = vld [vmem:[%s1 + $0x3c] sm:$0xf]
      %v346 = vunpack.c.l.b16 %v202
      %v347 = vunpack.c.l.b16 %v203
      %v348 = vunpack.c.l.b16 %v204
      %v349 = vunpack.c.l.b16 %v205
      %v350 = vunpack.c.l.b16 %v206
      %v351 = vunpack.c.l.b16 %v207
      %v352 = vunpack.c.l.b16 %v208
      %v353 = vunpack.c.l.b16 %v209
      %v354 = vunpack.c.l.b16 %v210
      %v355 = vunpack.c.l.b16 %v211
      %v356 = vunpack.c.l.b16 %v212
      %v357 = vunpack.c.l.b16 %v213
      %v358 = vunpack.c.l.b16 %v214
      %v359 = vunpack.c.l.b16 %v215
      %v360 = vunpack.c.l.b16 %v216
      %v361 = vunpack.c.l.b16 %v217
      %v362 = vunpack.c.l.b16 %v218
      %v363 = vunpack.c.l.b16 %v219
      %v364 = vunpack.c.l.b16 %v220
      %v365 = vunpack.c.l.b16 %v221
      %v366 = vunpack.c.l.b16 %v222
      %v367 = vunpack.c.l.b16 %v223
      %v368 = vunpack.c.l.b16 %v224
      %v369 = vunpack.c.l.b16 %v225
      %v370 = vunpack.c.l.b16 %v226
      %v371 = vunpack.c.l.b16 %v227
      %v372 = vunpack.c.l.b16 %v228
      %v373 = vunpack.c.l.b16 %v229
      %v374 = vunpack.c.l.b16 %v230
      %v375 = vunpack.c.l.b16 %v231
      %v376 = vunpack.c.l.b16 %v232
      %v377 = vunpack.c.l.b16 %v233
      %v378 = vunpack.c.l.b16 %v234
      %v379 = vunpack.c.l.b16 %v235
      %v380 = vunpack.c.l.b16 %v236
      %v381 = vunpack.c.l.b16 %v237
      %v382 = vunpack.c.l.b16 %v238
      %v383 = vunpack.c.l.b16 %v239
      %v384 = vunpack.c.l.b16 %v240
      %v385 = vunpack.c.l.b16 %v241
      %v386 = vunpack.c.l.b16 %v242
      %v387 = vunpack.c.l.b16 %v243
      %v388 = vunpack.c.l.b16 %v244
      %v389 = vunpack.c.l.b16 %v245
      %v390 = vunpack.c.l.b16 %v246
      %v391 = vunpack.c.l.b16 %v247
      %v392 = vunpack.c.l.b16 %v248
      %v393 = vunpack.c.l.b16 %v249
      %v394 = vunpack.c.l.b16 %v250
      %v395 = vunpack.c.l.b16 %v251
      %v396 = vunpack.c.l.b16 %v252
      %v397 = vunpack.c.l.b16 %v253
      %v398 = vunpack.c.l.b16 %v254
      %v399 = vunpack.c.l.b16 %v255
      %v400 = vunpack.c.l.b16 %v256
      %v401 = vunpack.c.l.b16 %v257
      %v402 = vunpack.c.l.b16 %v258
      %v403 = vunpack.c.l.b16 %v259
      %v404 = vunpack.c.l.b16 %v260
      %v405 = vunpack.c.l.b16 %v261
      %v406 = vunpack.c.l.b16 %v262
      %v407 = vunpack.c.l.b16 %v263
      %v408 = vunpack.c.l.b16 %v264
      %v409 = vunpack.c.l.b16 %v265
      %v410 = vpack.c.b16 %v347, %v346
      %v411 = vpack.c.b16 %v349, %v348
      %v412 = vpack.c.b16 %v351, %v350
      %v413 = vpack.c.b16 %v353, %v352
      %v414 = vpack.c.b16 %v355, %v354
      %v415 = vpack.c.b16 %v357, %v356
      %v416 = vpack.c.b16 %v359, %v358
      %v417 = vpack.c.b16 %v361, %v360
      %v418 = vpack.c.b16 %v363, %v362
      %v419 = vpack.c.b16 %v365, %v364
      %v420 = vpack.c.b16 %v367, %v366
      %v421 = vpack.c.b16 %v369, %v368
      %v422 = vpack.c.b16 %v371, %v370
      %v423 = vpack.c.b16 %v373, %v372
      %v424 = vpack.c.b16 %v375, %v374
      %v425 = vpack.c.b16 %v377, %v376
      %v426 = vpack.c.b16 %v379, %v378
      %v427 = vpack.c.b16 %v381, %v380
      %v428 = vpack.c.b16 %v383, %v382
      %v429 = vpack.c.b16 %v385, %v384
      %v430 = vpack.c.b16 %v387, %v386
      %v431 = vpack.c.b16 %v389, %v388
      %v432 = vpack.c.b16 %v391, %v390
      %v433 = vpack.c.b16 %v393, %v392
      %v434 = vpack.c.b16 %v395, %v394
      %v435 = vpack.c.b16 %v397, %v396
      %v436 = vpack.c.b16 %v399, %v398
      %v437 = vpack.c.b16 %v401, %v400
      %v438 = vpack.c.b16 %v403, %v402
      %v439 = vpack.c.b16 %v405, %v404
      %v440 = vpack.c.b16 %v407, %v406
      %v441 = vpack.c.b16 %v409, %v408
      %v490 = vunpack.c.l.b16 %v266
      %v491 = vunpack.c.l.b16 %v267
      %v492 = vunpack.c.l.b16 %v268
      %v493 = vunpack.c.l.b16 %v269
      %v494 = vunpack.c.l.b16 %v270
      %v495 = vunpack.c.l.b16 %v271
      %v496 = vunpack.c.l.b16 %v272
      %v497 = vunpack.c.l.b16 %v273
      %v498 = vunpack.c.l.b16 %v274
      %v499 = vunpack.c.l.b16 %v275
      %v500 = vunpack.c.l.b16 %v276
      %v501 = vunpack.c.l.b16 %v277
      %v502 = vunpack.c.l.b16 %v278
      %v503 = vunpack.c.l.b16 %v279
      %v504 = vunpack.c.l.b16 %v280
      %v505 = vunpack.c.l.b16 %v281
      %v506 = vpack.c.b16 %v491, %v490
      %v507 = vpack.c.b16 %v493, %v492
      %v508 = vpack.c.b16 %v495, %v494
      %v509 = vpack.c.b16 %v497, %v496
      %v510 = vpack.c.b16 %v499, %v498
      %v511 = vpack.c.b16 %v501, %v500
      %v512 = vpack.c.b16 %v503, %v502
      %v513 = vpack.c.b16 %v505, %v504
      %522 = vmatpush.bf16.msra.mxu0 %v513
      %523 = vmatpush.bf16.msra.mxu0 %v512
      %524 = vmatpush.bf16.msra.mxu0 %v511
      %525 = vmatpush.bf16.msra.mxu0 %v510
      %526 = vmatpush.bf16.msra.mxu0 %v509
      %527 = vmatpush.bf16.msra.mxu0 %v508
      %528 = vmatpush.bf16.msra.mxu0 %v507
      %529 = vmatpush.bf16.msra.mxu0 %v506
      %530 = vmatmul.bf16.gmra.mxu0 %v410
      %v531 = vpop.f32.mrf.mxu0
      %v532 = vadd.f32 0.0, %v531
      %v533 = vpop.f32.mrf.mxu0
      %v534 = vadd.f32 0.0, %v533
      %535 = vmatmul.bf16.gmra.mxu0 %v411
      %v536 = vpop.f32.mrf.mxu0
      %v537 = vadd.f32 0.0, %v536
      %v538 = vpop.f32.mrf.mxu0
      %v539 = vadd.f32 0.0, %v538
      %540 = vmatmul.bf16.gmra.mxu0 %v412
      %v541 = vpop.f32.mrf.mxu0
      %v542 = vadd.f32 0.0, %v541
      %v543 = vpop.f32.mrf.mxu0
      %v544 = vadd.f32 0.0, %v543
      %545 = vmatmul.bf16.gmra.mxu0 %v413
      %v546 = vpop.f32.mrf.mxu0
      %v547 = vadd.f32 0.0, %v546
      %v548 = vpop.f32.mrf.mxu0
      %v549 = vadd.f32 0.0, %v548
      %550 = vmatmul.bf16.gmra.mxu0 %v414
      %v551 = vpop.f32.mrf.mxu0
      %v552 = vadd.f32 0.0, %v551
      %v553 = vpop.f32.mrf.mxu0
      %v554 = vadd.f32 0.0, %v553
      %555 = vmatmul.bf16.gmra.mxu0 %v415
      %v556 = vpop.f32.mrf.mxu0
      %v557 = vadd.f32 0.0, %v556
      %v558 = vpop.f32.mrf.mxu0
      %v559 = vadd.f32 0.0, %v558
      %560 = vmatmul.bf16.gmra.mxu0 %v416
      %v561 = vpop.f32.mrf.mxu0
      %v562 = vadd.f32 0.0, %v561
      %v563 = vpop.f32.mrf.mxu0
      %v564 = vadd.f32 0.0, %v563
      %565 = vmatmul.bf16.gmra.mxu0 %v417
      %v566 = vpop.f32.mrf.mxu0
      %v567 = vadd.f32 0.0, %v566
      %v568 = vpop.f32.mrf.mxu0
      %v569 = vadd.f32 0.0, %v568
      %570 = vmatmul.bf16.gmra.mxu0 %v418
      %v571 = vpop.f32.mrf.mxu0
      %v572 = vadd.f32 0.0, %v571
      %v573 = vpop.f32.mrf.mxu0
      %v574 = vadd.f32 0.0, %v573
      %575 = vmatmul.bf16.gmra.mxu0 %v419
      %v576 = vpop.f32.mrf.mxu0
      %v577 = vadd.f32 0.0, %v576
      %v578 = vpop.f32.mrf.mxu0
      %v579 = vadd.f32 0.0, %v578
      %580 = vmatmul.bf16.gmra.mxu0 %v420
      %v581 = vpop.f32.mrf.mxu0
      %v582 = vadd.f32 0.0, %v581
      %v583 = vpop.f32.mrf.mxu0
      %v584 = vadd.f32 0.0, %v583
      %585 = vmatmul.bf16.gmra.mxu0 %v421
      %v586 = vpop.f32.mrf.mxu0
      %v587 = vadd.f32 0.0, %v586
      %v588 = vpop.f32.mrf.mxu0
      %v589 = vadd.f32 0.0, %v588
      %590 = vmatmul.bf16.gmra.mxu0 %v422
      %v591 = vpop.f32.mrf.mxu0
      %v592 = vadd.f32 0.0, %v591
      %v593 = vpop.f32.mrf.mxu0
      %v594 = vadd.f32 0.0, %v593
      %595 = vmatmul.bf16.gmra.mxu0 %v423
      %v596 = vpop.f32.mrf.mxu0
      %v597 = vadd.f32 0.0, %v596
      %v598 = vpop.f32.mrf.mxu0
      %v599 = vadd.f32 0.0, %v598
      %600 = vmatmul.bf16.gmra.mxu0 %v424
      %v601 = vpop.f32.mrf.mxu0
      %v602 = vadd.f32 0.0, %v601
      %v603 = vpop.f32.mrf.mxu0
      %v604 = vadd.f32 0.0, %v603
      %605 = vmatmul.bf16.gmra.mxu0 %v425
      %v606 = vpop.f32.mrf.mxu0
      %v607 = vadd.f32 0.0, %v606
      %v608 = vpop.f32.mrf.mxu0
      %v609 = vadd.f32 0.0, %v608
      %610 = vmatmul.bf16.gmra.mxu0 %v426
      %v611 = vpop.f32.mrf.mxu0
      %v612 = vadd.f32 0.0, %v611
      %v613 = vpop.f32.mrf.mxu0
      %v614 = vadd.f32 0.0, %v613
      %615 = vmatmul.bf16.gmra.mxu0 %v427
      %v616 = vpop.f32.mrf.mxu0
      %v617 = vadd.f32 0.0, %v616
      %v618 = vpop.f32.mrf.mxu0
      %v619 = vadd.f32 0.0, %v618
      %620 = vmatmul.bf16.gmra.mxu0 %v428
      %v621 = vpop.f32.mrf.mxu0
      %v622 = vadd.f32 0.0, %v621
      %v623 = vpop.f32.mrf.mxu0
      %v624 = vadd.f32 0.0, %v623
      %625 = vmatmul.bf16.gmra.mxu0 %v429
      %v626 = vpop.f32.mrf.mxu0
      %v627 = vadd.f32 0.0, %v626
      %v628 = vpop.f32.mrf.mxu0
      %v629 = vadd.f32 0.0, %v628
      %630 = vmatmul.bf16.gmra.mxu0 %v430
      %v631 = vpop.f32.mrf.mxu0
      %v632 = vadd.f32 0.0, %v631
      %v633 = vpop.f32.mrf.mxu0
      %v634 = vadd.f32 0.0, %v633
      %635 = vmatmul.bf16.gmra.mxu0 %v431
      %v636 = vpop.f32.mrf.mxu0
      %v637 = vadd.f32 0.0, %v636
      %v638 = vpop.f32.mrf.mxu0
      %v639 = vadd.f32 0.0, %v638
      %640 = vmatmul.bf16.gmra.mxu0 %v432
      %v641 = vpop.f32.mrf.mxu0
      %v642 = vadd.f32 0.0, %v641
      %v643 = vpop.f32.mrf.mxu0
      %v644 = vadd.f32 0.0, %v643
      %645 = vmatmul.bf16.gmra.mxu0 %v433
      %v646 = vpop.f32.mrf.mxu0
      %v647 = vadd.f32 0.0, %v646
      %v648 = vpop.f32.mrf.mxu0
      %v649 = vadd.f32 0.0, %v648
      %650 = vmatmul.bf16.gmra.mxu0 %v434
      %v651 = vpop.f32.mrf.mxu0
      %v652 = vadd.f32 0.0, %v651
      %v653 = vpop.f32.mrf.mxu0
      %v654 = vadd.f32 0.0, %v653
      %655 = vmatmul.bf16.gmra.mxu0 %v435
      %v656 = vpop.f32.mrf.mxu0
      %v657 = vadd.f32 0.0, %v656
      %v658 = vpop.f32.mrf.mxu0
      %v659 = vadd.f32 0.0, %v658
      %660 = vmatmul.bf16.gmra.mxu0 %v436
      %v661 = vpop.f32.mrf.mxu0
      %v662 = vadd.f32 0.0, %v661
      %v663 = vpop.f32.mrf.mxu0
      %v664 = vadd.f32 0.0, %v663
      %665 = vmatmul.bf16.gmra.mxu0 %v437
      %v666 = vpop.f32.mrf.mxu0
      %v667 = vadd.f32 0.0, %v666
      %v668 = vpop.f32.mrf.mxu0
      %v669 = vadd.f32 0.0, %v668
      %670 = vmatmul.bf16.gmra.mxu0 %v438
      %v671 = vpop.f32.mrf.mxu0
      %v672 = vadd.f32 0.0, %v671
      %v673 = vpop.f32.mrf.mxu0
      %v674 = vadd.f32 0.0, %v673
      %675 = vmatmul.bf16.gmra.mxu0 %v439
      %v676 = vpop.f32.mrf.mxu0
      %v677 = vadd.f32 0.0, %v676
      %v678 = vpop.f32.mrf.mxu0
      %v679 = vadd.f32 0.0, %v678
      %680 = vmatmul.bf16.gmra.mxu0 %v440
      %v681 = vpop.f32.mrf.mxu0
      %v682 = vadd.f32 0.0, %v681
      %v683 = vpop.f32.mrf.mxu0
      %v684 = vadd.f32 0.0, %v683
      %685 = vmatmul.bf16.gmra.mxu0 %v441
      %v686 = vpop.f32.mrf.mxu0
      %v687 = vadd.f32 0.0, %v686
      %v688 = vpop.f32.mrf.mxu0
      %v689 = vadd.f32 0.0, %v688
      %690 = vdwg.mxu0
      %v691 = vpack.c.bf16 %v532, %v532
      %v692 = vpack.c.bf16 %v534, %v534
      %v693 = vpack.c.bf16 %v537, %v537
      %v694 = vpack.c.bf16 %v539, %v539
      %v695 = vpack.c.bf16 %v542, %v542
      %v696 = vpack.c.bf16 %v544, %v544
      %v697 = vpack.c.bf16 %v547, %v547
      %v698 = vpack.c.bf16 %v549, %v549
      %v699 = vpack.c.bf16 %v552, %v552
      %v700 = vpack.c.bf16 %v554, %v554
      %v701 = vpack.c.bf16 %v557, %v557
      %v702 = vpack.c.bf16 %v559, %v559
      %v703 = vpack.c.bf16 %v562, %v562
      %v704 = vpack.c.bf16 %v564, %v564
      %v705 = vpack.c.bf16 %v567, %v567
      %v706 = vpack.c.bf16 %v569, %v569
      %v707 = vpack.c.bf16 %v572, %v572
      %v708 = vpack.c.bf16 %v574, %v574
      %v709 = vpack.c.bf16 %v577, %v577
      %v710 = vpack.c.bf16 %v579, %v579
      %v711 = vpack.c.bf16 %v582, %v582
      %v712 = vpack.c.bf16 %v584, %v584
      %v713 = vpack.c.bf16 %v587, %v587
      %v714 = vpack.c.bf16 %v589, %v589
      %v715 = vpack.c.bf16 %v592, %v592
      %v716 = vpack.c.bf16 %v594, %v594
      %v717 = vpack.c.bf16 %v597, %v597
      %v718 = vpack.c.bf16 %v599, %v599
      %v719 = vpack.c.bf16 %v602, %v602
      %v720 = vpack.c.bf16 %v604, %v604
      %v721 = vpack.c.bf16 %v607, %v607
      %v722 = vpack.c.bf16 %v609, %v609
      %v723 = vpack.c.bf16 %v612, %v612
      %v724 = vpack.c.bf16 %v614, %v614
      %v725 = vpack.c.bf16 %v617, %v617
      %v726 = vpack.c.bf16 %v619, %v619
      %v727 = vpack.c.bf16 %v622, %v622
      %v728 = vpack.c.bf16 %v624, %v624
      %v729 = vpack.c.bf16 %v627, %v627
      %v730 = vpack.c.bf16 %v629, %v629
      %v731 = vpack.c.bf16 %v632, %v632
      %v732 = vpack.c.bf16 %v634, %v634
      %v733 = vpack.c.bf16 %v637, %v637
      %v734 = vpack.c.bf16 %v639, %v639
      %v735 = vpack.c.bf16 %v642, %v642
      %v736 = vpack.c.bf16 %v644, %v644
      %v737 = vpack.c.bf16 %v647, %v647
      %v738 = vpack.c.bf16 %v649, %v649
      %v739 = vpack.c.bf16 %v652, %v652
      %v740 = vpack.c.bf16 %v654, %v654
      %v741 = vpack.c.bf16 %v657, %v657
      %v742 = vpack.c.bf16 %v659, %v659
      %v743 = vpack.c.bf16 %v662, %v662
      %v744 = vpack.c.bf16 %v664, %v664
      %v745 = vpack.c.bf16 %v667, %v667
      %v746 = vpack.c.bf16 %v669, %v669
      %v747 = vpack.c.bf16 %v672, %v672
      %v748 = vpack.c.bf16 %v674, %v674
      %v749 = vpack.c.bf16 %v677, %v677
      %v750 = vpack.c.bf16 %v679, %v679
      %v751 = vpack.c.bf16 %v682, %v682
      %v752 = vpack.c.bf16 %v684, %v684
      %v753 = vpack.c.bf16 %v687, %v687
      %v754 = vpack.c.bf16 %v689, %v689
      %755 = vst [vmem:[%s194] sm:$0xf] %v691
      %756 = vst [vmem:[%s194 + $0x4] sm:$0xf] %v692
      %757 = vst [vmem:[%s194 + $0x8] sm:$0xf] %v693
      %758 = vst [vmem:[%s194 + $0xc] sm:$0xf] %v694
      %759 = vst [vmem:[%s194 + $0x10] sm:$0xf] %v695
      %760 = vst [vmem:[%s194 + $0x14] sm:$0xf] %v696
      %761 = vst [vmem:[%s194 + $0x18] sm:$0xf] %v697
      %762 = vst [vmem:[%s194 + $0x1c] sm:$0xf] %v698
      %763 = vst [vmem:[%s194 + $0x20] sm:$0xf] %v699
      %764 = vst [vmem:[%s194 + $0x24] sm:$0xf] %v700
      %765 = vst [vmem:[%s194 + $0x28] sm:$0xf] %v701
      %766 = vst [vmem:[%s194 + $0x2c] sm:$0xf] %v702
      %767 = vst [vmem:[%s194 + $0x30] sm:$0xf] %v703
      %768 = vst [vmem:[%s194 + $0x34] sm:$0xf] %v704
      %769 = vst [vmem:[%s194 + $0x38] sm:$0xf] %v705
      %770 = vst [vmem:[%s194 + $0x3c] sm:$0xf] %v706
      %771 = vst [vmem:[%s194 + $0x40] sm:$0xf] %v707
      %772 = vst [vmem:[%s194 + $0x44] sm:$0xf] %v708
      %773 = vst [vmem:[%s194 + $0x48] sm:$0xf] %v709
      %774 = vst [vmem:[%s194 + $0x4c] sm:$0xf] %v710
      %775 = vst [vmem:[%s194 + $0x50] sm:$0xf] %v711
      %776 = vst [vmem:[%s194 + $0x54] sm:$0xf] %v712
      %777 = vst [vmem:[%s194 + $0x58] sm:$0xf] %v713
      %778 = vst [vmem:[%s194 + $0x5c] sm:$0xf] %v714
      %779 = vst [vmem:[%s194 + $0x60] sm:$0xf] %v715
      %780 = vst [vmem:[%s194 + $0x64] sm:$0xf] %v716
      %781 = vst [vmem:[%s194 + $0x68] sm:$0xf] %v717
      %782 = vst [vmem:[%s194 + $0x6c] sm:$0xf] %v718
      %783 = vst [vmem:[%s194 + $0x70] sm:$0xf] %v719
      %784 = vst [vmem:[%s194 + $0x74] sm:$0xf] %v720
      %785 = vst [vmem:[%s194 + $0x78] sm:$0xf] %v721
      %786 = vst [vmem:[%s194 + $0x7c] sm:$0xf] %v722
      %787 = vst [vmem:[%s194 + $0x80] sm:$0xf] %v723
      %788 = vst [vmem:[%s194 + $0x84] sm:$0xf] %v724
      %789 = vst [vmem:[%s194 + $0x88] sm:$0xf] %v725
      %790 = vst [vmem:[%s194 + $0x8c] sm:$0xf] %v726
      %791 = vst [vmem:[%s194 + $0x90] sm:$0xf] %v727
      %792 = vst [vmem:[%s194 + $0x94] sm:$0xf] %v728
      %793 = vst [vmem:[%s194 + $0x98] sm:$0xf] %v729
      %794 = vst [vmem:[%s194 + $0x9c] sm:$0xf] %v730
      %795 = vst [vmem:[%s194 + $0xa0] sm:$0xf] %v731
      %796 = vst [vmem:[%s194 + $0xa4] sm:$0xf] %v732
      %797 = vst [vmem:[%s194 + $0xa8] sm:$0xf] %v733
      %798 = vst [vmem:[%s194 + $0xac] sm:$0xf] %v734
      %799 = vst [vmem:[%s194 + $0xb0] sm:$0xf] %v735
      %800 = vst [vmem:[%s194 + $0xb4] sm:$0xf] %v736
      %801 = vst [vmem:[%s194 + $0xb8] sm:$0xf] %v737
      %802 = vst [vmem:[%s194 + $0xbc] sm:$0xf] %v738
      %803 = vst [vmem:[%s194 + $0xc0] sm:$0xf] %v739
      %804 = vst [vmem:[%s194 + $0xc4] sm:$0xf] %v740
      %805 = vst [vmem:[%s194 + $0xc8] sm:$0xf] %v741
      %806 = vst [vmem:[%s194 + $0xcc] sm:$0xf] %v742
      %807 = vst [vmem:[%s194 + $0xd0] sm:$0xf] %v743
      %808 = vst [vmem:[%s194 + $0xd4] sm:$0xf] %v744
      %809 = vst [vmem:[%s194 + $0xd8] sm:$0xf] %v745
      %810 = vst [vmem:[%s194 + $0xdc] sm:$0xf] %v746
      %811 = vst [vmem:[%s194 + $0xe0] sm:$0xf] %v747
      %812 = vst [vmem:[%s194 + $0xe4] sm:$0xf] %v748
      %813 = vst [vmem:[%s194 + $0xe8] sm:$0xf] %v749
      %814 = vst [vmem:[%s194 + $0xec] sm:$0xf] %v750
      %815 = vst [vmem:[%s194 + $0xf0] sm:$0xf] %v751
      %816 = vst [vmem:[%s194 + $0xf4] sm:$0xf] %v752
      %817 = vst [vmem:[%s194 + $0xf8] sm:$0xf] %v753
      %818 = vst [vmem:[%s194 + $0xfc] sm:$0xf] %v754
      %v819 = vld [vmem:[%s3] sm:$0x1]
      %v820 = vadd.f32 %v532, %v534
      %v821 = vadd.f32 %v820, %v537
      %v822 = vadd.f32 %v821, %v539
      %v823 = vadd.f32 %v822, %v542
      %v824 = vadd.f32 %v823, %v544
      %v825 = vadd.f32 %v824, %v547
      %v826 = vadd.f32 %v825, %v549
      %v827 = vadd.f32 %v826, %v552
      %v828 = vadd.f32 %v827, %v554
      %v829 = vadd.f32 %v828, %v557
      %v830 = vadd.f32 %v829, %v559
      %v831 = vadd.f32 %v830, %v562
      %v832 = vadd.f32 %v831, %v564
      %v833 = vadd.f32 %v832, %v567
      %v834 = vadd.f32 %v833, %v569
      %v835 = vadd.f32 %v834, %v572
      %v836 = vadd.f32 %v835, %v574
      %v837 = vadd.f32 %v836, %v577
      %v838 = vadd.f32 %v837, %v579
      %v839 = vadd.f32 %v838, %v582
      %v840 = vadd.f32 %v839, %v584
      %v841 = vadd.f32 %v840, %v587
      %v842 = vadd.f32 %v841, %v589
      %v843 = vadd.f32 %v842, %v592
      %v844 = vadd.f32 %v843, %v594
      %v845 = vadd.f32 %v844, %v597
      %v846 = vadd.f32 %v845, %v599
      %v847 = vadd.f32 %v846, %v602
      %v848 = vadd.f32 %v847, %v604
      %v849 = vadd.f32 %v848, %v607
      %v850 = vadd.f32 %v849, %v609
      %v851 = vadd.f32 %v850, %v612
      %v852 = vadd.f32 %v851, %v614
      %v853 = vadd.f32 %v852, %v617
      %v854 = vadd.f32 %v853, %v619
      %v855 = vadd.f32 %v854, %v622
      %v856 = vadd.f32 %v855, %v624
      %v857 = vadd.f32 %v856, %v627
      %v858 = vadd.f32 %v857, %v629
      %v859 = vadd.f32 %v858, %v632
      %v860 = vadd.f32 %v859, %v634
      %v861 = vadd.f32 %v860, %v637
      %v862 = vadd.f32 %v861, %v639
      %v863 = vadd.f32 %v862, %v642
      %v864 = vadd.f32 %v863, %v644
      %v865 = vadd.f32 %v864, %v647
      %v866 = vadd.f32 %v865, %v649
      %v867 = vadd.f32 %v866, %v652
      %v868 = vadd.f32 %v867, %v654
      %v869 = vadd.f32 %v868, %v657
      %v870 = vadd.f32 %v869, %v659
      %v871 = vadd.f32 %v870, %v662
      %v872 = vadd.f32 %v871, %v664
      %v873 = vadd.f32 %v872, %v667
      %v874 = vadd.f32 %v873, %v669
      %v875 = vadd.f32 %v874, %v672
      %v876 = vadd.f32 %v875, %v674
      %v877 = vadd.f32 %v876, %v677
      %v878 = vadd.f32 %v877, %v679
      %v879 = vadd.f32 %v878, %v682
      %v880 = vadd.f32 %v879, %v684
      %v881 = vadd.f32 %v880, %v687
      %v882 = vadd.f32 %v881, %v689
      %v883 = vrot.slane %v882, 4
      %v884 = vadd.f32 %v882, %v883
      %v885 = vrot.slane %v884, 2
      %v886 = vadd.f32 %v884, %v885
      %v887 = vrot.slane %v886, 1
      %v888 = vadd.f32 %v886, %v887
      %v889 = vadd.f32 %v819, %v888
      %890 = vst [vmem:[%s3] sm:$0x1] %v889
      %v891 = vld [vmem:[%s4] sm:$0x1]
      %v892 = vmul.f32 %v532, %v532
      %v893 = vmul.f32 %v534, %v534
      %v894 = vmul.f32 %v537, %v537
      %v895 = vmul.f32 %v539, %v539
      %v896 = vmul.f32 %v542, %v542
      %v897 = vmul.f32 %v544, %v544
      %v898 = vmul.f32 %v547, %v547
      %v899 = vmul.f32 %v549, %v549
      %v900 = vmul.f32 %v552, %v552
      %v901 = vmul.f32 %v554, %v554
      %v902 = vmul.f32 %v557, %v557
      %v903 = vmul.f32 %v559, %v559
      %v904 = vmul.f32 %v562, %v562
      %v905 = vmul.f32 %v564, %v564
      %v906 = vmul.f32 %v567, %v567
      %v907 = vmul.f32 %v569, %v569
      %v908 = vmul.f32 %v572, %v572
      %v909 = vmul.f32 %v574, %v574
      %v910 = vmul.f32 %v577, %v577
      %v911 = vmul.f32 %v579, %v579
      %v912 = vmul.f32 %v582, %v582
      %v913 = vmul.f32 %v584, %v584
      %v914 = vmul.f32 %v587, %v587
      %v915 = vmul.f32 %v589, %v589
      %v916 = vmul.f32 %v592, %v592
      %v917 = vmul.f32 %v594, %v594
      %v918 = vmul.f32 %v597, %v597
      %v919 = vmul.f32 %v599, %v599
      %v920 = vmul.f32 %v602, %v602
      %v921 = vmul.f32 %v604, %v604
      %v922 = vmul.f32 %v607, %v607
      %v923 = vmul.f32 %v609, %v609
      %v924 = vmul.f32 %v612, %v612
      %v925 = vmul.f32 %v614, %v614
      %v926 = vmul.f32 %v617, %v617
      %v927 = vmul.f32 %v619, %v619
      %v928 = vmul.f32 %v622, %v622
      %v929 = vmul.f32 %v624, %v624
      %v930 = vmul.f32 %v627, %v627
      %v931 = vmul.f32 %v629, %v629
      %v932 = vmul.f32 %v632, %v632
      %v933 = vmul.f32 %v634, %v634
      %v934 = vmul.f32 %v637, %v637
      %v935 = vmul.f32 %v639, %v639
      %v936 = vmul.f32 %v642, %v642
      %v937 = vmul.f32 %v644, %v644
      %v938 = vmul.f32 %v647, %v647
      %v939 = vmul.f32 %v649, %v649
      %v940 = vmul.f32 %v652, %v652
      %v941 = vmul.f32 %v654, %v654
      %v942 = vmul.f32 %v657, %v657
      %v943 = vmul.f32 %v659, %v659
      %v944 = vmul.f32 %v662, %v662
      %v945 = vmul.f32 %v664, %v664
      %v946 = vmul.f32 %v667, %v667
      %v947 = vmul.f32 %v669, %v669
      %v948 = vmul.f32 %v672, %v672
      %v949 = vmul.f32 %v674, %v674
      %v950 = vmul.f32 %v677, %v677
      %v951 = vmul.f32 %v679, %v679
      %v952 = vmul.f32 %v682, %v682
      %v953 = vmul.f32 %v684, %v684
      %v954 = vmul.f32 %v687, %v687
      %v955 = vmul.f32 %v689, %v689
      %v956 = vadd.f32 %v892, %v893
      %v957 = vadd.f32 %v956, %v894
      %v958 = vadd.f32 %v957, %v895
      %v959 = vadd.f32 %v958, %v896
      %v960 = vadd.f32 %v959, %v897
      %v961 = vadd.f32 %v960, %v898
      %v962 = vadd.f32 %v961, %v899
      %v963 = vadd.f32 %v962, %v900
      %v964 = vadd.f32 %v963, %v901
      %v965 = vadd.f32 %v964, %v902
      %v966 = vadd.f32 %v965, %v903
      %v967 = vadd.f32 %v966, %v904
      %v968 = vadd.f32 %v967, %v905
      %v969 = vadd.f32 %v968, %v906
      %v970 = vadd.f32 %v969, %v907
      %v971 = vadd.f32 %v970, %v908
      %v972 = vadd.f32 %v971, %v909
      %v973 = vadd.f32 %v972, %v910
      %v974 = vadd.f32 %v973, %v911
      %v975 = vadd.f32 %v974, %v912
      %v976 = vadd.f32 %v975, %v913
      %v977 = vadd.f32 %v976, %v914
      %v978 = vadd.f32 %v977, %v915
      %v979 = vadd.f32 %v978, %v916
      %v980 = vadd.f32 %v979, %v917
      %v981 = vadd.f32 %v980, %v918
      %v982 = vadd.f32 %v981, %v919
      %v983 = vadd.f32 %v982, %v920
      %v984 = vadd.f32 %v983, %v921
      %v985 = vadd.f32 %v984, %v922
      %v986 = vadd.f32 %v985, %v923
      %v987 = vadd.f32 %v986, %v924
      %v988 = vadd.f32 %v987, %v925
      %v989 = vadd.f32 %v988, %v926
      %v990 = vadd.f32 %v989, %v927
      %v991 = vadd.f32 %v990, %v928
      %v992 = vadd.f32 %v991, %v929
      %v993 = vadd.f32 %v992, %v930
      %v994 = vadd.f32 %v993, %v931
      %v995 = vadd.f32 %v994, %v932
      %v996 = vadd.f32 %v995, %v933
      %v997 = vadd.f32 %v996, %v934
      %v998 = vadd.f32 %v997, %v935
      %v999 = vadd.f32 %v998, %v936
      %v1000 = vadd.f32 %v999, %v937
      %v1001 = vadd.f32 %v1000, %v938
      %v1002 = vadd.f32 %v1001, %v939
      %v1003 = vadd.f32 %v1002, %v940
      %v1004 = vadd.f32 %v1003, %v941
      %v1005 = vadd.f32 %v1004, %v942
      %v1006 = vadd.f32 %v1005, %v943
      %v1007 = vadd.f32 %v1006, %v944
      %v1008 = vadd.f32 %v1007, %v945
      %v1009 = vadd.f32 %v1008, %v946
      %v1010 = vadd.f32 %v1009, %v947
      %v1011 = vadd.f32 %v1010, %v948
      %v1012 = vadd.f32 %v1011, %v949
      %v1013 = vadd.f32 %v1012, %v950
      %v1014 = vadd.f32 %v1013, %v951
      %v1015 = vadd.f32 %v1014, %v952
      %v1016 = vadd.f32 %v1015, %v953
      %v1017 = vadd.f32 %v1016, %v954
      %v1018 = vadd.f32 %v1017, %v955
      %v1019 = vrot.slane %v1018, 4
      %v1020 = vadd.f32 %v1018, %v1019
      %v1021 = vrot.slane %v1020, 2
      %v1022 = vadd.f32 %v1020, %v1021
      %v1023 = vrot.slane %v1022, 1
      %v1024 = vadd.f32 %v1022, %v1023
      %v1025 = vadd.f32 %v891, %v1024
      %1026 = vst [vmem:[%s4] sm:$0x1] %v1025
      %s1027 = smul.u32 64, %s16
      %p1028 = scmp.lt.s32.totalorder %s1027, 255
      %s1029 = scalar_select %p1028, %s1027, 255
      %s1030 = smul.addr %s1029, 4
      %s1031 = scalar_lea.vmem %s2, %s1030
      // Predicated region
      $region33: #{discriminator_forward.9} parent=27 // pred_check
        %p1032 = pneg %p81
      $region34: #{discriminator_forward.9} parent=27 // pred_check_branch
        %1034 = sbr.rel (%p1032) target = $region36
      $region35: #{discriminator_forward.9} parent=27 // pred_region
        %s1035 = smul.u32 64, %s16
      $region36: #{discriminator_forward.9} parent=27 // pred_fallthru
        _
      // Predicated region
      $region37: #{discriminator_forward.9} parent=27 // pred_check
        %p1036 = pneg %p102
      $region38: #{discriminator_forward.9} parent=27 // pred_check_branch
        %1038 = sbr.rel (%p1036) target = $region40
      $region39: #{discriminator_forward.9} parent=27 // pred_region
        _
      $region40: #{discriminator_forward.9} parent=27 // pred_fallthru
        _
      // Predicated region
      $region41: #{discriminator_forward.9} parent=27 // pred_check
        %p1039 = pneg %p123
      $region42: #{discriminator_forward.9} parent=27 // pred_check_branch
        %1041 = sbr.rel (%p1039) target = $region44
      $region43: #{discriminator_forward.9} parent=27 // pred_region
        _
      $region44: #{discriminator_forward.9} parent=27 // pred_fallthru
        _
      // Predicated region
      $region45: #{discriminator_forward.9} parent=27 // pred_check
        %p1042 = pneg %p102
      $region46: #{discriminator_forward.9} parent=27 // pred_check_branch
        %1044 = sbr.rel (%p1042) target = $region48
      $region47: #{discriminator_forward.9} parent=27 // pred_region
        _
      $region48: #{discriminator_forward.9} parent=27 // pred_fallthru
        _
      // Predicated region
      $region49: #{discriminator_forward.9} parent=27 // pred_check
        %p1045 = pneg %p123
      $region50: #{discriminator_forward.9} parent=27 // pred_check_branch
        %1047 = sbr.rel (%p1045) target = $region52
      $region51: #{discriminator_forward.9} parent=27 // pred_region
        _
      $region52: #{discriminator_forward.9} parent=27 // pred_fallthru
        _
    $region28: #{discriminator_forward.9} parent=5 // pred_fallthru
      _
    %p1048 = scmp.le.s32.totalorder 2, %s11
    // Predicated region
    $region53: #{discriminator_forward.9} parent=5 // pred_check
      %p1049 = pneg %p1048
    $region54: #{discriminator_forward.9} parent=5 // pred_check_branch
      %1051 = sbr.rel (%p1049) target = $region56
    $region55: #{discriminator_forward.9} parent=5 // pred_region
      %s1052 = ssub.s32 %s11, 2
      // Predicated region
      $region57: #{discriminator_forward.9} parent=55 // pred_check
        %p1053 = pneg %p87
      $region58: #{discriminator_forward.9} parent=55 // pred_check_branch
        %1055 = sbr.rel (%p1053) target = $region60
      $region59: #{discriminator_forward.9} parent=55 // pred_region
        %s1056 = smul.u32 64, %s17
        %p1057 = scmp.lt.s32.totalorder %s1056, 255
        %s1058 = scalar_select %p1057, %s1056, 255
        %s1059 = smul.addr %s1058, 4
        %s1060 = scalar_lea.vmem %s2, %s1059
      $region60: #{discriminator_forward.9} parent=55 // pred_fallthru
        _
    $region56: #{discriminator_forward.9} parent=5 // pred_fallthru
      _
  $region6: #{discriminator_forward.9} parent=0 // loop_footer
    %s15 = sadd.s32 1, %s11
  $region7: #{discriminator_forward.9} parent=0 // loop_footer_branch
    %10 = sbr.rel target = $region3
  $region8: #{discriminator_forward.9} parent=0 // loop_exit
    _

// kernel: discriminator_forward.11
$region0: #{discriminator_forward.11}
  #allocation0 [shape = 'u32[]', space=smem, size = 0x4, offset = 0x4, fixed_abs, tag = 'smem constant byte address 0x4 - core index']
  #allocation1 [shape = 'u32[72,128]{1,0:T(1,128)}', space=vmem, size = 0x9000, scoped, tag = 'internal scratch']
  %s0 = inlined_call_operand.vmem [shape: bf16[512,128], index: 0, kind: input, shape index: {}]
  %s1 = inlined_call_operand.vmem [shape: bf16[128,128], index: 1, kind: input, shape index: {}]
  %s2 = inlined_call_operand.vmem [shape: bf16[512,128], index: 2, kind: output, shape index: {0}]
  %s3 = inlined_call_operand.vmem [shape: f32[1,128], index: 3, kind: output, shape index: {1}]
  %s4 = inlined_call_operand.vmem [shape: f32[1,128], index: 4, kind: output, shape index: {2}]
  %5 = xla_tuple %s2, %s3, %s4
  %s6 = sld [smem:[#allocation0]]
  $region38: #{discriminator_forward.11} parent=0
    _
  %s8 = ssub.s32 1, %s6
  %s9 = scalar_select 0, %s8, %s6
  // Predicated region
  $region2: #{discriminator_forward.11} parent=0 // pred_check
    _
  $region3: #{discriminator_forward.11} parent=0 // pred_check_branch
    %11 = sbr.rel (0) target = $region5
  $region4: #{discriminator_forward.11} parent=0 // pred_region
    _
  $region5: #{discriminator_forward.11} parent=0 // pred_fallthru
    _
  // Predicated region
  $region6: #{discriminator_forward.11} parent=0 // pred_check
    _
  $region7: #{discriminator_forward.11} parent=0 // pred_check_branch
    %13 = sbr.rel (0) target = $region9
  $region8: #{discriminator_forward.11} parent=0 // pred_region
    _
  $region9: #{discriminator_forward.11} parent=0 // pred_fallthru
    _
  %p14 = scmp.eq.s32.totalorder 0, 0
  // Predicated region
  $region10: #{discriminator_forward.11} parent=0 // pred_check
    %p15 = pneg %p14
  $region11: #{discriminator_forward.11} parent=0 // pred_check_branch
    %17 = sbr.rel (%p15) target = $region13
  $region12: #{discriminator_forward.11} parent=0 // pred_region
    %18 = vst [vmem:[%s3] sm:$0x1] 0.0
    %19 = vst [vmem:[%s4] sm:$0x1] 0.0
  $region13: #{discriminator_forward.11} parent=0 // pred_fallthru
    _
  %v20 = vld [vmem:[%s0] sm:$0xf]
  %v21 = vld [vmem:[%s0 + $0x4] sm:$0xf]
  %v22 = vld [vmem:[%s0 + $0x8] sm:$0xf]
  %v23 = vld [vmem:[%s0 + $0xc] sm:$0xf]
  %v24 = vld [vmem:[%s0 + $0x10] sm:$0xf]
  %v25 = vld [vmem:[%s0 + $0x14] sm:$0xf]
  %v26 = vld [vmem:[%s0 + $0x18] sm:$0xf]
  %v27 = vld [vmem:[%s0 + $0x1c] sm:$0xf]
  %v28 = vld [vmem:[%s0 + $0x20] sm:$0xf]
  %v29 = vld [vmem:[%s0 + $0x24] sm:$0xf]
  %v30 = vld [vmem:[%s0 + $0x28] sm:$0xf]
  %v31 = vld [vmem:[%s0 + $0x2c] sm:$0xf]
  %v32 = vld [vmem:[%s0 + $0x30] sm:$0xf]
  %v33 = vld [vmem:[%s0 + $0x34] sm:$0xf]
  %v34 = vld [vmem:[%s0 + $0x38] sm:$0xf]
  %v35 = vld [vmem:[%s0 + $0x3c] sm:$0xf]
  %v36 = vld [vmem:[%s0 + $0x40] sm:$0xf]
  %v37 = vld [vmem:[%s0 + $0x44] sm:$0xf]
  %v38 = vld [vmem:[%s0 + $0x48] sm:$0xf]
  %v39 = vld [vmem:[%s0 + $0x4c] sm:$0xf]
  %v40 = vld [vmem:[%s0 + $0x50] sm:$0xf]
  %v41 = vld [vmem:[%s0 + $0x54] sm:$0xf]
  %v42 = vld [vmem:[%s0 + $0x58] sm:$0xf]
  %v43 = vld [vmem:[%s0 + $0x5c] sm:$0xf]
  %v44 = vld [vmem:[%s0 + $0x60] sm:$0xf]
  %v45 = vld [vmem:[%s0 + $0x64] sm:$0xf]
  %v46 = vld [vmem:[%s0 + $0x68] sm:$0xf]
  %v47 = vld [vmem:[%s0 + $0x6c] sm:$0xf]
  %v48 = vld [vmem:[%s0 + $0x70] sm:$0xf]
  %v49 = vld [vmem:[%s0 + $0x74] sm:$0xf]
  %v50 = vld [vmem:[%s0 + $0x78] sm:$0xf]
  %v51 = vld [vmem:[%s0 + $0x7c] sm:$0xf]
  %v52 = vld [vmem:[%s0 + $0x80] sm:$0xf]
  %v53 = vld [vmem:[%s0 + $0x84] sm:$0xf]
  %v54 = vld [vmem:[%s0 + $0x88] sm:$0xf]
  %v55 = vld [vmem:[%s0 + $0x8c] sm:$0xf]
  %v56 = vld [vmem:[%s0 + $0x90] sm:$0xf]
  %v57 = vld [vmem:[%s0 + $0x94] sm:$0xf]
  %v58 = vld [vmem:[%s0 + $0x98] sm:$0xf]
  %v59 = vld [vmem:[%s0 + $0x9c] sm:$0xf]
  %v60 = vld [vmem:[%s0 + $0xa0] sm:$0xf]
  %v61 = vld [vmem:[%s0 + $0xa4] sm:$0xf]
  %v62 = vld [vmem:[%s0 + $0xa8] sm:$0xf]
  %v63 = vld [vmem:[%s0 + $0xac] sm:$0xf]
  %v64 = vld [vmem:[%s0 + $0xb0] sm:$0xf]
  %v65 = vld [vmem:[%s0 + $0xb4] sm:$0xf]
  %v66 = vld [vmem:[%s0 + $0xb8] sm:$0xf]
  %v67 = vld [vmem:[%s0 + $0xbc] sm:$0xf]
  %v68 = vld [vmem:[%s0 + $0xc0] sm:$0xf]
  %v69 = vld [vmem:[%s0 + $0xc4] sm:$0xf]
  %v70 = vld [vmem:[%s0 + $0xc8] sm:$0xf]
  %v71 = vld [vmem:[%s0 + $0xcc] sm:$0xf]
  %v72 = vld [vmem:[%s0 + $0xd0] sm:$0xf]
  %v73 = vld [vmem:[%s0 + $0xd4] sm:$0xf]
  %v74 = vld [vmem:[%s0 + $0xd8] sm:$0xf]
  %v75 = vld [vmem:[%s0 + $0xdc] sm:$0xf]
  %v76 = vld [vmem:[%s0 + $0xe0] sm:$0xf]
  %v77 = vld [vmem:[%s0 + $0xe4] sm:$0xf]
  %v78 = vld [vmem:[%s0 + $0xe8] sm:$0xf]
  %v79 = vld [vmem:[%s0 + $0xec] sm:$0xf]
  %v80 = vld [vmem:[%s0 + $0xf0] sm:$0xf]
  %v81 = vld [vmem:[%s0 + $0xf4] sm:$0xf]
  %v82 = vld [vmem:[%s0 + $0xf8] sm:$0xf]
  %v83 = vld [vmem:[%s0 + $0xfc] sm:$0xf]
  %v84 = vld [vmem:[%s1] sm:$0xf]
  %v85 = vld [vmem:[%s1 + $0x4] sm:$0xf]
  %v86 = vld [vmem:[%s1 + $0x8] sm:$0xf]
  %v87 = vld [vmem:[%s1 + $0xc] sm:$0xf]
  %v88 = vld [vmem:[%s1 + $0x10] sm:$0xf]
  %v89 = vld [vmem:[%s1 + $0x14] sm:$0xf]
  %v90 = vld [vmem:[%s1 + $0x18] sm:$0xf]
  %v91 = vld [vmem:[%s1 + $0x1c] sm:$0xf]
  %v92 = vld [vmem:[%s1 + $0x20] sm:$0xf]
  %v93 = vld [vmem:[%s1 + $0x24] sm:$0xf]
  %v94 = vld [vmem:[%s1 + $0x28] sm:$0xf]
  %v95 = vld [vmem:[%s1 + $0x2c] sm:$0xf]
  %v96 = vld [vmem:[%s1 + $0x30] sm:$0xf]
  %v97 = vld [vmem:[%s1 + $0x34] sm:$0xf]
  %v98 = vld [vmem:[%s1 + $0x38] sm:$0xf]
  %v99 = vld [vmem:[%s1 + $0x3c] sm:$0xf]
  %v164 = vunpack.c.l.b16 %v20
  %v165 = vunpack.c.l.b16 %v21
  %v166 = vunpack.c.l.b16 %v22
  %v167 = vunpack.c.l.b16 %v23
  %v168 = vunpack.c.l.b16 %v24
  %v169 = vunpack.c.l.b16 %v25
  %v170 = vunpack.c.l.b16 %v26
  %v171 = vunpack.c.l.b16 %v27
  %v172 = vunpack.c.l.b16 %v28
  %v173 = vunpack.c.l.b16 %v29
  %v174 = vunpack.c.l.b16 %v30
  %v175 = vunpack.c.l.b16 %v31
  %v176 = vunpack.c.l.b16 %v32
  %v177 = vunpack.c.l.b16 %v33
  %v178 = vunpack.c.l.b16 %v34
  %v179 = vunpack.c.l.b16 %v35
  %v180 = vunpack.c.l.b16 %v36
  %v181 = vunpack.c.l.b16 %v37
  %v182 = vunpack.c.l.b16 %v38
  %v183 = vunpack.c.l.b16 %v39
  %v184 = vunpack.c.l.b16 %v40
  %v185 = vunpack.c.l.b16 %v41
  %v186 = vunpack.c.l.b16 %v42
  %v187 = vunpack.c.l.b16 %v43
  %v188 = vunpack.c.l.b16 %v44
  %v189 = vunpack.c.l.b16 %v45
  %v190 = vunpack.c.l.b16 %v46
  %v191 = vunpack.c.l.b16 %v47
  %v192 = vunpack.c.l.b16 %v48
  %v193 = vunpack.c.l.b16 %v49
  %v194 = vunpack.c.l.b16 %v50
  %v195 = vunpack.c.l.b16 %v51
  %v196 = vunpack.c.l.b16 %v52
  %v197 = vunpack.c.l.b16 %v53
  %v198 = vunpack.c.l.b16 %v54
  %v199 = vunpack.c.l.b16 %v55
  %v200 = vunpack.c.l.b16 %v56
  %v201 = vunpack.c.l.b16 %v57
  %v202 = vunpack.c.l.b16 %v58
  %v203 = vunpack.c.l.b16 %v59
  %v204 = vunpack.c.l.b16 %v60
  %v205 = vunpack.c.l.b16 %v61
  %v206 = vunpack.c.l.b16 %v62
  %v207 = vunpack.c.l.b16 %v63
  %v208 = vunpack.c.l.b16 %v64
  %v209 = vunpack.c.l.b16 %v65
  %v210 = vunpack.c.l.b16 %v66
  %v211 = vunpack.c.l.b16 %v67
  %v212 = vunpack.c.l.b16 %v68
  %v213 = vunpack.c.l.b16 %v69
  %v214 = vunpack.c.l.b16 %v70
  %v215 = vunpack.c.l.b16 %v71
  %v216 = vunpack.c.l.b16 %v72
  %v217 = vunpack.c.l.b16 %v73
  %v218 = vunpack.c.l.b16 %v74
  %v219 = vunpack.c.l.b16 %v75
  %v220 = vunpack.c.l.b16 %v76
  %v221 = vunpack.c.l.b16 %v77
  %v222 = vunpack.c.l.b16 %v78
  %v223 = vunpack.c.l.b16 %v79
  %v224 = vunpack.c.l.b16 %v80
  %v225 = vunpack.c.l.b16 %v81
  %v226 = vunpack.c.l.b16 %v82
  %v227 = vunpack.c.l.b16 %v83
  %v228 = vpack.c.b16 %v165, %v164
  %v229 = vpack.c.b16 %v167, %v166
  %v230 = vpack.c.b16 %v169, %v168
  %v231 = vpack.c.b16 %v171, %v170
  %v232 = vpack.c.b16 %v173, %v172
  %v233 = vpack.c.b16 %v175, %v174
  %v234 = vpack.c.b16 %v177, %v176
  %v235 = vpack.c.b16 %v179, %v178
  %v236 = vpack.c.b16 %v181, %v180
  %v237 = vpack.c.b16 %v183, %v182
  %v238 = vpack.c.b16 %v185, %v184
  %v239 = vpack.c.b16 %v187, %v186
  %v240 = vpack.c.b16 %v189, %v188
  %v241 = vpack.c.b16 %v191, %v190
  %v242 = vpack.c.b16 %v193, %v192
  %v243 = vpack.c.b16 %v195, %v194
  %v244 = vpack.c.b16 %v197, %v196
  %v245 = vpack.c.b16 %v199, %v198
  %v246 = vpack.c.b16 %v201, %v200
  %v247 = vpack.c.b16 %v203, %v202
  %v248 = vpack.c.b16 %v205, %v204
  %v249 = vpack.c.b16 %v207, %v206
  %v250 = vpack.c.b16 %v209, %v208
  %v251 = vpack.c.b16 %v211, %v210
  %v252 = vpack.c.b16 %v213, %v212
  %v253 = vpack.c.b16 %v215, %v214
  %v254 = vpack.c.b16 %v217, %v216
  %v255 = vpack.c.b16 %v219, %v218
  %v256 = vpack.c.b16 %v221, %v220
  %v257 = vpack.c.b16 %v223, %v222
  %v258 = vpack.c.b16 %v225, %v224
  %v259 = vpack.c.b16 %v227, %v226
  %v308 = vunpack.c.l.b16 %v84
  %v309 = vunpack.c.l.b16 %v85
  %v310 = vunpack.c.l.b16 %v86
  %v311 = vunpack.c.l.b16 %v87
  %v312 = vunpack.c.l.b16 %v88
  %v313 = vunpack.c.l.b16 %v89
  %v314 = vunpack.c.l.b16 %v90
  %v315 = vunpack.c.l.b16 %v91
  %v316 = vunpack.c.l.b16 %v92
  %v317 = vunpack.c.l.b16 %v93
  %v318 = vunpack.c.l.b16 %v94
  %v319 = vunpack.c.l.b16 %v95
  %v320 = vunpack.c.l.b16 %v96
  %v321 = vunpack.c.l.b16 %v97
  %v322 = vunpack.c.l.b16 %v98
  %v323 = vunpack.c.l.b16 %v99
  %v324 = vpack.c.b16 %v309, %v308
  %v325 = vpack.c.b16 %v311, %v310
  %v326 = vpack.c.b16 %v313, %v312
  %v327 = vpack.c.b16 %v315, %v314
  %v328 = vpack.c.b16 %v317, %v316
  %v329 = vpack.c.b16 %v319, %v318
  %v330 = vpack.c.b16 %v321, %v320
  %v331 = vpack.c.b16 %v323, %v322
  %340 = vmatpush.bf16.msra.mxu0 %v331
  %341 = vmatpush.bf16.msra.mxu0 %v330
  %342 = vmatpush.bf16.msra.mxu0 %v329
  %343 = vmatpush.bf16.msra.mxu0 %v328
  %344 = vmatpush.bf16.msra.mxu0 %v327
  %345 = vmatpush.bf16.msra.mxu0 %v326
  %346 = vmatpush.bf16.msra.mxu0 %v325
  %347 = vmatpush.bf16.msra.mxu0 %v324
  %348 = vmatmul.bf16.gmra.mxu0 %v228
  %v349 = vpop.f32.mrf.mxu0
  %v350 = vadd.f32 0.0, %v349
  %v351 = vpop.f32.mrf.mxu0
  %v352 = vadd.f32 0.0, %v351
  %353 = vmatmul.bf16.gmra.mxu0 %v229
  %v354 = vpop.f32.mrf.mxu0
  %v355 = vadd.f32 0.0, %v354
  %v356 = vpop.f32.mrf.mxu0
  %v357 = vadd.f32 0.0, %v356
  %358 = vmatmul.bf16.gmra.mxu0 %v230
  %v359 = vpop.f32.mrf.mxu0
  %v360 = vadd.f32 0.0, %v359
  %v361 = vpop.f32.mrf.mxu0
  %v362 = vadd.f32 0.0, %v361
  %363 = vmatmul.bf16.gmra.mxu0 %v231
  %v364 = vpop.f32.mrf.mxu0
  %v365 = vadd.f32 0.0, %v364
  %v366 = vpop.f32.mrf.mxu0
  %v367 = vadd.f32 0.0, %v366
  %368 = vmatmul.bf16.gmra.mxu0 %v232
  %v369 = vpop.f32.mrf.mxu0
  %v370 = vadd.f32 0.0, %v369
  %v371 = vpop.f32.mrf.mxu0
  %v372 = vadd.f32 0.0, %v371
  %373 = vmatmul.bf16.gmra.mxu0 %v233
  %v374 = vpop.f32.mrf.mxu0
  %v375 = vadd.f32 0.0, %v374
  %v376 = vpop.f32.mrf.mxu0
  %v377 = vadd.f32 0.0, %v376
  %378 = vmatmul.bf16.gmra.mxu0 %v234
  %v379 = vpop.f32.mrf.mxu0
  %v380 = vadd.f32 0.0, %v379
  %v381 = vpop.f32.mrf.mxu0
  %v382 = vadd.f32 0.0, %v381
  %383 = vmatmul.bf16.gmra.mxu0 %v235
  %v384 = vpop.f32.mrf.mxu0
  %v385 = vadd.f32 0.0, %v384
  %v386 = vpop.f32.mrf.mxu0
  %v387 = vadd.f32 0.0, %v386
  %388 = vmatmul.bf16.gmra.mxu0 %v236
  %v389 = vpop.f32.mrf.mxu0
  %v390 = vadd.f32 0.0, %v389
  %v391 = vpop.f32.mrf.mxu0
  %v392 = vadd.f32 0.0, %v391
  %393 = vmatmul.bf16.gmra.mxu0 %v237
  %v394 = vpop.f32.mrf.mxu0
  %v395 = vadd.f32 0.0, %v394
  %v396 = vpop.f32.mrf.mxu0
  %v397 = vadd.f32 0.0, %v396
  %398 = vmatmul.bf16.gmra.mxu0 %v238
  %v399 = vpop.f32.mrf.mxu0
  %v400 = vadd.f32 0.0, %v399
  %v401 = vpop.f32.mrf.mxu0
  %v402 = vadd.f32 0.0, %v401
  %403 = vmatmul.bf16.gmra.mxu0 %v239
  %v404 = vpop.f32.mrf.mxu0
  %v405 = vadd.f32 0.0, %v404
  %v406 = vpop.f32.mrf.mxu0
  %v407 = vadd.f32 0.0, %v406
  %408 = vmatmul.bf16.gmra.mxu0 %v240
  %v409 = vpop.f32.mrf.mxu0
  %v410 = vadd.f32 0.0, %v409
  %v411 = vpop.f32.mrf.mxu0
  %v412 = vadd.f32 0.0, %v411
  %413 = vmatmul.bf16.gmra.mxu0 %v241
  %v414 = vpop.f32.mrf.mxu0
  %v415 = vadd.f32 0.0, %v414
  %v416 = vpop.f32.mrf.mxu0
  %v417 = vadd.f32 0.0, %v416
  %418 = vmatmul.bf16.gmra.mxu0 %v242
  %v419 = vpop.f32.mrf.mxu0
  %v420 = vadd.f32 0.0, %v419
  %v421 = vpop.f32.mrf.mxu0
  %v422 = vadd.f32 0.0, %v421
  %423 = vmatmul.bf16.gmra.mxu0 %v243
  %v424 = vpop.f32.mrf.mxu0
  %v425 = vadd.f32 0.0, %v424
  %v426 = vpop.f32.mrf.mxu0
  %v427 = vadd.f32 0.0, %v426
  %428 = vmatmul.bf16.gmra.mxu0 %v244
  %v429 = vpop.f32.mrf.mxu0
  %v430 = vadd.f32 0.0, %v429
  %v431 = vpop.f32.mrf.mxu0
  %v432 = vadd.f32 0.0, %v431
  %433 = vmatmul.bf16.gmra.mxu0 %v245
  %v434 = vpop.f32.mrf.mxu0
  %v435 = vadd.f32 0.0, %v434
  %v436 = vpop.f32.mrf.mxu0
  %v437 = vadd.f32 0.0, %v436
  %438 = vmatmul.bf16.gmra.mxu0 %v246
  %v439 = vpop.f32.mrf.mxu0
  %v440 = vadd.f32 0.0, %v439
  %v441 = vpop.f32.mrf.mxu0
  %v442 = vadd.f32 0.0, %v441
  %443 = vmatmul.bf16.gmra.mxu0 %v247
  %v444 = vpop.f32.mrf.mxu0
  %v445 = vadd.f32 0.0, %v444
  %v446 = vpop.f32.mrf.mxu0
  %v447 = vadd.f32 0.0, %v446
  %448 = vmatmul.bf16.gmra.mxu0 %v248
  %v449 = vpop.f32.mrf.mxu0
  %v450 = vadd.f32 0.0, %v449
  %v451 = vpop.f32.mrf.mxu0
  %v452 = vadd.f32 0.0, %v451
  %453 = vmatmul.bf16.gmra.mxu0 %v249
  %v454 = vpop.f32.mrf.mxu0
  %v455 = vadd.f32 0.0, %v454
  %v456 = vpop.f32.mrf.mxu0
  %v457 = vadd.f32 0.0, %v456
  %458 = vmatmul.bf16.gmra.mxu0 %v250
  %v459 = vpop.f32.mrf.mxu0
  %v460 = vadd.f32 0.0, %v459
  %v461 = vpop.f32.mrf.mxu0
  %v462 = vadd.f32 0.0, %v461
  %463 = vmatmul.bf16.gmra.mxu0 %v251
  %v464 = vpop.f32.mrf.mxu0
  %v465 = vadd.f32 0.0, %v464
  %v466 = vpop.f32.mrf.mxu0
  %v467 = vadd.f32 0.0, %v466
  %468 = vmatmul.bf16.gmra.mxu0 %v252
  %v469 = vpop.f32.mrf.mxu0
  %v470 = vadd.f32 0.0, %v469
  %v471 = vpop.f32.mrf.mxu0
  %v472 = vadd.f32 0.0, %v471
  %473 = vmatmul.bf16.gmra.mxu0 %v253
  %v474 = vpop.f32.mrf.mxu0
  %v475 = vadd.f32 0.0, %v474
  %v476 = vpop.f32.mrf.mxu0
  %v477 = vadd.f32 0.0, %v476
  %478 = vmatmul.bf16.gmra.mxu0 %v254
  %v479 = vpop.f32.mrf.mxu0
  %v480 = vadd.f32 0.0, %v479
  %v481 = vpop.f32.mrf.mxu0
  %v482 = vadd.f32 0.0, %v481
  %483 = vmatmul.bf16.gmra.mxu0 %v255
  %v484 = vpop.f32.mrf.mxu0
  %v485 = vadd.f32 0.0, %v484
  %v486 = vpop.f32.mrf.mxu0
  %v487 = vadd.f32 0.0, %v486
  %488 = vmatmul.bf16.gmra.mxu0 %v256
  %v489 = vpop.f32.mrf.mxu0
  %v490 = vadd.f32 0.0, %v489
  %v491 = vpop.f32.mrf.mxu0
  %v492 = vadd.f32 0.0, %v491
  %493 = vmatmul.bf16.gmra.mxu0 %v257
  %v494 = vpop.f32.mrf.mxu0
  %v495 = vadd.f32 0.0, %v494
  %v496 = vpop.f32.mrf.mxu0
  %v497 = vadd.f32 0.0, %v496
  %498 = vmatmul.bf16.gmra.mxu0 %v258
  %v499 = vpop.f32.mrf.mxu0
  %v500 = vadd.f32 0.0, %v499
  %v501 = vpop.f32.mrf.mxu0
  %v502 = vadd.f32 0.0, %v501
  %503 = vmatmul.bf16.gmra.mxu0 %v259
  %v504 = vpop.f32.mrf.mxu0
  %v505 = vadd.f32 0.0, %v504
  %v506 = vpop.f32.mrf.mxu0
  %v507 = vadd.f32 0.0, %v506
  %508 = vdwg.mxu0
  %v509 = vpack.c.bf16 %v350, %v350
  %v510 = vpack.c.bf16 %v352, %v352
  %v511 = vpack.c.bf16 %v355, %v355
  %v512 = vpack.c.bf16 %v357, %v357
  %v513 = vpack.c.bf16 %v360, %v360
  %v514 = vpack.c.bf16 %v362, %v362
  %v515 = vpack.c.bf16 %v365, %v365
  %v516 = vpack.c.bf16 %v367, %v367
  %v517 = vpack.c.bf16 %v370, %v370
  %v518 = vpack.c.bf16 %v372, %v372
  %v519 = vpack.c.bf16 %v375, %v375
  %v520 = vpack.c.bf16 %v377, %v377
  %v521 = vpack.c.bf16 %v380, %v380
  %v522 = vpack.c.bf16 %v382, %v382
  %v523 = vpack.c.bf16 %v385, %v385
  %v524 = vpack.c.bf16 %v387, %v387
  %v525 = vpack.c.bf16 %v390, %v390
  %v526 = vpack.c.bf16 %v392, %v392
  %v527 = vpack.c.bf16 %v395, %v395
  %v528 = vpack.c.bf16 %v397, %v397
  %v529 = vpack.c.bf16 %v400, %v400
  %v530 = vpack.c.bf16 %v402, %v402
  %v531 = vpack.c.bf16 %v405, %v405
  %v532 = vpack.c.bf16 %v407, %v407
  %v533 = vpack.c.bf16 %v410, %v410
  %v534 = vpack.c.bf16 %v412, %v412
  %v535 = vpack.c.bf16 %v415, %v415
  %v536 = vpack.c.bf16 %v417, %v417
  %v537 = vpack.c.bf16 %v420, %v420
  %v538 = vpack.c.bf16 %v422, %v422
  %v539 = vpack.c.bf16 %v425, %v425
  %v540 = vpack.c.bf16 %v427, %v427
  %v541 = vpack.c.bf16 %v430, %v430
  %v542 = vpack.c.bf16 %v432, %v432
  %v543 = vpack.c.bf16 %v435, %v435
  %v544 = vpack.c.bf16 %v437, %v437
  %v545 = vpack.c.bf16 %v440, %v440
  %v546 = vpack.c.bf16 %v442, %v442
  %v547 = vpack.c.bf16 %v445, %v445
  %v548 = vpack.c.bf16 %v447, %v447
  %v549 = vpack.c.bf16 %v450, %v450
  %v550 = vpack.c.bf16 %v452, %v452
  %v551 = vpack.c.bf16 %v455, %v455
  %v552 = vpack.c.bf16 %v457, %v457
  %v553 = vpack.c.bf16 %v460, %v460
  %v554 = vpack.c.bf16 %v462, %v462
  %v555 = vpack.c.bf16 %v465, %v465
  %v556 = vpack.c.bf16 %v467, %v467
  %v557 = vpack.c.bf16 %v470, %v470
  %v558 = vpack.c.bf16 %v472, %v472
  %v559 = vpack.c.bf16 %v475, %v475
  %v560 = vpack.c.bf16 %v477, %v477
  %v561 = vpack.c.bf16 %v480, %v480
  %v562 = vpack.c.bf16 %v482, %v482
  %v563 = vpack.c.bf16 %v485, %v485
  %v564 = vpack.c.bf16 %v487, %v487
  %v565 = vpack.c.bf16 %v490, %v490
  %v566 = vpack.c.bf16 %v492, %v492
  %v567 = vpack.c.bf16 %v495, %v495
  %v568 = vpack.c.bf16 %v497, %v497
  %v569 = vpack.c.bf16 %v500, %v500
  %v570 = vpack.c.bf16 %v502, %v502
  %v571 = vpack.c.bf16 %v505, %v505
  %v572 = vpack.c.bf16 %v507, %v507
  %573 = vst [vmem:[%s2] sm:$0xf] %v509
  %574 = vst [vmem:[%s2 + $0x4] sm:$0xf] %v510
  %575 = vst [vmem:[%s2 + $0x8] sm:$0xf] %v511
  %576 = vst [vmem:[%s2 + $0xc] sm:$0xf] %v512
  %577 = vst [vmem:[%s2 + $0x10] sm:$0xf] %v513
  %578 = vst [vmem:[%s2 + $0x14] sm:$0xf] %v514
  %579 = vst [vmem:[%s2 + $0x18] sm:$0xf] %v515
  %580 = vst [vmem:[%s2 + $0x1c] sm:$0xf] %v516
  %581 = vst [vmem:[%s2 + $0x20] sm:$0xf] %v517
  %582 = vst [vmem:[%s2 + $0x24] sm:$0xf] %v518
  %583 = vst [vmem:[%s2 + $0x28] sm:$0xf] %v519
  %584 = vst [vmem:[%s2 + $0x2c] sm:$0xf] %v520
  %585 = vst [vmem:[%s2 + $0x30] sm:$0xf] %v521
  %586 = vst [vmem:[%s2 + $0x34] sm:$0xf] %v522
  %587 = vst [vmem:[%s2 + $0x38] sm:$0xf] %v523
  %588 = vst [vmem:[%s2 + $0x3c] sm:$0xf] %v524
  %589 = vst [vmem:[%s2 + $0x40] sm:$0xf] %v525
  %590 = vst [vmem:[%s2 + $0x44] sm:$0xf] %v526
  %591 = vst [vmem:[%s2 + $0x48] sm:$0xf] %v527
  %592 = vst [vmem:[%s2 + $0x4c] sm:$0xf] %v528
  %593 = vst [vmem:[%s2 + $0x50] sm:$0xf] %v529
  %594 = vst [vmem:[%s2 + $0x54] sm:$0xf] %v530
  %595 = vst [vmem:[%s2 + $0x58] sm:$0xf] %v531
  %596 = vst [vmem:[%s2 + $0x5c] sm:$0xf] %v532
  %597 = vst [vmem:[%s2 + $0x60] sm:$0xf] %v533
  %598 = vst [vmem:[%s2 + $0x64] sm:$0xf] %v534
  %599 = vst [vmem:[%s2 + $0x68] sm:$0xf] %v535
  %600 = vst [vmem:[%s2 + $0x6c] sm:$0xf] %v536
  %601 = vst [vmem:[%s2 + $0x70] sm:$0xf] %v537
  %602 = vst [vmem:[%s2 + $0x74] sm:$0xf] %v538
  %603 = vst [vmem:[%s2 + $0x78] sm:$0xf] %v539
  %604 = vst [vmem:[%s2 + $0x7c] sm:$0xf] %v540
  %605 = vst [vmem:[%s2 + $0x80] sm:$0xf] %v541
  %606 = vst [vmem:[%s2 + $0x84] sm:$0xf] %v542
  %607 = vst [vmem:[%s2 + $0x88] sm:$0xf] %v543
  %608 = vst [vmem:[%s2 + $0x8c] sm:$0xf] %v544
  %609 = vst [vmem:[%s2 + $0x90] sm:$0xf] %v545
  %610 = vst [vmem:[%s2 + $0x94] sm:$0xf] %v546
  %611 = vst [vmem:[%s2 + $0x98] sm:$0xf] %v547
  %612 = vst [vmem:[%s2 + $0x9c] sm:$0xf] %v548
  %613 = vst [vmem:[%s2 + $0xa0] sm:$0xf] %v549
  %614 = vst [vmem:[%s2 + $0xa4] sm:$0xf] %v550
  %615 = vst [vmem:[%s2 + $0xa8] sm:$0xf] %v551
  %616 = vst [vmem:[%s2 + $0xac] sm:$0xf] %v552
  %617 = vst [vmem:[%s2 + $0xb0] sm:$0xf] %v553
  %618 = vst [vmem:[%s2 + $0xb4] sm:$0xf] %v554
  %619 = vst [vmem:[%s2 + $0xb8] sm:$0xf] %v555
  %620 = vst [vmem:[%s2 + $0xbc] sm:$0xf] %v556
  %621 = vst [vmem:[%s2 + $0xc0] sm:$0xf] %v557
  %622 = vst [vmem:[%s2 + $0xc4] sm:$0xf] %v558
  %623 = vst [vmem:[%s2 + $0xc8] sm:$0xf] %v559
  %624 = vst [vmem:[%s2 + $0xcc] sm:$0xf] %v560
  %625 = vst [vmem:[%s2 + $0xd0] sm:$0xf] %v561
  %626 = vst [vmem:[%s2 + $0xd4] sm:$0xf] %v562
  %627 = vst [vmem:[%s2 + $0xd8] sm:$0xf] %v563
  %628 = vst [vmem:[%s2 + $0xdc] sm:$0xf] %v564
  %629 = vst [vmem:[%s2 + $0xe0] sm:$0xf] %v565
  %630 = vst [vmem:[%s2 + $0xe4] sm:$0xf] %v566
  %631 = vst [vmem:[%s2 + $0xe8] sm:$0xf] %v567
  %632 = vst [vmem:[%s2 + $0xec] sm:$0xf] %v568
  %633 = vst [vmem:[%s2 + $0xf0] sm:$0xf] %v569
  %634 = vst [vmem:[%s2 + $0xf4] sm:$0xf] %v570
  %635 = vst [vmem:[%s2 + $0xf8] sm:$0xf] %v571
  %636 = vst [vmem:[%s2 + $0xfc] sm:$0xf] %v572
  %v637 = vld [vmem:[%s3] sm:$0x1]
  %v638 = vadd.f32 %v350, %v352
  %v639 = vadd.f32 %v638, %v355
  %v640 = vadd.f32 %v639, %v357
  %v641 = vadd.f32 %v640, %v360
  %v642 = vadd.f32 %v641, %v362
  %v643 = vadd.f32 %v642, %v365
  %v644 = vadd.f32 %v643, %v367
  %v645 = vadd.f32 %v644, %v370
  %v646 = vadd.f32 %v645, %v372
  %v647 = vadd.f32 %v646, %v375
  %v648 = vadd.f32 %v647, %v377
  %v649 = vadd.f32 %v648, %v380
  %v650 = vadd.f32 %v649, %v382
  %v651 = vadd.f32 %v650, %v385
  %v652 = vadd.f32 %v651, %v387
  %v653 = vadd.f32 %v652, %v390
  %v654 = vadd.f32 %v653, %v392
  %v655 = vadd.f32 %v654, %v395
  %v656 = vadd.f32 %v655, %v397
  %v657 = vadd.f32 %v656, %v400
  %v658 = vadd.f32 %v657, %v402
  %v659 = vadd.f32 %v658, %v405
  %v660 = vadd.f32 %v659, %v407
  %v661 = vadd.f32 %v660, %v410
  %v662 = vadd.f32 %v661, %v412
  %v663 = vadd.f32 %v662, %v415
  %v664 = vadd.f32 %v663, %v417
  %v665 = vadd.f32 %v664, %v420
  %v666 = vadd.f32 %v665, %v422
  %v667 = vadd.f32 %v666, %v425
  %v668 = vadd.f32 %v667, %v427
  %v669 = vadd.f32 %v668, %v430
  %v670 = vadd.f32 %v669, %v432
  %v671 = vadd.f32 %v670, %v435
  %v672 = vadd.f32 %v671, %v437
  %v673 = vadd.f32 %v672, %v440
  %v674 = vadd.f32 %v673, %v442
  %v675 = vadd.f32 %v674, %v445
  %v676 = vadd.f32 %v675, %v447
  %v677 = vadd.f32 %v676, %v450
  %v678 = vadd.f32 %v677, %v452
  %v679 = vadd.f32 %v678, %v455
  %v680 = vadd.f32 %v679, %v457
  %v681 = vadd.f32 %v680, %v460
  %v682 = vadd.f32 %v681, %v462
  %v683 = vadd.f32 %v682, %v465
  %v684 = vadd.f32 %v683, %v467
  %v685 = vadd.f32 %v684, %v470
  %v686 = vadd.f32 %v685, %v472
  %v687 = vadd.f32 %v686, %v475
  %v688 = vadd.f32 %v687, %v477
  %v689 = vadd.f32 %v688, %v480
  %v690 = vadd.f32 %v689, %v482
  %v691 = vadd.f32 %v690, %v485
  %v692 = vadd.f32 %v691, %v487
  %v693 = vadd.f32 %v692, %v490
  %v694 = vadd.f32 %v693, %v492
  %v695 = vadd.f32 %v694, %v495
  %v696 = vadd.f32 %v695, %v497
  %v697 = vadd.f32 %v696, %v500
  %v698 = vadd.f32 %v697, %v502
  %v699 = vadd.f32 %v698, %v505
  %v700 = vadd.f32 %v699, %v507
  %v701 = vrot.slane %v700, 4
  %v702 = vadd.f32 %v700, %v701
  %v703 = vrot.slane %v702, 2
  %v704 = vadd.f32 %v702, %v703
  %v705 = vrot.slane %v704, 1
  %v706 = vadd.f32 %v704, %v705
  %v707 = vadd.f32 %v637, %v706
  %708 = vst [vmem:[%s3] sm:$0x1] %v707
  %v709 = vld [vmem:[%s4] sm:$0x1]
  %v710 = vmul.f32 %v350, %v350
  %v711 = vmul.f32 %v352, %v352
  %v712 = vmul.f32 %v355, %v355
  %v713 = vmul.f32 %v357, %v357
  %v714 = vmul.f32 %v360, %v360
  %v715 = vmul.f32 %v362, %v362
  %v716 = vmul.f32 %v365, %v365
  %v717 = vmul.f32 %v367, %v367
  %v718 = vmul.f32 %v370, %v370
  %v719 = vmul.f32 %v372, %v372
  %v720 = vmul.f32 %v375, %v375
  %v721 = vmul.f32 %v377, %v377
  %v722 = vmul.f32 %v380, %v380
  %v723 = vmul.f32 %v382, %v382
  %v724 = vmul.f32 %v385, %v385
  %v725 = vmul.f32 %v387, %v387
  %v726 = vmul.f32 %v390, %v390
  %v727 = vmul.f32 %v392, %v392
  %v728 = vmul.f32 %v395, %v395
  %v729 = vmul.f32 %v397, %v397
  %v730 = vmul.f32 %v400, %v400
  %v731 = vmul.f32 %v402, %v402
  %v732 = vmul.f32 %v405, %v405
  %v733 = vmul.f32 %v407, %v407
  %v734 = vmul.f32 %v410, %v410
  %v735 = vmul.f32 %v412, %v412
  %v736 = vmul.f32 %v415, %v415
  %v737 = vmul.f32 %v417, %v417
  %v738 = vmul.f32 %v420, %v420
  %v739 = vmul.f32 %v422, %v422
  %v740 = vmul.f32 %v425, %v425
  %v741 = vmul.f32 %v427, %v427
  %v742 = vmul.f32 %v430, %v430
  %v743 = vmul.f32 %v432, %v432
  %v744 = vmul.f32 %v435, %v435
  %v745 = vmul.f32 %v437, %v437
  %v746 = vmul.f32 %v440, %v440
  %v747 = vmul.f32 %v442, %v442
  %v748 = vmul.f32 %v445, %v445
  %v749 = vmul.f32 %v447, %v447
  %v750 = vmul.f32 %v450, %v450
  %v751 = vmul.f32 %v452, %v452
  %v752 = vmul.f32 %v455, %v455
  %v753 = vmul.f32 %v457, %v457
  %v754 = vmul.f32 %v460, %v460
  %v755 = vmul.f32 %v462, %v462
  %v756 = vmul.f32 %v465, %v465
  %v757 = vmul.f32 %v467, %v467
  %v758 = vmul.f32 %v470, %v470
  %v759 = vmul.f32 %v472, %v472
  %v760 = vmul.f32 %v475, %v475
  %v761 = vmul.f32 %v477, %v477
  %v762 = vmul.f32 %v480, %v480
  %v763 = vmul.f32 %v482, %v482
  %v764 = vmul.f32 %v485, %v485
  %v765 = vmul.f32 %v487, %v487
  %v766 = vmul.f32 %v490, %v490
  %v767 = vmul.f32 %v492, %v492
  %v768 = vmul.f32 %v495, %v495
  %v769 = vmul.f32 %v497, %v497
  %v770 = vmul.f32 %v500, %v500
  %v771 = vmul.f32 %v502, %v502
  %v772 = vmul.f32 %v505, %v505
  %v773 = vmul.f32 %v507, %v507
  %v774 = vadd.f32 %v710, %v711
  %v775 = vadd.f32 %v774, %v712
  %v776 = vadd.f32 %v775, %v713
  %v777 = vadd.f32 %v776, %v714
  %v778 = vadd.f32 %v777, %v715
  %v779 = vadd.f32 %v778, %v716
  %v780 = vadd.f32 %v779, %v717
  %v781 = vadd.f32 %v780, %v718
  %v782 = vadd.f32 %v781, %v719
  %v783 = vadd.f32 %v782, %v720
  %v784 = vadd.f32 %v783, %v721
  %v785 = vadd.f32 %v784, %v722
  %v786 = vadd.f32 %v785, %v723
  %v787 = vadd.f32 %v786, %v724
  %v788 = vadd.f32 %v787, %v725
  %v789 = vadd.f32 %v788, %v726
  %v790 = vadd.f32 %v789, %v727
  %v791 = vadd.f32 %v790, %v728
  %v792 = vadd.f32 %v791, %v729
  %v793 = vadd.f32 %v792, %v730
  %v794 = vadd.f32 %v793, %v731
  %v795 = vadd.f32 %v794, %v732
  %v796 = vadd.f32 %v795, %v733
  %v797 = vadd.f32 %v796, %v734
  %v798 = vadd.f32 %v797, %v735
  %v799 = vadd.f32 %v798, %v736
  %v800 = vadd.f32 %v799, %v737
  %v801 = vadd.f32 %v800, %v738
  %v802 = vadd.f32 %v801, %v739
  %v803 = vadd.f32 %v802, %v740
  %v804 = vadd.f32 %v803, %v741
  %v805 = vadd.f32 %v804, %v742
  %v806 = vadd.f32 %v805, %v743
  %v807 = vadd.f32 %v806, %v744
  %v808 = vadd.f32 %v807, %v745
  %v809 = vadd.f32 %v808, %v746
  %v810 = vadd.f32 %v809, %v747
  %v811 = vadd.f32 %v810, %v748
  %v812 = vadd.f32 %v811, %v749
  %v813 = vadd.f32 %v812, %v750
  %v814 = vadd.f32 %v813, %v751
  %v815 = vadd.f32 %v814, %v752
  %v816 = vadd.f32 %v815, %v753
  %v817 = vadd.f32 %v816, %v754
  %v818 = vadd.f32 %v817, %v755
  %v819 = vadd.f32 %v818, %v756
  %v820 = vadd.f32 %v819, %v757
  %v821 = vadd.f32 %v820, %v758
  %v822 = vadd.f32 %v821, %v759
  %v823 = vadd.f32 %v822, %v760
  %v824 = vadd.f32 %v823, %v761
  %v825 = vadd.f32 %v824, %v762
  %v826 = vadd.f32 %v825, %v763
  %v827 = vadd.f32 %v826, %v764
  %v828 = vadd.f32 %v827, %v765
  %v829 = vadd.f32 %v828, %v766
  %v830 = vadd.f32 %v829, %v767
  %v831 = vadd.f32 %v830, %v768
  %v832 = vadd.f32 %v831, %v769
  %v833 = vadd.f32 %v832, %v770
  %v834 = vadd.f32 %v833, %v771
  %v835 = vadd.f32 %v834, %v772
  %v836 = vadd.f32 %v835, %v773
  %v837 = vrot.slane %v836, 4
  %v838 = vadd.f32 %v836, %v837
  %v839 = vrot.slane %v838, 2
  %v840 = vadd.f32 %v838, %v839
  %v841 = vrot.slane %v840, 1
  %v842 = vadd.f32 %v840, %v841
  %v843 = vadd.f32 %v709, %v842
  %844 = vst [vmem:[%s4] sm:$0x1] %v843
  // Predicated region
  $region14: #{discriminator_forward.11} parent=0 // pred_check
    _
  $region15: #{discriminator_forward.11} parent=0 // pred_check_branch
    %846 = sbr.rel (0) target = $region17
  $region16: #{discriminator_forward.11} parent=0 // pred_region
    _
  $region17: #{discriminator_forward.11} parent=0 // pred_fallthru
    _
  // Predicated region
  $region18: #{discriminator_forward.11} parent=0 // pred_check
    _
  $region19: #{discriminator_forward.11} parent=0 // pred_check_branch
    %848 = sbr.rel (0) target = $region21
  $region20: #{discriminator_forward.11} parent=0 // pred_region
    _
  $region21: #{discriminator_forward.11} parent=0 // pred_fallthru
    _
  // Predicated region
  $region22: #{discriminator_forward.11} parent=0 // pred_check
    _
  $region23: #{discriminator_forward.11} parent=0 // pred_check_branch
    %850 = sbr.rel (0) target = $region25
  $region24: #{discriminator_forward.11} parent=0 // pred_region
    _
  $region25: #{discriminator_forward.11} parent=0 // pred_fallthru
    _
  // Predicated region
  $region26: #{discriminator_forward.11} parent=0 // pred_check
    _
  $region27: #{discriminator_forward.11} parent=0 // pred_check_branch
    %852 = sbr.rel (0) target = $region29
  $region28: #{discriminator_forward.11} parent=0 // pred_region
    _
  $region29: #{discriminator_forward.11} parent=0 // pred_fallthru
    _
  // Predicated region
  $region30: #{discriminator_forward.11} parent=0 // pred_check
    _
  $region31: #{discriminator_forward.11} parent=0 // pred_check_branch
    %854 = sbr.rel (0) target = $region33
  $region32: #{discriminator_forward.11} parent=0 // pred_region
    _
  $region33: #{discriminator_forward.11} parent=0 // pred_fallthru
    _
  // Predicated region
  $region34: #{discriminator_forward.11} parent=0 // pred_check
    _
  $region35: #{discriminator_forward.11} parent=0 // pred_check_branch
    %856 = sbr.rel (0) target = $region37
  $region36: #{discriminator_forward.11} parent=0 // pred_region
    _
  $region37: #{discriminator_forward.11} parent=0 // pred_fallthru
    _

// kernel: discriminator_forward.12
$region0: #{discriminator_forward.12}
  #allocation0 [shape = 'u32[]', space=smem, size = 0x4, offset = 0x4, fixed_abs, tag = 'smem constant byte address 0x4 - core index']
  #allocation1 [shape = 'u32[72,128]{1,0:T(1,128)}', space=vmem, size = 0x9000, scoped, tag = 'internal scratch']
  %s0 = inlined_call_operand.vmem [shape: bf16[512,128], index: 0, kind: input, shape index: {}]
  %s1 = inlined_call_operand.vmem [shape: f32[1,128], index: 1, kind: input, shape index: {}]
  %s2 = inlined_call_operand.vmem [shape: f32[1,128], index: 2, kind: input, shape index: {}]
  %s3 = inlined_call_operand.vmem [shape: f32[1,128], index: 3, kind: input, shape index: {}]
  %s4 = inlined_call_operand.vmem [shape: f32[1,128], index: 4, kind: input, shape index: {}]
  %s5 = inlined_call_operand.vmem [shape: bf16[512,128], index: 5, kind: output, shape index: {}]
  %s6 = sld [smem:[#allocation0]]
  $region30: #{discriminator_forward.12} parent=0
    _
  %s8 = ssub.s32 1, %s6
  %s9 = scalar_select 0, %s8, %s6
  // Predicated region
  $region2: #{discriminator_forward.12} parent=0 // pred_check
    _
  $region3: #{discriminator_forward.12} parent=0 // pred_check_branch
    %11 = sbr.rel (0) target = $region5
  $region4: #{discriminator_forward.12} parent=0 // pred_region
    _
  $region5: #{discriminator_forward.12} parent=0 // pred_fallthru
    _
  // Predicated region
  $region6: #{discriminator_forward.12} parent=0 // pred_check
    _
  $region7: #{discriminator_forward.12} parent=0 // pred_check_branch
    %13 = sbr.rel (0) target = $region9
  $region8: #{discriminator_forward.12} parent=0 // pred_region
    _
  $region9: #{discriminator_forward.12} parent=0 // pred_fallthru
    _
  // Predicated region
  $region10: #{discriminator_forward.12} parent=0 // pred_check
    _
  $region11: #{discriminator_forward.12} parent=0 // pred_check_branch
    %15 = sbr.rel (0) target = $region13
  $region12: #{discriminator_forward.12} parent=0 // pred_region
    _
  $region13: #{discriminator_forward.12} parent=0 // pred_fallthru
    _
  // Predicated region
  $region14: #{discriminator_forward.12} parent=0 // pred_check
    _
  $region15: #{discriminator_forward.12} parent=0 // pred_check_branch
    %17 = sbr.rel (0) target = $region17
  $region16: #{discriminator_forward.12} parent=0 // pred_region
    _
  $region17: #{discriminator_forward.12} parent=0 // pred_fallthru
    _
  // Predicated region
  $region18: #{discriminator_forward.12} parent=0 // pred_check
    _
  $region19: #{discriminator_forward.12} parent=0 // pred_check_branch
    %19 = sbr.rel (0) target = $region21
  $region20: #{discriminator_forward.12} parent=0 // pred_region
    _
  $region21: #{discriminator_forward.12} parent=0 // pred_fallthru
    _
  %v20 = vld [vmem:[%s1] sm:$0x1]
  %v21 = vmul.f32 %v20, 0.001953125
  %v22 = vld [vmem:[%s2] sm:$0x1]
  %v23 = vmul.f32 %v22, 0.001953125
  %v24 = vmul.f32 %v21, %v21
  %v25 = vsub.f32 %v23, %v24
  %v26 = vmax.f32 %v25, 0.0
  %v27 = vld [vmem:[%s3] sm:$0x1]
  %v28 = vadd.f32 %v26, 1e-05
  %v29 = vrsqrt.pop %v28
  %v30 = vmul.f32 %v29, %v28
  %v31 = vmul.f32 %v30, %v29
  %v32 = vmul.f32 0.5, %v31
  %v33 = vsub.f32 1.5, %v32
  %v34 = vmul.f32 %v29, %v33
  %vm35 = vweird.f32 %v28
  %vm36 = vweird.f32 %v29
  %vm37 = vmor %vm35, %vm36
  %v38 = vsel %vm37, %v29, %v34
  %v39 = vmul.f32 %v27, %v38
  %v40 = vld [vmem:[%s4] sm:$0x1]
  %v41 = vmul.f32 %v21, %v39
  %v42 = vsub.f32 %v40, %v41
  %v43 = vld [vmem:[%s0] sm:$0xf]
  %v44 = vld [vmem:[%s0 + $0x4] sm:$0xf]
  %v45 = vld [vmem:[%s0 + $0x8] sm:$0xf]
  %v46 = vld [vmem:[%s0 + $0xc] sm:$0xf]
  %v47 = vld [vmem:[%s0 + $0x10] sm:$0xf]
  %v48 = vld [vmem:[%s0 + $0x14] sm:$0xf]
  %v49 = vld [vmem:[%s0 + $0x18] sm:$0xf]
  %v50 = vld [vmem:[%s0 + $0x1c] sm:$0xf]
  %v51 = vld [vmem:[%s0 + $0x20] sm:$0xf]
  %v52 = vld [vmem:[%s0 + $0x24] sm:$0xf]
  %v53 = vld [vmem:[%s0 + $0x28] sm:$0xf]
  %v54 = vld [vmem:[%s0 + $0x2c] sm:$0xf]
  %v55 = vld [vmem:[%s0 + $0x30] sm:$0xf]
  %v56 = vld [vmem:[%s0 + $0x34] sm:$0xf]
  %v57 = vld [vmem:[%s0 + $0x38] sm:$0xf]
  %v58 = vld [vmem:[%s0 + $0x3c] sm:$0xf]
  %v59 = vld [vmem:[%s0 + $0x40] sm:$0xf]
  %v60 = vld [vmem:[%s0 + $0x44] sm:$0xf]
  %v61 = vld [vmem:[%s0 + $0x48] sm:$0xf]
  %v62 = vld [vmem:[%s0 + $0x4c] sm:$0xf]
  %v63 = vld [vmem:[%s0 + $0x50] sm:$0xf]
  %v64 = vld [vmem:[%s0 + $0x54] sm:$0xf]
  %v65 = vld [vmem:[%s0 + $0x58] sm:$0xf]
  %v66 = vld [vmem:[%s0 + $0x5c] sm:$0xf]
  %v67 = vld [vmem:[%s0 + $0x60] sm:$0xf]
  %v68 = vld [vmem:[%s0 + $0x64] sm:$0xf]
  %v69 = vld [vmem:[%s0 + $0x68] sm:$0xf]
  %v70 = vld [vmem:[%s0 + $0x6c] sm:$0xf]
  %v71 = vld [vmem:[%s0 + $0x70] sm:$0xf]
  %v72 = vld [vmem:[%s0 + $0x74] sm:$0xf]
  %v73 = vld [vmem:[%s0 + $0x78] sm:$0xf]
  %v74 = vld [vmem:[%s0 + $0x7c] sm:$0xf]
  %v75 = vld [vmem:[%s0 + $0x80] sm:$0xf]
  %v76 = vld [vmem:[%s0 + $0x84] sm:$0xf]
  %v77 = vld [vmem:[%s0 + $0x88] sm:$0xf]
  %v78 = vld [vmem:[%s0 + $0x8c] sm:$0xf]
  %v79 = vld [vmem:[%s0 + $0x90] sm:$0xf]
  %v80 = vld [vmem:[%s0 + $0x94] sm:$0xf]
  %v81 = vld [vmem:[%s0 + $0x98] sm:$0xf]
  %v82 = vld [vmem:[%s0 + $0x9c] sm:$0xf]
  %v83 = vld [vmem:[%s0 + $0xa0] sm:$0xf]
  %v84 = vld [vmem:[%s0 + $0xa4] sm:$0xf]
  %v85 = vld [vmem:[%s0 + $0xa8] sm:$0xf]
  %v86 = vld [vmem:[%s0 + $0xac] sm:$0xf]
  %v87 = vld [vmem:[%s0 + $0xb0] sm:$0xf]
  %v88 = vld [vmem:[%s0 + $0xb4] sm:$0xf]
  %v89 = vld [vmem:[%s0 + $0xb8] sm:$0xf]
  %v90 = vld [vmem:[%s0 + $0xbc] sm:$0xf]
  %v91 = vld [vmem:[%s0 + $0xc0] sm:$0xf]
  %v92 = vld [vmem:[%s0 + $0xc4] sm:$0xf]
  %v93 = vld [vmem:[%s0 + $0xc8] sm:$0xf]
  %v94 = vld [vmem:[%s0 + $0xcc] sm:$0xf]
  %v95 = vld [vmem:[%s0 + $0xd0] sm:$0xf]
  %v96 = vld [vmem:[%s0 + $0xd4] sm:$0xf]
  %v97 = vld [vmem:[%s0 + $0xd8] sm:$0xf]
  %v98 = vld [vmem:[%s0 + $0xdc] sm:$0xf]
  %v99 = vld [vmem:[%s0 + $0xe0] sm:$0xf]
  %v100 = vld [vmem:[%s0 + $0xe4] sm:$0xf]
  %v101 = vld [vmem:[%s0 + $0xe8] sm:$0xf]
  %v102 = vld [vmem:[%s0 + $0xec] sm:$0xf]
  %v103 = vld [vmem:[%s0 + $0xf0] sm:$0xf]
  %v104 = vld [vmem:[%s0 + $0xf4] sm:$0xf]
  %v105 = vld [vmem:[%s0 + $0xf8] sm:$0xf]
  %v106 = vld [vmem:[%s0 + $0xfc] sm:$0xf]
  %v107 = vunpack.c.l.bf16 %v43
  %v108 = vunpack.c.l.bf16 %v44
  %v109 = vunpack.c.l.bf16 %v45
  %v110 = vunpack.c.l.bf16 %v46
  %v111 = vunpack.c.l.bf16 %v47
  %v112 = vunpack.c.l.bf16 %v48
  %v113 = vunpack.c.l.bf16 %v49
  %v114 = vunpack.c.l.bf16 %v50
  %v115 = vunpack.c.l.bf16 %v51
  %v116 = vunpack.c.l.bf16 %v52
  %v117 = vunpack.c.l.bf16 %v53
  %v118 = vunpack.c.l.bf16 %v54
  %v119 = vunpack.c.l.bf16 %v55
  %v120 = vunpack.c.l.bf16 %v56
  %v121 = vunpack.c.l.bf16 %v57
  %v122 = vunpack.c.l.bf16 %v58
  %v123 = vunpack.c.l.bf16 %v59
  %v124 = vunpack.c.l.bf16 %v60
  %v125 = vunpack.c.l.bf16 %v61
  %v126 = vunpack.c.l.bf16 %v62
  %v127 = vunpack.c.l.bf16 %v63
  %v128 = vunpack.c.l.bf16 %v64
  %v129 = vunpack.c.l.bf16 %v65
  %v130 = vunpack.c.l.bf16 %v66
  %v131 = vunpack.c.l.bf16 %v67
  %v132 = vunpack.c.l.bf16 %v68
  %v133 = vunpack.c.l.bf16 %v69
  %v134 = vunpack.c.l.bf16 %v70
  %v135 = vunpack.c.l.bf16 %v71
  %v136 = vunpack.c.l.bf16 %v72
  %v137 = vunpack.c.l.bf16 %v73
  %v138 = vunpack.c.l.bf16 %v74
  %v139 = vunpack.c.l.bf16 %v75
  %v140 = vunpack.c.l.bf16 %v76
  %v141 = vunpack.c.l.bf16 %v77
  %v142 = vunpack.c.l.bf16 %v78
  %v143 = vunpack.c.l.bf16 %v79
  %v144 = vunpack.c.l.bf16 %v80
  %v145 = vunpack.c.l.bf16 %v81
  %v146 = vunpack.c.l.bf16 %v82
  %v147 = vunpack.c.l.bf16 %v83
  %v148 = vunpack.c.l.bf16 %v84
  %v149 = vunpack.c.l.bf16 %v85
  %v150 = vunpack.c.l.bf16 %v86
  %v151 = vunpack.c.l.bf16 %v87
  %v152 = vunpack.c.l.bf16 %v88
  %v153 = vunpack.c.l.bf16 %v89
  %v154 = vunpack.c.l.bf16 %v90
  %v155 = vunpack.c.l.bf16 %v91
  %v156 = vunpack.c.l.bf16 %v92
  %v157 = vunpack.c.l.bf16 %v93
  %v158 = vunpack.c.l.bf16 %v94
  %v159 = vunpack.c.l.bf16 %v95
  %v160 = vunpack.c.l.bf16 %v96
  %v161 = vunpack.c.l.bf16 %v97
  %v162 = vunpack.c.l.bf16 %v98
  %v163 = vunpack.c.l.bf16 %v99
  %v164 = vunpack.c.l.bf16 %v100
  %v165 = vunpack.c.l.bf16 %v101
  %v166 = vunpack.c.l.bf16 %v102
  %v167 = vunpack.c.l.bf16 %v103
  %v168 = vunpack.c.l.bf16 %v104
  %v169 = vunpack.c.l.bf16 %v105
  %v170 = vunpack.c.l.bf16 %v106
  %v172 = vperm.slane %v39, 0
  %v174 = vmul.f32 %v107, %v172
  %v175 = vmul.f32 %v108, %v172
  %v176 = vmul.f32 %v109, %v172
  %v177 = vmul.f32 %v110, %v172
  %v178 = vmul.f32 %v111, %v172
  %v179 = vmul.f32 %v112, %v172
  %v180 = vmul.f32 %v113, %v172
  %v181 = vmul.f32 %v114, %v172
  %v182 = vmul.f32 %v115, %v172
  %v183 = vmul.f32 %v116, %v172
  %v184 = vmul.f32 %v117, %v172
  %v185 = vmul.f32 %v118, %v172
  %v186 = vmul.f32 %v119, %v172
  %v187 = vmul.f32 %v120, %v172
  %v188 = vmul.f32 %v121, %v172
  %v189 = vmul.f32 %v122, %v172
  %v190 = vmul.f32 %v123, %v172
  %v191 = vmul.f32 %v124, %v172
  %v192 = vmul.f32 %v125, %v172
  %v193 = vmul.f32 %v126, %v172
  %v194 = vmul.f32 %v127, %v172
  %v195 = vmul.f32 %v128, %v172
  %v196 = vmul.f32 %v129, %v172
  %v197 = vmul.f32 %v130, %v172
  %v198 = vmul.f32 %v131, %v172
  %v199 = vmul.f32 %v132, %v172
  %v200 = vmul.f32 %v133, %v172
  %v201 = vmul.f32 %v134, %v172
  %v202 = vmul.f32 %v135, %v172
  %v203 = vmul.f32 %v136, %v172
  %v204 = vmul.f32 %v137, %v172
  %v205 = vmul.f32 %v138, %v172
  %v206 = vmul.f32 %v139, %v172
  %v207 = vmul.f32 %v140, %v172
  %v208 = vmul.f32 %v141, %v172
  %v209 = vmul.f32 %v142, %v172
  %v210 = vmul.f32 %v143, %v172
  %v211 = vmul.f32 %v144, %v172
  %v212 = vmul.f32 %v145, %v172
  %v213 = vmul.f32 %v146, %v172
  %v214 = vmul.f32 %v147, %v172
  %v215 = vmul.f32 %v148, %v172
  %v216 = vmul.f32 %v149, %v172
  %v217 = vmul.f32 %v150, %v172
  %v218 = vmul.f32 %v151, %v172
  %v219 = vmul.f32 %v152, %v172
  %v220 = vmul.f32 %v153, %v172
  %v221 = vmul.f32 %v154, %v172
  %v222 = vmul.f32 %v155, %v172
  %v223 = vmul.f32 %v156, %v172
  %v224 = vmul.f32 %v157, %v172
  %v225 = vmul.f32 %v158, %v172
  %v226 = vmul.f32 %v159, %v172
  %v227 = vmul.f32 %v160, %v172
  %v228 = vmul.f32 %v161, %v172
  %v229 = vmul.f32 %v162, %v172
  %v230 = vmul.f32 %v163, %v172
  %v231 = vmul.f32 %v164, %v172
  %v232 = vmul.f32 %v165, %v172
  %v233 = vmul.f32 %v166, %v172
  %v234 = vmul.f32 %v167, %v172
  %v235 = vmul.f32 %v168, %v172
  %v236 = vmul.f32 %v169, %v172
  %v237 = vmul.f32 %v170, %v172
  %v239 = vperm.slane %v42, 0
  %v241 = vadd.f32 %v174, %v239
  %v242 = vadd.f32 %v175, %v239
  %v243 = vadd.f32 %v176, %v239
  %v244 = vadd.f32 %v177, %v239
  %v245 = vadd.f32 %v178, %v239
  %v246 = vadd.f32 %v179, %v239
  %v247 = vadd.f32 %v180, %v239
  %v248 = vadd.f32 %v181, %v239
  %v249 = vadd.f32 %v182, %v239
  %v250 = vadd.f32 %v183, %v239
  %v251 = vadd.f32 %v184, %v239
  %v252 = vadd.f32 %v185, %v239
  %v253 = vadd.f32 %v186, %v239
  %v254 = vadd.f32 %v187, %v239
  %v255 = vadd.f32 %v188, %v239
  %v256 = vadd.f32 %v189, %v239
  %v257 = vadd.f32 %v190, %v239
  %v258 = vadd.f32 %v191, %v239
  %v259 = vadd.f32 %v192, %v239
  %v260 = vadd.f32 %v193, %v239
  %v261 = vadd.f32 %v194, %v239
  %v262 = vadd.f32 %v195, %v239
  %v263 = vadd.f32 %v196, %v239
  %v264 = vadd.f32 %v197, %v239
  %v265 = vadd.f32 %v198, %v239
  %v266 = vadd.f32 %v199, %v239
  %v267 = vadd.f32 %v200, %v239
  %v268 = vadd.f32 %v201, %v239
  %v269 = vadd.f32 %v202, %v239
  %v270 = vadd.f32 %v203, %v239
  %v271 = vadd.f32 %v204, %v239
  %v272 = vadd.f32 %v205, %v239
  %v273 = vadd.f32 %v206, %v239
  %v274 = vadd.f32 %v207, %v239
  %v275 = vadd.f32 %v208, %v239
  %v276 = vadd.f32 %v209, %v239
  %v277 = vadd.f32 %v210, %v239
  %v278 = vadd.f32 %v211, %v239
  %v279 = vadd.f32 %v212, %v239
  %v280 = vadd.f32 %v213, %v239
  %v281 = vadd.f32 %v214, %v239
  %v282 = vadd.f32 %v215, %v239
  %v283 = vadd.f32 %v216, %v239
  %v284 = vadd.f32 %v217, %v239
  %v285 = vadd.f32 %v218, %v239
  %v286 = vadd.f32 %v219, %v239
  %v287 = vadd.f32 %v220, %v239
  %v288 = vadd.f32 %v221, %v239
  %v289 = vadd.f32 %v222, %v239
  %v290 = vadd.f32 %v223, %v239
  %v291 = vadd.f32 %v224, %v239
  %v292 = vadd.f32 %v225, %v239
  %v293 = vadd.f32 %v226, %v239
  %v294 = vadd.f32 %v227, %v239
  %v295 = vadd.f32 %v228, %v239
  %v296 = vadd.f32 %v229, %v239
  %v297 = vadd.f32 %v230, %v239
  %v298 = vadd.f32 %v231, %v239
  %v299 = vadd.f32 %v232, %v239
  %v300 = vadd.f32 %v233, %v239
  %v301 = vadd.f32 %v234, %v239
  %v302 = vadd.f32 %v235, %v239
  %v303 = vadd.f32 %v236, %v239
  %v304 = vadd.f32 %v237, %v239
  %vm305 = vcmp.ge.f32.partialorder %v241, 0.0
  %vm306 = vcmp.ge.f32.partialorder %v242, 0.0
  %vm307 = vcmp.ge.f32.partialorder %v243, 0.0
  %vm308 = vcmp.ge.f32.partialorder %v244, 0.0
  %vm309 = vcmp.ge.f32.partialorder %v245, 0.0
  %vm310 = vcmp.ge.f32.partialorder %v246, 0.0
  %vm311 = vcmp.ge.f32.partialorder %v247, 0.0
  %vm312 = vcmp.ge.f32.partialorder %v248, 0.0
  %vm313 = vcmp.ge.f32.partialorder %v249, 0.0
  %vm314 = vcmp.ge.f32.partialorder %v250, 0.0
  %vm315 = vcmp.ge.f32.partialorder %v251, 0.0
  %vm316 = vcmp.ge.f32.partialorder %v252, 0.0
  %vm317 = vcmp.ge.f32.partialorder %v253, 0.0
  %vm318 = vcmp.ge.f32.partialorder %v254, 0.0
  %vm319 = vcmp.ge.f32.partialorder %v255, 0.0
  %vm320 = vcmp.ge.f32.partialorder %v256, 0.0
  %vm321 = vcmp.ge.f32.partialorder %v257, 0.0
  %vm322 = vcmp.ge.f32.partialorder %v258, 0.0
  %vm323 = vcmp.ge.f32.partialorder %v259, 0.0
  %vm324 = vcmp.ge.f32.partialorder %v260, 0.0
  %vm325 = vcmp.ge.f32.partialorder %v261, 0.0
  %vm326 = vcmp.ge.f32.partialorder %v262, 0.0
  %vm327 = vcmp.ge.f32.partialorder %v263, 0.0
  %vm328 = vcmp.ge.f32.partialorder %v264, 0.0
  %vm329 = vcmp.ge.f32.partialorder %v265, 0.0
  %vm330 = vcmp.ge.f32.partialorder %v266, 0.0
  %vm331 = vcmp.ge.f32.partialorder %v267, 0.0
  %vm332 = vcmp.ge.f32.partialorder %v268, 0.0
  %vm333 = vcmp.ge.f32.partialorder %v269, 0.0
  %vm334 = vcmp.ge.f32.partialorder %v270, 0.0
  %vm335 = vcmp.ge.f32.partialorder %v271, 0.0
  %vm336 = vcmp.ge.f32.partialorder %v272, 0.0
  %vm337 = vcmp.ge.f32.partialorder %v273, 0.0
  %vm338 = vcmp.ge.f32.partialorder %v274, 0.0
  %vm339 = vcmp.ge.f32.partialorder %v275, 0.0
  %vm340 = vcmp.ge.f32.partialorder %v276, 0.0
  %vm341 = vcmp.ge.f32.partialorder %v277, 0.0
  %vm342 = vcmp.ge.f32.partialorder %v278, 0.0
  %vm343 = vcmp.ge.f32.partialorder %v279, 0.0
  %vm344 = vcmp.ge.f32.partialorder %v280, 0.0
  %vm345 = vcmp.ge.f32.partialorder %v281, 0.0
  %vm346 = vcmp.ge.f32.partialorder %v282, 0.0
  %vm347 = vcmp.ge.f32.partialorder %v283, 0.0
  %vm348 = vcmp.ge.f32.partialorder %v284, 0.0
  %vm349 = vcmp.ge.f32.partialorder %v285, 0.0
  %vm350 = vcmp.ge.f32.partialorder %v286, 0.0
  %vm351 = vcmp.ge.f32.partialorder %v287, 0.0
  %vm352 = vcmp.ge.f32.partialorder %v288, 0.0
  %vm353 = vcmp.ge.f32.partialorder %v289, 0.0
  %vm354 = vcmp.ge.f32.partialorder %v290, 0.0
  %vm355 = vcmp.ge.f32.partialorder %v291, 0.0
  %vm356 = vcmp.ge.f32.partialorder %v292, 0.0
  %vm357 = vcmp.ge.f32.partialorder %v293, 0.0
  %vm358 = vcmp.ge.f32.partialorder %v294, 0.0
  %vm359 = vcmp.ge.f32.partialorder %v295, 0.0
  %vm360 = vcmp.ge.f32.partialorder %v296, 0.0
  %vm361 = vcmp.ge.f32.partialorder %v297, 0.0
  %vm362 = vcmp.ge.f32.partialorder %v298, 0.0
  %vm363 = vcmp.ge.f32.partialorder %v299, 0.0
  %vm364 = vcmp.ge.f32.partialorder %v300, 0.0
  %vm365 = vcmp.ge.f32.partialorder %v301, 0.0
  %vm366 = vcmp.ge.f32.partialorder %v302, 0.0
  %vm367 = vcmp.ge.f32.partialorder %v303, 0.0
  %vm368 = vcmp.ge.f32.partialorder %v304, 0.0
  %v369 = vmul.f32 %v241, 0.2
  %v370 = vmul.f32 %v242, 0.2
  %v371 = vmul.f32 %v243, 0.2
  %v372 = vmul.f32 %v244, 0.2
  %v373 = vmul.f32 %v245, 0.2
  %v374 = vmul.f32 %v246, 0.2
  %v375 = vmul.f32 %v247, 0.2
  %v376 = vmul.f32 %v248, 0.2
  %v377 = vmul.f32 %v249, 0.2
  %v378 = vmul.f32 %v250, 0.2
  %v379 = vmul.f32 %v251, 0.2
  %v380 = vmul.f32 %v252, 0.2
  %v381 = vmul.f32 %v253, 0.2
  %v382 = vmul.f32 %v254, 0.2
  %v383 = vmul.f32 %v255, 0.2
  %v384 = vmul.f32 %v256, 0.2
  %v385 = vmul.f32 %v257, 0.2
  %v386 = vmul.f32 %v258, 0.2
  %v387 = vmul.f32 %v259, 0.2
  %v388 = vmul.f32 %v260, 0.2
  %v389 = vmul.f32 %v261, 0.2
  %v390 = vmul.f32 %v262, 0.2
  %v391 = vmul.f32 %v263, 0.2
  %v392 = vmul.f32 %v264, 0.2
  %v393 = vmul.f32 %v265, 0.2
  %v394 = vmul.f32 %v266, 0.2
  %v395 = vmul.f32 %v267, 0.2
  %v396 = vmul.f32 %v268, 0.2
  %v397 = vmul.f32 %v269, 0.2
  %v398 = vmul.f32 %v270, 0.2
  %v399 = vmul.f32 %v271, 0.2
  %v400 = vmul.f32 %v272, 0.2
  %v401 = vmul.f32 %v273, 0.2
  %v402 = vmul.f32 %v274, 0.2
  %v403 = vmul.f32 %v275, 0.2
  %v404 = vmul.f32 %v276, 0.2
  %v405 = vmul.f32 %v277, 0.2
  %v406 = vmul.f32 %v278, 0.2
  %v407 = vmul.f32 %v279, 0.2
  %v408 = vmul.f32 %v280, 0.2
  %v409 = vmul.f32 %v281, 0.2
  %v410 = vmul.f32 %v282, 0.2
  %v411 = vmul.f32 %v283, 0.2
  %v412 = vmul.f32 %v284, 0.2
  %v413 = vmul.f32 %v285, 0.2
  %v414 = vmul.f32 %v286, 0.2
  %v415 = vmul.f32 %v287, 0.2
  %v416 = vmul.f32 %v288, 0.2
  %v417 = vmul.f32 %v289, 0.2
  %v418 = vmul.f32 %v290, 0.2
  %v419 = vmul.f32 %v291, 0.2
  %v420 = vmul.f32 %v292, 0.2
  %v421 = vmul.f32 %v293, 0.2
  %v422 = vmul.f32 %v294, 0.2
  %v423 = vmul.f32 %v295, 0.2
  %v424 = vmul.f32 %v296, 0.2
  %v425 = vmul.f32 %v297, 0.2
  %v426 = vmul.f32 %v298, 0.2
  %v427 = vmul.f32 %v299, 0.2
  %v428 = vmul.f32 %v300, 0.2
  %v429 = vmul.f32 %v301, 0.2
  %v430 = vmul.f32 %v302, 0.2
  %v431 = vmul.f32 %v303, 0.2
  %v432 = vmul.f32 %v304, 0.2
  %v433 = vsel %vm305, %v241, %v369
  %v434 = vsel %vm306, %v242, %v370
  %v435 = vsel %vm307, %v243, %v371
  %v436 = vsel %vm308, %v244, %v372
  %v437 = vsel %vm309, %v245, %v373
  %v438 = vsel %vm310, %v246, %v374
  %v439 = vsel %vm311, %v247, %v375
  %v440 = vsel %vm312, %v248, %v376
  %v441 = vsel %vm313, %v249, %v377
  %v442 = vsel %vm314, %v250, %v378
  %v443 = vsel %vm315, %v251, %v379
  %v444 = vsel %vm316, %v252, %v380
  %v445 = vsel %vm317, %v253, %v381
  %v446 = vsel %vm318, %v254, %v382
  %v447 = vsel %vm319, %v255, %v383
  %v448 = vsel %vm320, %v256, %v384
  %v449 = vsel %vm321, %v257, %v385
  %v450 = vsel %vm322, %v258, %v386
  %v451 = vsel %vm323, %v259, %v387
  %v452 = vsel %vm324, %v260, %v388
  %v453 = vsel %vm325, %v261, %v389
  %v454 = vsel %vm326, %v262, %v390
  %v455 = vsel %vm327, %v263, %v391
  %v456 = vsel %vm328, %v264, %v392
  %v457 = vsel %vm329, %v265, %v393
  %v458 = vsel %vm330, %v266, %v394
  %v459 = vsel %vm331, %v267, %v395
  %v460 = vsel %vm332, %v268, %v396
  %v461 = vsel %vm333, %v269, %v397
  %v462 = vsel %vm334, %v270, %v398
  %v463 = vsel %vm335, %v271, %v399
  %v464 = vsel %vm336, %v272, %v400
  %v465 = vsel %vm337, %v273, %v401
  %v466 = vsel %vm338, %v274, %v402
  %v467 = vsel %vm339, %v275, %v403
  %v468 = vsel %vm340, %v276, %v404
  %v469 = vsel %vm341, %v277, %v405
  %v470 = vsel %vm342, %v278, %v406
  %v471 = vsel %vm343, %v279, %v407
  %v472 = vsel %vm344, %v280, %v408
  %v473 = vsel %vm345, %v281, %v409
  %v474 = vsel %vm346, %v282, %v410
  %v475 = vsel %vm347, %v283, %v411
  %v476 = vsel %vm348, %v284, %v412
  %v477 = vsel %vm349, %v285, %v413
  %v478 = vsel %vm350, %v286, %v414
  %v479 = vsel %vm351, %v287, %v415
  %v480 = vsel %vm352, %v288, %v416
  %v481 = vsel %vm353, %v289, %v417
  %v482 = vsel %vm354, %v290, %v418
  %v483 = vsel %vm355, %v291, %v419
  %v484 = vsel %vm356, %v292, %v420
  %v485 = vsel %vm357, %v293, %v421
  %v486 = vsel %vm358, %v294, %v422
  %v487 = vsel %vm359, %v295, %v423
  %v488 = vsel %vm360, %v296, %v424
  %v489 = vsel %vm361, %v297, %v425
  %v490 = vsel %vm362, %v298, %v426
  %v491 = vsel %vm363, %v299, %v427
  %v492 = vsel %vm364, %v300, %v428
  %v493 = vsel %vm365, %v301, %v429
  %v494 = vsel %vm366, %v302, %v430
  %v495 = vsel %vm367, %v303, %v431
  %v496 = vsel %vm368, %v304, %v432
  %v497 = vpack.c.bf16 %v433, %v433
  %v498 = vpack.c.bf16 %v434, %v434
  %v499 = vpack.c.bf16 %v435, %v435
  %v500 = vpack.c.bf16 %v436, %v436
  %v501 = vpack.c.bf16 %v437, %v437
  %v502 = vpack.c.bf16 %v438, %v438
  %v503 = vpack.c.bf16 %v439, %v439
  %v504 = vpack.c.bf16 %v440, %v440
  %v505 = vpack.c.bf16 %v441, %v441
  %v506 = vpack.c.bf16 %v442, %v442
  %v507 = vpack.c.bf16 %v443, %v443
  %v508 = vpack.c.bf16 %v444, %v444
  %v509 = vpack.c.bf16 %v445, %v445
  %v510 = vpack.c.bf16 %v446, %v446
  %v511 = vpack.c.bf16 %v447, %v447
  %v512 = vpack.c.bf16 %v448, %v448
  %v513 = vpack.c.bf16 %v449, %v449
  %v514 = vpack.c.bf16 %v450, %v450
  %v515 = vpack.c.bf16 %v451, %v451
  %v516 = vpack.c.bf16 %v452, %v452
  %v517 = vpack.c.bf16 %v453, %v453
  %v518 = vpack.c.bf16 %v454, %v454
  %v519 = vpack.c.bf16 %v455, %v455
  %v520 = vpack.c.bf16 %v456, %v456
  %v521 = vpack.c.bf16 %v457, %v457
  %v522 = vpack.c.bf16 %v458, %v458
  %v523 = vpack.c.bf16 %v459, %v459
  %v524 = vpack.c.bf16 %v460, %v460
  %v525 = vpack.c.bf16 %v461, %v461
  %v526 = vpack.c.bf16 %v462, %v462
  %v527 = vpack.c.bf16 %v463, %v463
  %v528 = vpack.c.bf16 %v464, %v464
  %v529 = vpack.c.bf16 %v465, %v465
  %v530 = vpack.c.bf16 %v466, %v466
  %v531 = vpack.c.bf16 %v467, %v467
  %v532 = vpack.c.bf16 %v468, %v468
  %v533 = vpack.c.bf16 %v469, %v469
  %v534 = vpack.c.bf16 %v470, %v470
  %v535 = vpack.c.bf16 %v471, %v471
  %v536 = vpack.c.bf16 %v472, %v472
  %v537 = vpack.c.bf16 %v473, %v473
  %v538 = vpack.c.bf16 %v474, %v474
  %v539 = vpack.c.bf16 %v475, %v475
  %v540 = vpack.c.bf16 %v476, %v476
  %v541 = vpack.c.bf16 %v477, %v477
  %v542 = vpack.c.bf16 %v478, %v478
  %v543 = vpack.c.bf16 %v479, %v479
  %v544 = vpack.c.bf16 %v480, %v480
  %v545 = vpack.c.bf16 %v481, %v481
  %v546 = vpack.c.bf16 %v482, %v482
  %v547 = vpack.c.bf16 %v483, %v483
  %v548 = vpack.c.bf16 %v484, %v484
  %v549 = vpack.c.bf16 %v485, %v485
  %v550 = vpack.c.bf16 %v486, %v486
  %v551 = vpack.c.bf16 %v487, %v487
  %v552 = vpack.c.bf16 %v488, %v488
  %v553 = vpack.c.bf16 %v489, %v489
  %v554 = vpack.c.bf16 %v490, %v490
  %v555 = vpack.c.bf16 %v491, %v491
  %v556 = vpack.c.bf16 %v492, %v492
  %v557 = vpack.c.bf16 %v493, %v493
  %v558 = vpack.c.bf16 %v494, %v494
  %v559 = vpack.c.bf16 %v495, %v495
  %v560 = vpack.c.bf16 %v496, %v496
  %561 = vst [vmem:[%s5] sm:$0xf] %v497
  %562 = vst [vmem:[%s5 + $0x4] sm:$0xf] %v498
  %563 = vst [vmem:[%s5 + $0x8] sm:$0xf] %v499
  %564 = vst [vmem:[%s5 + $0xc] sm:$0xf] %v500
  %565 = vst [vmem:[%s5 + $0x10] sm:$0xf] %v501
  %566 = vst [vmem:[%s5 + $0x14] sm:$0xf] %v502
  %567 = vst [vmem:[%s5 + $0x18] sm:$0xf] %v503
  %568 = vst [vmem:[%s5 + $0x1c] sm:$0xf] %v504
  %569 = vst [vmem:[%s5 + $0x20] sm:$0xf] %v505
  %570 = vst [vmem:[%s5 + $0x24] sm:$0xf] %v506
  %571 = vst [vmem:[%s5 + $0x28] sm:$0xf] %v507
  %572 = vst [vmem:[%s5 + $0x2c] sm:$0xf] %v508
  %573 = vst [vmem:[%s5 + $0x30] sm:$0xf] %v509
  %574 = vst [vmem:[%s5 + $0x34] sm:$0xf] %v510
  %575 = vst [vmem:[%s5 + $0x38] sm:$0xf] %v511
  %576 = vst [vmem:[%s5 + $0x3c] sm:$0xf] %v512
  %577 = vst [vmem:[%s5 + $0x40] sm:$0xf] %v513
  %578 = vst [vmem:[%s5 + $0x44] sm:$0xf] %v514
  %579 = vst [vmem:[%s5 + $0x48] sm:$0xf] %v515
  %580 = vst [vmem:[%s5 + $0x4c] sm:$0xf] %v516
  %581 = vst [vmem:[%s5 + $0x50] sm:$0xf] %v517
  %582 = vst [vmem:[%s5 + $0x54] sm:$0xf] %v518
  %583 = vst [vmem:[%s5 + $0x58] sm:$0xf] %v519
  %584 = vst [vmem:[%s5 + $0x5c] sm:$0xf] %v520
  %585 = vst [vmem:[%s5 + $0x60] sm:$0xf] %v521
  %586 = vst [vmem:[%s5 + $0x64] sm:$0xf] %v522
  %587 = vst [vmem:[%s5 + $0x68] sm:$0xf] %v523
  %588 = vst [vmem:[%s5 + $0x6c] sm:$0xf] %v524
  %589 = vst [vmem:[%s5 + $0x70] sm:$0xf] %v525
  %590 = vst [vmem:[%s5 + $0x74] sm:$0xf] %v526
  %591 = vst [vmem:[%s5 + $0x78] sm:$0xf] %v527
  %592 = vst [vmem:[%s5 + $0x7c] sm:$0xf] %v528
  %593 = vst [vmem:[%s5 + $0x80] sm:$0xf] %v529
  %594 = vst [vmem:[%s5 + $0x84] sm:$0xf] %v530
  %595 = vst [vmem:[%s5 + $0x88] sm:$0xf] %v531
  %596 = vst [vmem:[%s5 + $0x8c] sm:$0xf] %v532
  %597 = vst [vmem:[%s5 + $0x90] sm:$0xf] %v533
  %598 = vst [vmem:[%s5 + $0x94] sm:$0xf] %v534
  %599 = vst [vmem:[%s5 + $0x98] sm:$0xf] %v535
  %600 = vst [vmem:[%s5 + $0x9c] sm:$0xf] %v536
  %601 = vst [vmem:[%s5 + $0xa0] sm:$0xf] %v537
  %602 = vst [vmem:[%s5 + $0xa4] sm:$0xf] %v538
  %603 = vst [vmem:[%s5 + $0xa8] sm:$0xf] %v539
  %604 = vst [vmem:[%s5 + $0xac] sm:$0xf] %v540
  %605 = vst [vmem:[%s5 + $0xb0] sm:$0xf] %v541
  %606 = vst [vmem:[%s5 + $0xb4] sm:$0xf] %v542
  %607 = vst [vmem:[%s5 + $0xb8] sm:$0xf] %v543
  %608 = vst [vmem:[%s5 + $0xbc] sm:$0xf] %v544
  %609 = vst [vmem:[%s5 + $0xc0] sm:$0xf] %v545
  %610 = vst [vmem:[%s5 + $0xc4] sm:$0xf] %v546
  %611 = vst [vmem:[%s5 + $0xc8] sm:$0xf] %v547
  %612 = vst [vmem:[%s5 + $0xcc] sm:$0xf] %v548
  %613 = vst [vmem:[%s5 + $0xd0] sm:$0xf] %v549
  %614 = vst [vmem:[%s5 + $0xd4] sm:$0xf] %v550
  %615 = vst [vmem:[%s5 + $0xd8] sm:$0xf] %v551
  %616 = vst [vmem:[%s5 + $0xdc] sm:$0xf] %v552
  %617 = vst [vmem:[%s5 + $0xe0] sm:$0xf] %v553
  %618 = vst [vmem:[%s5 + $0xe4] sm:$0xf] %v554
  %619 = vst [vmem:[%s5 + $0xe8] sm:$0xf] %v555
  %620 = vst [vmem:[%s5 + $0xec] sm:$0xf] %v556
  %621 = vst [vmem:[%s5 + $0xf0] sm:$0xf] %v557
  %622 = vst [vmem:[%s5 + $0xf4] sm:$0xf] %v558
  %623 = vst [vmem:[%s5 + $0xf8] sm:$0xf] %v559
  %624 = vst [vmem:[%s5 + $0xfc] sm:$0xf] %v560
  // Predicated region
  $region22: #{discriminator_forward.12} parent=0 // pred_check
    _
  $region23: #{discriminator_forward.12} parent=0 // pred_check_branch
    %626 = sbr.rel (0) target = $region25
  $region24: #{discriminator_forward.12} parent=0 // pred_region
    _
  $region25: #{discriminator_forward.12} parent=0 // pred_fallthru
    _
  // Predicated region
  $region26: #{discriminator_forward.12} parent=0 // pred_check
    _
  $region27: #{discriminator_forward.12} parent=0 // pred_check_branch
    %628 = sbr.rel (0) target = $region29
  $region28: #{discriminator_forward.12} parent=0 // pred_region
    _
  $region29: #{discriminator_forward.12} parent=0 // pred_fallthru
    _

// kernel: discriminator_forward.13
$region0: #{discriminator_forward.13}
  #allocation0 [shape = 'u32[]', space=smem, size = 0x4, offset = 0x4, fixed_abs, tag = 'smem constant byte address 0x4 - core index']
  #allocation1 [shape = 'u32[72,128]{1,0:T(1,128)}', space=vmem, size = 0x9000, scoped, tag = 'internal scratch']
  %s0 = inlined_call_operand.vmem [shape: bf16[128,256], index: 0, kind: input, shape index: {}]
  %s1 = inlined_call_operand.vmem [shape: bf16[256,128], index: 1, kind: input, shape index: {}]
  %s2 = inlined_call_operand.vmem [shape: bf16[128,128], index: 2, kind: output, shape index: {0}]
  %s3 = inlined_call_operand.vmem [shape: f32[1,128], index: 3, kind: output, shape index: {1}]
  %s4 = inlined_call_operand.vmem [shape: f32[1,128], index: 4, kind: output, shape index: {2}]
  %5 = xla_tuple %s2, %s3, %s4
  %s6 = sld [smem:[#allocation0]]
  $region38: #{discriminator_forward.13} parent=0
    _
  %s8 = ssub.s32 1, %s6
  %s9 = scalar_select 0, %s8, %s6
  // Predicated region
  $region2: #{discriminator_forward.13} parent=0 // pred_check
    _
  $region3: #{discriminator_forward.13} parent=0 // pred_check_branch
    %11 = sbr.rel (0) target = $region5
  $region4: #{discriminator_forward.13} parent=0 // pred_region
    _
  $region5: #{discriminator_forward.13} parent=0 // pred_fallthru
    _
  // Predicated region
  $region6: #{discriminator_forward.13} parent=0 // pred_check
    _
  $region7: #{discriminator_forward.13} parent=0 // pred_check_branch
    %13 = sbr.rel (0) target = $region9
  $region8: #{discriminator_forward.13} parent=0 // pred_region
    _
  $region9: #{discriminator_forward.13} parent=0 // pred_fallthru
    _
  %p14 = scmp.eq.s32.totalorder 0, 0
  // Predicated region
  $region10: #{discriminator_forward.13} parent=0 // pred_check
    %p15 = pneg %p14
  $region11: #{discriminator_forward.13} parent=0 // pred_check_branch
    %17 = sbr.rel (%p15) target = $region13
  $region12: #{discriminator_forward.13} parent=0 // pred_region
    %18 = vst [vmem:[%s3] sm:$0x1] 0.0
    %19 = vst [vmem:[%s4] sm:$0x1] 0.0
  $region13: #{discriminator_forward.13} parent=0 // pred_fallthru
    _
  %v20 = vld [vmem:[%s0] sm:$0xff]
  %v21 = vld [vmem:[%s0 + $0x8] sm:$0xff]
  %v22 = vld [vmem:[%s0 + $0x10] sm:$0xff]
  %v23 = vld [vmem:[%s0 + $0x18] sm:$0xff]
  %v24 = vld [vmem:[%s0 + $0x20] sm:$0xff]
  %v25 = vld [vmem:[%s0 + $0x28] sm:$0xff]
  %v26 = vld [vmem:[%s0 + $0x30] sm:$0xff]
  %v27 = vld [vmem:[%s0 + $0x38] sm:$0xff]
  %v28 = vld [vmem:[%s0 + $0x40] sm:$0xff]
  %v29 = vld [vmem:[%s0 + $0x48] sm:$0xff]
  %v30 = vld [vmem:[%s0 + $0x50] sm:$0xff]
  %v31 = vld [vmem:[%s0 + $0x58] sm:$0xff]
  %v32 = vld [vmem:[%s0 + $0x60] sm:$0xff]
  %v33 = vld [vmem:[%s0 + $0x68] sm:$0xff]
  %v34 = vld [vmem:[%s0 + $0x70] sm:$0xff]
  %v35 = vld [vmem:[%s0 + $0x78] sm:$0xff]
  %v36 = vld [vmem:[%s1] sm:$0xf]
  %v37 = vld [vmem:[%s1 + $0x4] sm:$0xf]
  %v38 = vld [vmem:[%s1 + $0x8] sm:$0xf]
  %v39 = vld [vmem:[%s1 + $0xc] sm:$0xf]
  %v40 = vld [vmem:[%s1 + $0x10] sm:$0xf]
  %v41 = vld [vmem:[%s1 + $0x14] sm:$0xf]
  %v42 = vld [vmem:[%s1 + $0x18] sm:$0xf]
  %v43 = vld [vmem:[%s1 + $0x1c] sm:$0xf]
  %v44 = vld [vmem:[%s1 + $0x20] sm:$0xf]
  %v45 = vld [vmem:[%s1 + $0x24] sm:$0xf]
  %v46 = vld [vmem:[%s1 + $0x28] sm:$0xf]
  %v47 = vld [vmem:[%s1 + $0x2c] sm:$0xf]
  %v48 = vld [vmem:[%s1 + $0x30] sm:$0xf]
  %v49 = vld [vmem:[%s1 + $0x34] sm:$0xf]
  %v50 = vld [vmem:[%s1 + $0x38] sm:$0xf]
  %v51 = vld [vmem:[%s1 + $0x3c] sm:$0xf]
  %v52 = vld [vmem:[%s1 + $0x40] sm:$0xf]
  %v53 = vld [vmem:[%s1 + $0x44] sm:$0xf]
  %v54 = vld [vmem:[%s1 + $0x48] sm:$0xf]
  %v55 = vld [vmem:[%s1 + $0x4c] sm:$0xf]
  %v56 = vld [vmem:[%s1 + $0x50] sm:$0xf]
  %v57 = vld [vmem:[%s1 + $0x54] sm:$0xf]
  %v58 = vld [vmem:[%s1 + $0x58] sm:$0xf]
  %v59 = vld [vmem:[%s1 + $0x5c] sm:$0xf]
  %v60 = vld [vmem:[%s1 + $0x60] sm:$0xf]
  %v61 = vld [vmem:[%s1 + $0x64] sm:$0xf]
  %v62 = vld [vmem:[%s1 + $0x68] sm:$0xf]
  %v63 = vld [vmem:[%s1 + $0x6c] sm:$0xf]
  %v64 = vld [vmem:[%s1 + $0x70] sm:$0xf]
  %v65 = vld [vmem:[%s1 + $0x74] sm:$0xf]
  %v66 = vld [vmem:[%s1 + $0x78] sm:$0xf]
  %v67 = vld [vmem:[%s1 + $0x7c] sm:$0xf]
  %v84 = vunpack.c.l.b16 %v20
  %v85 = vunpack.c.h.b16 %v20
  %v86 = vunpack.c.l.b16 %v21
  %v87 = vunpack.c.h.b16 %v21
  %v88 = vunpack.c.l.b16 %v22
  %v89 = vunpack.c.h.b16 %v22
  %v90 = vunpack.c.l.b16 %v23
  %v91 = vunpack.c.h.b16 %v23
  %v92 = vunpack.c.l.b16 %v24
  %v93 = vunpack.c.h.b16 %v24
  %v94 = vunpack.c.l.b16 %v25
  %v95 = vunpack.c.h.b16 %v25
  %v96 = vunpack.c.l.b16 %v26
  %v97 = vunpack.c.h.b16 %v26
  %v98 = vunpack.c.l.b16 %v27
  %v99 = vunpack.c.h.b16 %v27
  %v100 = vunpack.c.l.b16 %v28
  %v101 = vunpack.c.h.b16 %v28
  %v102 = vunpack.c.l.b16 %v29
  %v103 = vunpack.c.h.b16 %v29
  %v104 = vunpack.c.l.b16 %v30
  %v105 = vunpack.c.h.b16 %v30
  %v106 = vunpack.c.l.b16 %v31
  %v107 = vunpack.c.h.b16 %v31
  %v108 = vunpack.c.l.b16 %v32
  %v109 = vunpack.c.h.b16 %v32
  %v110 = vunpack.c.l.b16 %v33
  %v111 = vunpack.c.h.b16 %v33
  %v112 = vunpack.c.l.b16 %v34
  %v113 = vunpack.c.h.b16 %v34
  %v114 = vunpack.c.l.b16 %v35
  %v115 = vunpack.c.h.b16 %v35
  %v116 = vpack.c.b16 %v86, %v84
  %v117 = vpack.c.b16 %v87, %v85
  %v118 = vpack.c.b16 %v90, %v88
  %v119 = vpack.c.b16 %v91, %v89
  %v120 = vpack.c.b16 %v94, %v92
  %v121 = vpack.c.b16 %v95, %v93
  %v122 = vpack.c.b16 %v98, %v96
  %v123 = vpack.c.b16 %v99, %v97
  %v124 = vpack.c.b16 %v102, %v100
  %v125 = vpack.c.b16 %v103, %v101
  %v126 = vpack.c.b16 %v106, %v104
  %v127 = vpack.c.b16 %v107, %v105
  %v128 = vpack.c.b16 %v110, %v108
  %v129 = vpack.c.b16 %v111, %v109
  %v130 = vpack.c.b16 %v114, %v112
  %v131 = vpack.c.b16 %v115, %v113
  %v180 = vunpack.c.l.b16 %v36
  %v181 = vunpack.c.l.b16 %v37
  %v182 = vunpack.c.l.b16 %v38
  %v183 = vunpack.c.l.b16 %v39
  %v184 = vunpack.c.l.b16 %v40
  %v185 = vunpack.c.l.b16 %v41
  %v186 = vunpack.c.l.b16 %v42
  %v187 = vunpack.c.l.b16 %v43
  %v188 = vunpack.c.l.b16 %v44
  %v189 = vunpack.c.l.b16 %v45
  %v190 = vunpack.c.l.b16 %v46
  %v191 = vunpack.c.l.b16 %v47
  %v192 = vunpack.c.l.b16 %v48
  %v193 = vunpack.c.l.b16 %v49
  %v194 = vunpack.c.l.b16 %v50
  %v195 = vunpack.c.l.b16 %v51
  %v196 = vunpack.c.l.b16 %v52
  %v197 = vunpack.c.l.b16 %v53
  %v198 = vunpack.c.l.b16 %v54
  %v199 = vunpack.c.l.b16 %v55
  %v200 = vunpack.c.l.b16 %v56
  %v201 = vunpack.c.l.b16 %v57
  %v202 = vunpack.c.l.b16 %v58
  %v203 = vunpack.c.l.b16 %v59
  %v204 = vunpack.c.l.b16 %v60
  %v205 = vunpack.c.l.b16 %v61
  %v206 = vunpack.c.l.b16 %v62
  %v207 = vunpack.c.l.b16 %v63
  %v208 = vunpack.c.l.b16 %v64
  %v209 = vunpack.c.l.b16 %v65
  %v210 = vunpack.c.l.b16 %v66
  %v211 = vunpack.c.l.b16 %v67
  %v212 = vpack.c.b16 %v181, %v180
  %v213 = vpack.c.b16 %v183, %v182
  %v214 = vpack.c.b16 %v185, %v184
  %v215 = vpack.c.b16 %v187, %v186
  %v216 = vpack.c.b16 %v189, %v188
  %v217 = vpack.c.b16 %v191, %v190
  %v218 = vpack.c.b16 %v193, %v192
  %v219 = vpack.c.b16 %v195, %v194
  %v220 = vpack.c.b16 %v197, %v196
  %v221 = vpack.c.b16 %v199, %v198
  %v222 = vpack.c.b16 %v201, %v200
  %v223 = vpack.c.b16 %v203, %v202
  %v224 = vpack.c.b16 %v205, %v204
  %v225 = vpack.c.b16 %v207, %v206
  %v226 = vpack.c.b16 %v209, %v208
  %v227 = vpack.c.b16 %v211, %v210
  %244 = vmatpush.bf16.msra.mxu0 %v219
  %245 = vmatpush.bf16.msra.mxu0 %v218
  %246 = vmatpush.bf16.msra.mxu0 %v217
  %247 = vmatpush.bf16.msra.mxu0 %v216
  %248 = vmatpush.bf16.msra.mxu0 %v215
  %249 = vmatpush.bf16.msra.mxu0 %v214
  %250 = vmatpush.bf16.msra.mxu0 %v213
  %251 = vmatpush.bf16.msra.mxu0 %v212
  %252 = vmatmul.bf16.gmra.mxu0 %v116
  %v253 = vpop.f32.mrf.mxu0
  %v254 = vadd.f32 0.0, %v253
  %v255 = vpop.f32.mrf.mxu0
  %v256 = vadd.f32 0.0, %v255
  %257 = vmatmul.bf16.gmra.mxu0 %v118
  %v258 = vpop.f32.mrf.mxu0
  %v259 = vadd.f32 0.0, %v258
  %v260 = vpop.f32.mrf.mxu0
  %v261 = vadd.f32 0.0, %v260
  %262 = vmatmul.bf16.gmra.mxu0 %v120
  %v263 = vpop.f32.mrf.mxu0
  %v264 = vadd.f32 0.0, %v263
  %v265 = vpop.f32.mrf.mxu0
  %v266 = vadd.f32 0.0, %v265
  %267 = vmatmul.bf16.gmra.mxu0 %v122
  %v268 = vpop.f32.mrf.mxu0
  %v269 = vadd.f32 0.0, %v268
  %v270 = vpop.f32.mrf.mxu0
  %v271 = vadd.f32 0.0, %v270
  %272 = vmatmul.bf16.gmra.mxu0 %v124
  %v273 = vpop.f32.mrf.mxu0
  %v274 = vadd.f32 0.0, %v273
  %v275 = vpop.f32.mrf.mxu0
  %v276 = vadd.f32 0.0, %v275
  %277 = vmatmul.bf16.gmra.mxu0 %v126
  %v278 = vpop.f32.mrf.mxu0
  %v279 = vadd.f32 0.0, %v278
  %v280 = vpop.f32.mrf.mxu0
  %v281 = vadd.f32 0.0, %v280
  %282 = vmatmul.bf16.gmra.mxu0 %v128
  %v283 = vpop.f32.mrf.mxu0
  %v284 = vadd.f32 0.0, %v283
  %v285 = vpop.f32.mrf.mxu0
  %v286 = vadd.f32 0.0, %v285
  %287 = vmatmul.bf16.gmra.mxu0 %v130
  %v288 = vpop.f32.mrf.mxu0
  %v289 = vadd.f32 0.0, %v288
  %v290 = vpop.f32.mrf.mxu0
  %v291 = vadd.f32 0.0, %v290
  %292 = vdwg.mxu0
  %293 = vmatpush.bf16.msra.mxu0 %v227
  %294 = vmatpush.bf16.msra.mxu0 %v226
  %295 = vmatpush.bf16.msra.mxu0 %v225
  %296 = vmatpush.bf16.msra.mxu0 %v224
  %297 = vmatpush.bf16.msra.mxu0 %v223
  %298 = vmatpush.bf16.msra.mxu0 %v222
  %299 = vmatpush.bf16.msra.mxu0 %v221
  %300 = vmatpush.bf16.msra.mxu0 %v220
  %301 = vmatmul.bf16.gmra.mxu0 %v117
  %v302 = vpop.f32.mrf.mxu0
  %v303 = vadd.f32 %v254, %v302
  %v304 = vpop.f32.mrf.mxu0
  %v305 = vadd.f32 %v256, %v304
  %306 = vmatmul.bf16.gmra.mxu0 %v119
  %v307 = vpop.f32.mrf.mxu0
  %v308 = vadd.f32 %v259, %v307
  %v309 = vpop.f32.mrf.mxu0
  %v310 = vadd.f32 %v261, %v309
  %311 = vmatmul.bf16.gmra.mxu0 %v121
  %v312 = vpop.f32.mrf.mxu0
  %v313 = vadd.f32 %v264, %v312
  %v314 = vpop.f32.mrf.mxu0
  %v315 = vadd.f32 %v266, %v314
  %316 = vmatmul.bf16.gmra.mxu0 %v123
  %v317 = vpop.f32.mrf.mxu0
  %v318 = vadd.f32 %v269, %v317
  %v319 = vpop.f32.mrf.mxu0
  %v320 = vadd.f32 %v271, %v319
  %321 = vmatmul.bf16.gmra.mxu0 %v125
  %v322 = vpop.f32.mrf.mxu0
  %v323 = vadd.f32 %v274, %v322
  %v324 = vpop.f32.mrf.mxu0
  %v325 = vadd.f32 %v276, %v324
  %326 = vmatmul.bf16.gmra.mxu0 %v127
  %v327 = vpop.f32.mrf.mxu0
  %v328 = vadd.f32 %v279, %v327
  %v329 = vpop.f32.mrf.mxu0
  %v330 = vadd.f32 %v281, %v329
  %331 = vmatmul.bf16.gmra.mxu0 %v129
  %v332 = vpop.f32.mrf.mxu0
  %v333 = vadd.f32 %v284, %v332
  %v334 = vpop.f32.mrf.mxu0
  %v335 = vadd.f32 %v286, %v334
  %336 = vmatmul.bf16.gmra.mxu0 %v131
  %v337 = vpop.f32.mrf.mxu0
  %v338 = vadd.f32 %v289, %v337
  %v339 = vpop.f32.mrf.mxu0
  %v340 = vadd.f32 %v291, %v339
  %341 = vdwg.mxu0
  %v342 = vpack.c.bf16 %v303, %v303
  %v343 = vpack.c.bf16 %v305, %v305
  %v344 = vpack.c.bf16 %v308, %v308
  %v345 = vpack.c.bf16 %v310, %v310
  %v346 = vpack.c.bf16 %v313, %v313
  %v347 = vpack.c.bf16 %v315, %v315
  %v348 = vpack.c.bf16 %v318, %v318
  %v349 = vpack.c.bf16 %v320, %v320
  %v350 = vpack.c.bf16 %v323, %v323
  %v351 = vpack.c.bf16 %v325, %v325
  %v352 = vpack.c.bf16 %v328, %v328
  %v353 = vpack.c.bf16 %v330, %v330
  %v354 = vpack.c.bf16 %v333, %v333
  %v355 = vpack.c.bf16 %v335, %v335
  %v356 = vpack.c.bf16 %v338, %v338
  %v357 = vpack.c.bf16 %v340, %v340
  %358 = vst [vmem:[%s2] sm:$0xf] %v342
  %359 = vst [vmem:[%s2 + $0x4] sm:$0xf] %v343
  %360 = vst [vmem:[%s2 + $0x8] sm:$0xf] %v344
  %361 = vst [vmem:[%s2 + $0xc] sm:$0xf] %v345
  %362 = vst [vmem:[%s2 + $0x10] sm:$0xf] %v346
  %363 = vst [vmem:[%s2 + $0x14] sm:$0xf] %v347
  %364 = vst [vmem:[%s2 + $0x18] sm:$0xf] %v348
  %365 = vst [vmem:[%s2 + $0x1c] sm:$0xf] %v349
  %366 = vst [vmem:[%s2 + $0x20] sm:$0xf] %v350
  %367 = vst [vmem:[%s2 + $0x24] sm:$0xf] %v351
  %368 = vst [vmem:[%s2 + $0x28] sm:$0xf] %v352
  %369 = vst [vmem:[%s2 + $0x2c] sm:$0xf] %v353
  %370 = vst [vmem:[%s2 + $0x30] sm:$0xf] %v354
  %371 = vst [vmem:[%s2 + $0x34] sm:$0xf] %v355
  %372 = vst [vmem:[%s2 + $0x38] sm:$0xf] %v356
  %373 = vst [vmem:[%s2 + $0x3c] sm:$0xf] %v357
  %v374 = vld [vmem:[%s3] sm:$0x1]
  %v375 = vadd.f32 %v303, %v305
  %v376 = vadd.f32 %v375, %v308
  %v377 = vadd.f32 %v376, %v310
  %v378 = vadd.f32 %v377, %v313
  %v379 = vadd.f32 %v378, %v315
  %v380 = vadd.f32 %v379, %v318
  %v381 = vadd.f32 %v380, %v320
  %v382 = vadd.f32 %v381, %v323
  %v383 = vadd.f32 %v382, %v325
  %v384 = vadd.f32 %v383, %v328
  %v385 = vadd.f32 %v384, %v330
  %v386 = vadd.f32 %v385, %v333
  %v387 = vadd.f32 %v386, %v335
  %v388 = vadd.f32 %v387, %v338
  %v389 = vadd.f32 %v388, %v340
  %v390 = vrot.slane %v389, 4
  %v391 = vadd.f32 %v389, %v390
  %v392 = vrot.slane %v391, 2
  %v393 = vadd.f32 %v391, %v392
  %v394 = vrot.slane %v393, 1
  %v395 = vadd.f32 %v393, %v394
  %v396 = vadd.f32 %v374, %v395
  %397 = vst [vmem:[%s3] sm:$0x1] %v396
  %v398 = vld [vmem:[%s4] sm:$0x1]
  %v399 = vmul.f32 %v303, %v303
  %v400 = vmul.f32 %v305, %v305
  %v401 = vmul.f32 %v308, %v308
  %v402 = vmul.f32 %v310, %v310
  %v403 = vmul.f32 %v313, %v313
  %v404 = vmul.f32 %v315, %v315
  %v405 = vmul.f32 %v318, %v318
  %v406 = vmul.f32 %v320, %v320
  %v407 = vmul.f32 %v323, %v323
  %v408 = vmul.f32 %v325, %v325
  %v409 = vmul.f32 %v328, %v328
  %v410 = vmul.f32 %v330, %v330
  %v411 = vmul.f32 %v333, %v333
  %v412 = vmul.f32 %v335, %v335
  %v413 = vmul.f32 %v338, %v338
  %v414 = vmul.f32 %v340, %v340
  %v415 = vadd.f32 %v399, %v400
  %v416 = vadd.f32 %v415, %v401
  %v417 = vadd.f32 %v416, %v402
  %v418 = vadd.f32 %v417, %v403
  %v419 = vadd.f32 %v418, %v404
  %v420 = vadd.f32 %v419, %v405
  %v421 = vadd.f32 %v420, %v406
  %v422 = vadd.f32 %v421, %v407
  %v423 = vadd.f32 %v422, %v408
  %v424 = vadd.f32 %v423, %v409
  %v425 = vadd.f32 %v424, %v410
  %v426 = vadd.f32 %v425, %v411
  %v427 = vadd.f32 %v426, %v412
  %v428 = vadd.f32 %v427, %v413
  %v429 = vadd.f32 %v428, %v414
  %v430 = vrot.slane %v429, 4
  %v431 = vadd.f32 %v429, %v430
  %v432 = vrot.slane %v431, 2
  %v433 = vadd.f32 %v431, %v432
  %v434 = vrot.slane %v433, 1
  %v435 = vadd.f32 %v433, %v434
  %v436 = vadd.f32 %v398, %v435
  %437 = vst [vmem:[%s4] sm:$0x1] %v436
  // Predicated region
  $region14: #{discriminator_forward.13} parent=0 // pred_check
    _
  $region15: #{discriminator_forward.13} parent=0 // pred_check_branch
    %439 = sbr.rel (0) target = $region17
  $region16: #{discriminator_forward.13} parent=0 // pred_region
    _
  $region17: #{discriminator_forward.13} parent=0 // pred_fallthru
    _
  // Predicated region
  $region18: #{discriminator_forward.13} parent=0 // pred_check
    _
  $region19: #{discriminator_forward.13} parent=0 // pred_check_branch
    %441 = sbr.rel (0) target = $region21
  $region20: #{discriminator_forward.13} parent=0 // pred_region
    _
  $region21: #{discriminator_forward.13} parent=0 // pred_fallthru
    _
  // Predicated region
  $region22: #{discriminator_forward.13} parent=0 // pred_check
    _
  $region23: #{discriminator_forward.13} parent=0 // pred_check_branch
    %443 = sbr.rel (0) target = $region25
  $region24: #{discriminator_forward.13} parent=0 // pred_region
    _
  $region25: #{discriminator_forward.13} parent=0 // pred_fallthru
    _
  // Predicated region
  $region26: #{discriminator_forward.13} parent=0 // pred_check
    _
  $region27: #{discriminator_forward.13} parent=0 // pred_check_branch
    %445 = sbr.rel (0) target = $region29
  $region28: #{discriminator_forward.13} parent=0 // pred_region
    _
  $region29: #{discriminator_forward.13} parent=0 // pred_fallthru
    _
  // Predicated region
  $region30: #{discriminator_forward.13} parent=0 // pred_check
    _
  $region31: #{discriminator_forward.13} parent=0 // pred_check_branch
    %447 = sbr.rel (0) target = $region33
  $region32: #{discriminator_forward.13} parent=0 // pred_region
    _
  $region33: #{discriminator_forward.13} parent=0 // pred_fallthru
    _
  // Predicated region
  $region34: #{discriminator_forward.13} parent=0 // pred_check
    _
  $region35: #{discriminator_forward.13} parent=0 // pred_check_branch
    %449 = sbr.rel (0) target = $region37
  $region36: #{discriminator_forward.13} parent=0 // pred_region
    _
  $region37: #{discriminator_forward.13} parent=0 // pred_fallthru
    _

// kernel: discriminator_forward.14
$region0: #{discriminator_forward.14}
  #allocation0 [shape = 'u32[]', space=smem, size = 0x4, offset = 0x4, fixed_abs, tag = 'smem constant byte address 0x4 - core index']
  #allocation1 [shape = 'u32[72,128]{1,0:T(1,128)}', space=vmem, size = 0x9000, scoped, tag = 'internal scratch']
  %s0 = inlined_call_operand.vmem [shape: bf16[128,128], index: 0, kind: input, shape index: {}]
  %s1 = inlined_call_operand.vmem [shape: f32[1,128], index: 1, kind: input, shape index: {}]
  %s2 = inlined_call_operand.vmem [shape: f32[1,128], index: 2, kind: input, shape index: {}]
  %s3 = inlined_call_operand.vmem [shape: f32[1,128], index: 3, kind: input, shape index: {}]
  %s4 = inlined_call_operand.vmem [shape: f32[1,128], index: 4, kind: input, shape index: {}]
  %s5 = inlined_call_operand.vmem [shape: bf16[128,128], index: 5, kind: output, shape index: {}]
  %s6 = sld [smem:[#allocation0]]
  $region30: #{discriminator_forward.14} parent=0
    _
  %s8 = ssub.s32 1, %s6
  %s9 = scalar_select 0, %s8, %s6
  // Predicated region
  $region2: #{discriminator_forward.14} parent=0 // pred_check
    _
  $region3: #{discriminator_forward.14} parent=0 // pred_check_branch
    %11 = sbr.rel (0) target = $region5
  $region4: #{discriminator_forward.14} parent=0 // pred_region
    _
  $region5: #{discriminator_forward.14} parent=0 // pred_fallthru
    _
  // Predicated region
  $region6: #{discriminator_forward.14} parent=0 // pred_check
    _
  $region7: #{discriminator_forward.14} parent=0 // pred_check_branch
    %13 = sbr.rel (0) target = $region9
  $region8: #{discriminator_forward.14} parent=0 // pred_region
    _
  $region9: #{discriminator_forward.14} parent=0 // pred_fallthru
    _
  // Predicated region
  $region10: #{discriminator_forward.14} parent=0 // pred_check
    _
  $region11: #{discriminator_forward.14} parent=0 // pred_check_branch
    %15 = sbr.rel (0) target = $region13
  $region12: #{discriminator_forward.14} parent=0 // pred_region
    _
  $region13: #{discriminator_forward.14} parent=0 // pred_fallthru
    _
  // Predicated region
  $region14: #{discriminator_forward.14} parent=0 // pred_check
    _
  $region15: #{discriminator_forward.14} parent=0 // pred_check_branch
    %17 = sbr.rel (0) target = $region17
  $region16: #{discriminator_forward.14} parent=0 // pred_region
    _
  $region17: #{discriminator_forward.14} parent=0 // pred_fallthru
    _
  // Predicated region
  $region18: #{discriminator_forward.14} parent=0 // pred_check
    _
  $region19: #{discriminator_forward.14} parent=0 // pred_check_branch
    %19 = sbr.rel (0) target = $region21
  $region20: #{discriminator_forward.14} parent=0 // pred_region
    _
  $region21: #{discriminator_forward.14} parent=0 // pred_fallthru
    _
  %v20 = vld [vmem:[%s1] sm:$0x1]
  %v21 = vmul.f32 %v20, 0.0078125
  %v22 = vld [vmem:[%s2] sm:$0x1]
  %v23 = vmul.f32 %v22, 0.0078125
  %v24 = vmul.f32 %v21, %v21
  %v25 = vsub.f32 %v23, %v24
  %v26 = vmax.f32 %v25, 0.0
  %v27 = vld [vmem:[%s3] sm:$0x1]
  %v28 = vadd.f32 %v26, 1e-05
  %v29 = vrsqrt.pop %v28
  %v30 = vmul.f32 %v29, %v28
  %v31 = vmul.f32 %v30, %v29
  %v32 = vmul.f32 0.5, %v31
  %v33 = vsub.f32 1.5, %v32
  %v34 = vmul.f32 %v29, %v33
  %vm35 = vweird.f32 %v28
  %vm36 = vweird.f32 %v29
  %vm37 = vmor %vm35, %vm36
  %v38 = vsel %vm37, %v29, %v34
  %v39 = vmul.f32 %v27, %v38
  %v40 = vld [vmem:[%s4] sm:$0x1]
  %v41 = vmul.f32 %v21, %v39
  %v42 = vsub.f32 %v40, %v41
  %v43 = vld [vmem:[%s0] sm:$0xf]
  %v44 = vld [vmem:[%s0 + $0x4] sm:$0xf]
  %v45 = vld [vmem:[%s0 + $0x8] sm:$0xf]
  %v46 = vld [vmem:[%s0 + $0xc] sm:$0xf]
  %v47 = vld [vmem:[%s0 + $0x10] sm:$0xf]
  %v48 = vld [vmem:[%s0 + $0x14] sm:$0xf]
  %v49 = vld [vmem:[%s0 + $0x18] sm:$0xf]
  %v50 = vld [vmem:[%s0 + $0x1c] sm:$0xf]
  %v51 = vld [vmem:[%s0 + $0x20] sm:$0xf]
  %v52 = vld [vmem:[%s0 + $0x24] sm:$0xf]
  %v53 = vld [vmem:[%s0 + $0x28] sm:$0xf]
  %v54 = vld [vmem:[%s0 + $0x2c] sm:$0xf]
  %v55 = vld [vmem:[%s0 + $0x30] sm:$0xf]
  %v56 = vld [vmem:[%s0 + $0x34] sm:$0xf]
  %v57 = vld [vmem:[%s0 + $0x38] sm:$0xf]
  %v58 = vld [vmem:[%s0 + $0x3c] sm:$0xf]
  %v59 = vunpack.c.l.bf16 %v43
  %v60 = vunpack.c.l.bf16 %v44
  %v61 = vunpack.c.l.bf16 %v45
  %v62 = vunpack.c.l.bf16 %v46
  %v63 = vunpack.c.l.bf16 %v47
  %v64 = vunpack.c.l.bf16 %v48
  %v65 = vunpack.c.l.bf16 %v49
  %v66 = vunpack.c.l.bf16 %v50
  %v67 = vunpack.c.l.bf16 %v51
  %v68 = vunpack.c.l.bf16 %v52
  %v69 = vunpack.c.l.bf16 %v53
  %v70 = vunpack.c.l.bf16 %v54
  %v71 = vunpack.c.l.bf16 %v55
  %v72 = vunpack.c.l.bf16 %v56
  %v73 = vunpack.c.l.bf16 %v57
  %v74 = vunpack.c.l.bf16 %v58
  %v76 = vperm.slane %v39, 0
  %v78 = vmul.f32 %v59, %v76
  %v79 = vmul.f32 %v60, %v76
  %v80 = vmul.f32 %v61, %v76
  %v81 = vmul.f32 %v62, %v76
  %v82 = vmul.f32 %v63, %v76
  %v83 = vmul.f32 %v64, %v76
  %v84 = vmul.f32 %v65, %v76
  %v85 = vmul.f32 %v66, %v76
  %v86 = vmul.f32 %v67, %v76
  %v87 = vmul.f32 %v68, %v76
  %v88 = vmul.f32 %v69, %v76
  %v89 = vmul.f32 %v70, %v76
  %v90 = vmul.f32 %v71, %v76
  %v91 = vmul.f32 %v72, %v76
  %v92 = vmul.f32 %v73, %v76
  %v93 = vmul.f32 %v74, %v76
  %v95 = vperm.slane %v42, 0
  %v97 = vadd.f32 %v78, %v95
  %v98 = vadd.f32 %v79, %v95
  %v99 = vadd.f32 %v80, %v95
  %v100 = vadd.f32 %v81, %v95
  %v101 = vadd.f32 %v82, %v95
  %v102 = vadd.f32 %v83, %v95
  %v103 = vadd.f32 %v84, %v95
  %v104 = vadd.f32 %v85, %v95
  %v105 = vadd.f32 %v86, %v95
  %v106 = vadd.f32 %v87, %v95
  %v107 = vadd.f32 %v88, %v95
  %v108 = vadd.f32 %v89, %v95
  %v109 = vadd.f32 %v90, %v95
  %v110 = vadd.f32 %v91, %v95
  %v111 = vadd.f32 %v92, %v95
  %v112 = vadd.f32 %v93, %v95
  %vm113 = vcmp.ge.f32.partialorder %v97, 0.0
  %vm114 = vcmp.ge.f32.partialorder %v98, 0.0
  %vm115 = vcmp.ge.f32.partialorder %v99, 0.0
  %vm116 = vcmp.ge.f32.partialorder %v100, 0.0
  %vm117 = vcmp.ge.f32.partialorder %v101, 0.0
  %vm118 = vcmp.ge.f32.partialorder %v102, 0.0
  %vm119 = vcmp.ge.f32.partialorder %v103, 0.0
  %vm120 = vcmp.ge.f32.partialorder %v104, 0.0
  %vm121 = vcmp.ge.f32.partialorder %v105, 0.0
  %vm122 = vcmp.ge.f32.partialorder %v106, 0.0
  %vm123 = vcmp.ge.f32.partialorder %v107, 0.0
  %vm124 = vcmp.ge.f32.partialorder %v108, 0.0
  %vm125 = vcmp.ge.f32.partialorder %v109, 0.0
  %vm126 = vcmp.ge.f32.partialorder %v110, 0.0
  %vm127 = vcmp.ge.f32.partialorder %v111, 0.0
  %vm128 = vcmp.ge.f32.partialorder %v112, 0.0
  %v129 = vmul.f32 %v97, 0.2
  %v130 = vmul.f32 %v98, 0.2
  %v131 = vmul.f32 %v99, 0.2
  %v132 = vmul.f32 %v100, 0.2
  %v133 = vmul.f32 %v101, 0.2
  %v134 = vmul.f32 %v102, 0.2
  %v135 = vmul.f32 %v103, 0.2
  %v136 = vmul.f32 %v104, 0.2
  %v137 = vmul.f32 %v105, 0.2
  %v138 = vmul.f32 %v106, 0.2
  %v139 = vmul.f32 %v107, 0.2
  %v140 = vmul.f32 %v108, 0.2
  %v141 = vmul.f32 %v109, 0.2
  %v142 = vmul.f32 %v110, 0.2
  %v143 = vmul.f32 %v111, 0.2
  %v144 = vmul.f32 %v112, 0.2
  %v145 = vsel %vm113, %v97, %v129
  %v146 = vsel %vm114, %v98, %v130
  %v147 = vsel %vm115, %v99, %v131
  %v148 = vsel %vm116, %v100, %v132
  %v149 = vsel %vm117, %v101, %v133
  %v150 = vsel %vm118, %v102, %v134
  %v151 = vsel %vm119, %v103, %v135
  %v152 = vsel %vm120, %v104, %v136
  %v153 = vsel %vm121, %v105, %v137
  %v154 = vsel %vm122, %v106, %v138
  %v155 = vsel %vm123, %v107, %v139
  %v156 = vsel %vm124, %v108, %v140
  %v157 = vsel %vm125, %v109, %v141
  %v158 = vsel %vm126, %v110, %v142
  %v159 = vsel %vm127, %v111, %v143
  %v160 = vsel %vm128, %v112, %v144
  %v161 = vpack.c.bf16 %v145, %v145
  %v162 = vpack.c.bf16 %v146, %v146
  %v163 = vpack.c.bf16 %v147, %v147
  %v164 = vpack.c.bf16 %v148, %v148
  %v165 = vpack.c.bf16 %v149, %v149
  %v166 = vpack.c.bf16 %v150, %v150
  %v167 = vpack.c.bf16 %v151, %v151
  %v168 = vpack.c.bf16 %v152, %v152
  %v169 = vpack.c.bf16 %v153, %v153
  %v170 = vpack.c.bf16 %v154, %v154
  %v171 = vpack.c.bf16 %v155, %v155
  %v172 = vpack.c.bf16 %v156, %v156
  %v173 = vpack.c.bf16 %v157, %v157
  %v174 = vpack.c.bf16 %v158, %v158
  %v175 = vpack.c.bf16 %v159, %v159
  %v176 = vpack.c.bf16 %v160, %v160
  %177 = vst [vmem:[%s5] sm:$0xf] %v161
  %178 = vst [vmem:[%s5 + $0x4] sm:$0xf] %v162
  %179 = vst [vmem:[%s5 + $0x8] sm:$0xf] %v163
  %180 = vst [vmem:[%s5 + $0xc] sm:$0xf] %v164
  %181 = vst [vmem:[%s5 + $0x10] sm:$0xf] %v165
  %182 = vst [vmem:[%s5 + $0x14] sm:$0xf] %v166
  %183 = vst [vmem:[%s5 + $0x18] sm:$0xf] %v167
  %184 = vst [vmem:[%s5 + $0x1c] sm:$0xf] %v168
  %185 = vst [vmem:[%s5 + $0x20] sm:$0xf] %v169
  %186 = vst [vmem:[%s5 + $0x24] sm:$0xf] %v170
  %187 = vst [vmem:[%s5 + $0x28] sm:$0xf] %v171
  %188 = vst [vmem:[%s5 + $0x2c] sm:$0xf] %v172
  %189 = vst [vmem:[%s5 + $0x30] sm:$0xf] %v173
  %190 = vst [vmem:[%s5 + $0x34] sm:$0xf] %v174
  %191 = vst [vmem:[%s5 + $0x38] sm:$0xf] %v175
  %192 = vst [vmem:[%s5 + $0x3c] sm:$0xf] %v176
  // Predicated region
  $region22: #{discriminator_forward.14} parent=0 // pred_check
    _
  $region23: #{discriminator_forward.14} parent=0 // pred_check_branch
    %194 = sbr.rel (0) target = $region25
  $region24: #{discriminator_forward.14} parent=0 // pred_region
    _
  $region25: #{discriminator_forward.14} parent=0 // pred_fallthru
    _
  // Predicated region
  $region26: #{discriminator_forward.14} parent=0 // pred_check
    _
  $region27: #{discriminator_forward.14} parent=0 // pred_check_branch
    %196 = sbr.rel (0) target = $region29
  $region28: #{discriminator_forward.14} parent=0 // pred_region
    _
  $region29: #{discriminator_forward.14} parent=0 // pred_fallthru
    _

// kernel: discriminator_forward.16
$region0: #{discriminator_forward.16}
  #allocation0 [shape = 'u32[]', space=smem, size = 0x4, offset = 0x4, fixed_abs, tag = 'smem constant byte address 0x4 - core index']
  #allocation1 [shape = 'u32[72,128]{1,0:T(1,128)}', space=vmem, size = 0x9000, scoped, tag = 'internal scratch']
  %s0 = inlined_call_operand.vmem [shape: bf16[32,128], index: 0, kind: input, shape index: {}]
  %s1 = inlined_call_operand.vmem [shape: f32[1,128], index: 1, kind: input, shape index: {}]
  %s2 = inlined_call_operand.vmem [shape: f32[1,128], index: 2, kind: input, shape index: {}]
  %s3 = inlined_call_operand.vmem [shape: f32[1,128], index: 3, kind: input, shape index: {}]
  %s4 = inlined_call_operand.vmem [shape: f32[1,128], index: 4, kind: input, shape index: {}]
  %s5 = inlined_call_operand.vmem [shape: bf16[32,128], index: 5, kind: output, shape index: {}]
  %s6 = sld [smem:[#allocation0]]
  $region30: #{discriminator_forward.16} parent=0
    _
  %s8 = ssub.s32 1, %s6
  %s9 = scalar_select 0, %s8, %s6
  // Predicated region
  $region2: #{discriminator_forward.16} parent=0 // pred_check
    _
  $region3: #{discriminator_forward.16} parent=0 // pred_check_branch
    %11 = sbr.rel (0) target = $region5
  $region4: #{discriminator_forward.16} parent=0 // pred_region
    _
  $region5: #{discriminator_forward.16} parent=0 // pred_fallthru
    _
  // Predicated region
  $region6: #{discriminator_forward.16} parent=0 // pred_check
    _
  $region7: #{discriminator_forward.16} parent=0 // pred_check_branch
    %13 = sbr.rel (0) target = $region9
  $region8: #{discriminator_forward.16} parent=0 // pred_region
    _
  $region9: #{discriminator_forward.16} parent=0 // pred_fallthru
    _
  // Predicated region
  $region10: #{discriminator_forward.16} parent=0 // pred_check
    _
  $region11: #{discriminator_forward.16} parent=0 // pred_check_branch
    %15 = sbr.rel (0) target = $region13
  $region12: #{discriminator_forward.16} parent=0 // pred_region
    _
  $region13: #{discriminator_forward.16} parent=0 // pred_fallthru
    _
  // Predicated region
  $region14: #{discriminator_forward.16} parent=0 // pred_check
    _
  $region15: #{discriminator_forward.16} parent=0 // pred_check_branch
    %17 = sbr.rel (0) target = $region17
  $region16: #{discriminator_forward.16} parent=0 // pred_region
    _
  $region17: #{discriminator_forward.16} parent=0 // pred_fallthru
    _
  // Predicated region
  $region18: #{discriminator_forward.16} parent=0 // pred_check
    _
  $region19: #{discriminator_forward.16} parent=0 // pred_check_branch
    %19 = sbr.rel (0) target = $region21
  $region20: #{discriminator_forward.16} parent=0 // pred_region
    _
  $region21: #{discriminator_forward.16} parent=0 // pred_fallthru
    _
  %v20 = vld [vmem:[%s1] sm:$0x1]
  %v21 = vmul.f32 %v20, 0.03125
  %v22 = vld [vmem:[%s2] sm:$0x1]
  %v23 = vmul.f32 %v22, 0.03125
  %v24 = vmul.f32 %v21, %v21
  %v25 = vsub.f32 %v23, %v24
  %v26 = vmax.f32 %v25, 0.0
  %v27 = vld [vmem:[%s3] sm:$0x1]
  %v28 = vadd.f32 %v26, 1e-05
  %v29 = vrsqrt.pop %v28
  %v30 = vmul.f32 %v29, %v28
  %v31 = vmul.f32 %v30, %v29
  %v32 = vmul.f32 0.5, %v31
  %v33 = vsub.f32 1.5, %v32
  %v34 = vmul.f32 %v29, %v33
  %vm35 = vweird.f32 %v28
  %vm36 = vweird.f32 %v29
  %vm37 = vmor %vm35, %vm36
  %v38 = vsel %vm37, %v29, %v34
  %v39 = vmul.f32 %v27, %v38
  %v40 = vld [vmem:[%s4] sm:$0x1]
  %v41 = vmul.f32 %v21, %v39
  %v42 = vsub.f32 %v40, %v41
  %v43 = vld [vmem:[%s0] sm:$0xf]
  %v44 = vld [vmem:[%s0 + $0x4] sm:$0xf]
  %v45 = vld [vmem:[%s0 + $0x8] sm:$0xf]
  %v46 = vld [vmem:[%s0 + $0xc] sm:$0xf]
  %v47 = vunpack.c.l.bf16 %v43
  %v48 = vunpack.c.l.bf16 %v44
  %v49 = vunpack.c.l.bf16 %v45
  %v50 = vunpack.c.l.bf16 %v46
  %v52 = vperm.slane %v39, 0
  %v54 = vmul.f32 %v47, %v52
  %v55 = vmul.f32 %v48, %v52
  %v56 = vmul.f32 %v49, %v52
  %v57 = vmul.f32 %v50, %v52
  %v59 = vperm.slane %v42, 0
  %v61 = vadd.f32 %v54, %v59
  %v62 = vadd.f32 %v55, %v59
  %v63 = vadd.f32 %v56, %v59
  %v64 = vadd.f32 %v57, %v59
  %vm65 = vcmp.ge.f32.partialorder %v61, 0.0
  %vm66 = vcmp.ge.f32.partialorder %v62, 0.0
  %vm67 = vcmp.ge.f32.partialorder %v63, 0.0
  %vm68 = vcmp.ge.f32.partialorder %v64, 0.0
  %v69 = vmul.f32 %v61, 0.2
  %v70 = vmul.f32 %v62, 0.2
  %v71 = vmul.f32 %v63, 0.2
  %v72 = vmul.f32 %v64, 0.2
  %v73 = vsel %vm65, %v61, %v69
  %v74 = vsel %vm66, %v62, %v70
  %v75 = vsel %vm67, %v63, %v71
  %v76 = vsel %vm68, %v64, %v72
  %v77 = vpack.c.bf16 %v73, %v73
  %v78 = vpack.c.bf16 %v74, %v74
  %v79 = vpack.c.bf16 %v75, %v75
  %v80 = vpack.c.bf16 %v76, %v76
  %81 = vst [vmem:[%s5] sm:$0xf] %v77
  %82 = vst [vmem:[%s5 + $0x4] sm:$0xf] %v78
  %83 = vst [vmem:[%s5 + $0x8] sm:$0xf] %v79
  %84 = vst [vmem:[%s5 + $0xc] sm:$0xf] %v80
  // Predicated region
  $region22: #{discriminator_forward.16} parent=0 // pred_check
    _
  $region23: #{discriminator_forward.16} parent=0 // pred_check_branch
    %86 = sbr.rel (0) target = $region25
  $region24: #{discriminator_forward.16} parent=0 // pred_region
    _
  $region25: #{discriminator_forward.16} parent=0 // pred_fallthru
    _
  // Predicated region
  $region26: #{discriminator_forward.16} parent=0 // pred_check
    _
  $region27: #{discriminator_forward.16} parent=0 // pred_check_branch
    %88 = sbr.rel (0) target = $region29
  $region28: #{discriminator_forward.16} parent=0 // pred_region
    _
  $region29: #{discriminator_forward.16} parent=0 // pred_fallthru
    _

// kernel: discriminator_forward.15
$region0: #{discriminator_forward.15}
  #allocation0 [shape = 'u32[]', space=smem, size = 0x4, offset = 0x4, fixed_abs, tag = 'smem constant byte address 0x4 - core index']
  #allocation1 [shape = 'u32[72,128]{1,0:T(1,128)}', space=vmem, size = 0x9000, scoped, tag = 'internal scratch']
  %s0 = inlined_call_operand.vmem [shape: bf16[32,512], index: 0, kind: input, shape index: {}]
  %s1 = inlined_call_operand.vmem [shape: bf16[512,128], index: 1, kind: input, shape index: {}]
  %s2 = inlined_call_operand.vmem [shape: bf16[32,128], index: 2, kind: output, shape index: {0}]
  %s3 = inlined_call_operand.vmem [shape: f32[1,128], index: 3, kind: output, shape index: {1}]
  %s4 = inlined_call_operand.vmem [shape: f32[1,128], index: 4, kind: output, shape index: {2}]
  %5 = xla_tuple %s2, %s3, %s4
  %s6 = sld [smem:[#allocation0]]
  $region38: #{discriminator_forward.15} parent=0
    _
  %s8 = ssub.s32 1, %s6
  %s9 = scalar_select 0, %s8, %s6
  // Predicated region
  $region2: #{discriminator_forward.15} parent=0 // pred_check
    _
  $region3: #{discriminator_forward.15} parent=0 // pred_check_branch
    %11 = sbr.rel (0) target = $region5
  $region4: #{discriminator_forward.15} parent=0 // pred_region
    _
  $region5: #{discriminator_forward.15} parent=0 // pred_fallthru
    _
  // Predicated region
  $region6: #{discriminator_forward.15} parent=0 // pred_check
    _
  $region7: #{discriminator_forward.15} parent=0 // pred_check_branch
    %13 = sbr.rel (0) target = $region9
  $region8: #{discriminator_forward.15} parent=0 // pred_region
    _
  $region9: #{discriminator_forward.15} parent=0 // pred_fallthru
    _
  %p14 = scmp.eq.s32.totalorder 0, 0
  // Predicated region
  $region10: #{discriminator_forward.15} parent=0 // pred_check
    %p15 = pneg %p14
  $region11: #{discriminator_forward.15} parent=0 // pred_check_branch
    %17 = sbr.rel (%p15) target = $region13
  $region12: #{discriminator_forward.15} parent=0 // pred_region
    %18 = vst [vmem:[%s3] sm:$0x1] 0.0
    %19 = vst [vmem:[%s4] sm:$0x1] 0.0
  $region13: #{discriminator_forward.15} parent=0 // pred_fallthru
    _
  %v20 = vld [vmem:[%s0] sm:$0xff]
  %v21 = vld [vmem:[%s0 + $0x8] sm:$0xff]
  %v22 = vld [vmem:[%s0 + $0x10] sm:$0xff]
  %v23 = vld [vmem:[%s0 + $0x18] sm:$0xff]
  %v24 = vld [vmem:[%s0 + $0x20] sm:$0xff]
  %v25 = vld [vmem:[%s0 + $0x28] sm:$0xff]
  %v26 = vld [vmem:[%s0 + $0x30] sm:$0xff]
  %v27 = vld [vmem:[%s0 + $0x38] sm:$0xff]
  %v28 = vld [vmem:[%s1] sm:$0xf]
  %v29 = vld [vmem:[%s1 + $0x4] sm:$0xf]
  %v30 = vld [vmem:[%s1 + $0x8] sm:$0xf]
  %v31 = vld [vmem:[%s1 + $0xc] sm:$0xf]
  %v32 = vld [vmem:[%s1 + $0x10] sm:$0xf]
  %v33 = vld [vmem:[%s1 + $0x14] sm:$0xf]
  %v34 = vld [vmem:[%s1 + $0x18] sm:$0xf]
  %v35 = vld [vmem:[%s1 + $0x1c] sm:$0xf]
  %v36 = vld [vmem:[%s1 + $0x20] sm:$0xf]
  %v37 = vld [vmem:[%s1 + $0x24] sm:$0xf]
  %v38 = vld [vmem:[%s1 + $0x28] sm:$0xf]
  %v39 = vld [vmem:[%s1 + $0x2c] sm:$0xf]
  %v40 = vld [vmem:[%s1 + $0x30] sm:$0xf]
  %v41 = vld [vmem:[%s1 + $0x34] sm:$0xf]
  %v42 = vld [vmem:[%s1 + $0x38] sm:$0xf]
  %v43 = vld [vmem:[%s1 + $0x3c] sm:$0xf]
  %v44 = vld [vmem:[%s1 + $0x40] sm:$0xf]
  %v45 = vld [vmem:[%s1 + $0x44] sm:$0xf]
  %v46 = vld [vmem:[%s1 + $0x48] sm:$0xf]
  %v47 = vld [vmem:[%s1 + $0x4c] sm:$0xf]
  %v48 = vld [vmem:[%s1 + $0x50] sm:$0xf]
  %v49 = vld [vmem:[%s1 + $0x54] sm:$0xf]
  %v50 = vld [vmem:[%s1 + $0x58] sm:$0xf]
  %v51 = vld [vmem:[%s1 + $0x5c] sm:$0xf]
  %v52 = vld [vmem:[%s1 + $0x60] sm:$0xf]
  %v53 = vld [vmem:[%s1 + $0x64] sm:$0xf]
  %v54 = vld [vmem:[%s1 + $0x68] sm:$0xf]
  %v55 = vld [vmem:[%s1 + $0x6c] sm:$0xf]
  %v56 = vld [vmem:[%s1 + $0x70] sm:$0xf]
  %v57 = vld [vmem:[%s1 + $0x74] sm:$0xf]
  %v58 = vld [vmem:[%s1 + $0x78] sm:$0xf]
  %v59 = vld [vmem:[%s1 + $0x7c] sm:$0xf]
  %v60 = vld [vmem:[%s1 + $0x80] sm:$0xf]
  %v61 = vld [vmem:[%s1 + $0x84] sm:$0xf]
  %v62 = vld [vmem:[%s1 + $0x88] sm:$0xf]
  %v63 = vld [vmem:[%s1 + $0x8c] sm:$0xf]
  %v64 = vld [vmem:[%s1 + $0x90] sm:$0xf]
  %v65 = vld [vmem:[%s1 + $0x94] sm:$0xf]
  %v66 = vld [vmem:[%s1 + $0x98] sm:$0xf]
  %v67 = vld [vmem:[%s1 + $0x9c] sm:$0xf]
  %v68 = vld [vmem:[%s1 + $0xa0] sm:$0xf]
  %v69 = vld [vmem:[%s1 + $0xa4] sm:$0xf]
  %v70 = vld [vmem:[%s1 + $0xa8] sm:$0xf]
  %v71 = vld [vmem:[%s1 + $0xac] sm:$0xf]
  %v72 = vld [vmem:[%s1 + $0xb0] sm:$0xf]
  %v73 = vld [vmem:[%s1 + $0xb4] sm:$0xf]
  %v74 = vld [vmem:[%s1 + $0xb8] sm:$0xf]
  %v75 = vld [vmem:[%s1 + $0xbc] sm:$0xf]
  %v76 = vld [vmem:[%s1 + $0xc0] sm:$0xf]
  %v77 = vld [vmem:[%s1 + $0xc4] sm:$0xf]
  %v78 = vld [vmem:[%s1 + $0xc8] sm:$0xf]
  %v79 = vld [vmem:[%s1 + $0xcc] sm:$0xf]
  %v80 = vld [vmem:[%s1 + $0xd0] sm:$0xf]
  %v81 = vld [vmem:[%s1 + $0xd4] sm:$0xf]
  %v82 = vld [vmem:[%s1 + $0xd8] sm:$0xf]
  %v83 = vld [vmem:[%s1 + $0xdc] sm:$0xf]
  %v84 = vld [vmem:[%s1 + $0xe0] sm:$0xf]
  %v85 = vld [vmem:[%s1 + $0xe4] sm:$0xf]
  %v86 = vld [vmem:[%s1 + $0xe8] sm:$0xf]
  %v87 = vld [vmem:[%s1 + $0xec] sm:$0xf]
  %v88 = vld [vmem:[%s1 + $0xf0] sm:$0xf]
  %v89 = vld [vmem:[%s1 + $0xf4] sm:$0xf]
  %v90 = vld [vmem:[%s1 + $0xf8] sm:$0xf]
  %v91 = vld [vmem:[%s1 + $0xfc] sm:$0xf]
  %v100 = vunpack.c.l.b16 %v20
  %v101 = vunpack.c.h.b16 %v20
  %v102 = vunpack.c.l.b16 %v21
  %v103 = vunpack.c.h.b16 %v21
  %v104 = vunpack.c.l.b16 %v22
  %v105 = vunpack.c.h.b16 %v22
  %v106 = vunpack.c.l.b16 %v23
  %v107 = vunpack.c.h.b16 %v23
  %v108 = vunpack.c.l.b16 %v24
  %v109 = vunpack.c.h.b16 %v24
  %v110 = vunpack.c.l.b16 %v25
  %v111 = vunpack.c.h.b16 %v25
  %v112 = vunpack.c.l.b16 %v26
  %v113 = vunpack.c.h.b16 %v26
  %v114 = vunpack.c.l.b16 %v27
  %v115 = vunpack.c.h.b16 %v27
  %v116 = vpack.c.b16 %v104, %v100
  %v117 = vpack.c.b16 %v105, %v101
  %v118 = vpack.c.b16 %v106, %v102
  %v119 = vpack.c.b16 %v107, %v103
  %v120 = vpack.c.b16 %v112, %v108
  %v121 = vpack.c.b16 %v113, %v109
  %v122 = vpack.c.b16 %v114, %v110
  %v123 = vpack.c.b16 %v115, %v111
  %v196 = vunpack.c.l.b16 %v28
  %v197 = vunpack.c.l.b16 %v29
  %v198 = vunpack.c.l.b16 %v30
  %v199 = vunpack.c.l.b16 %v31
  %v200 = vunpack.c.l.b16 %v32
  %v201 = vunpack.c.l.b16 %v33
  %v202 = vunpack.c.l.b16 %v34
  %v203 = vunpack.c.l.b16 %v35
  %v204 = vunpack.c.l.b16 %v36
  %v205 = vunpack.c.l.b16 %v37
  %v206 = vunpack.c.l.b16 %v38
  %v207 = vunpack.c.l.b16 %v39
  %v208 = vunpack.c.l.b16 %v40
  %v209 = vunpack.c.l.b16 %v41
  %v210 = vunpack.c.l.b16 %v42
  %v211 = vunpack.c.l.b16 %v43
  %v212 = vunpack.c.l.b16 %v44
  %v213 = vunpack.c.l.b16 %v45
  %v214 = vunpack.c.l.b16 %v46
  %v215 = vunpack.c.l.b16 %v47
  %v216 = vunpack.c.l.b16 %v48
  %v217 = vunpack.c.l.b16 %v49
  %v218 = vunpack.c.l.b16 %v50
  %v219 = vunpack.c.l.b16 %v51
  %v220 = vunpack.c.l.b16 %v52
  %v221 = vunpack.c.l.b16 %v53
  %v222 = vunpack.c.l.b16 %v54
  %v223 = vunpack.c.l.b16 %v55
  %v224 = vunpack.c.l.b16 %v56
  %v225 = vunpack.c.l.b16 %v57
  %v226 = vunpack.c.l.b16 %v58
  %v227 = vunpack.c.l.b16 %v59
  %v228 = vunpack.c.l.b16 %v60
  %v229 = vunpack.c.l.b16 %v61
  %v230 = vunpack.c.l.b16 %v62
  %v231 = vunpack.c.l.b16 %v63
  %v232 = vunpack.c.l.b16 %v64
  %v233 = vunpack.c.l.b16 %v65
  %v234 = vunpack.c.l.b16 %v66
  %v235 = vunpack.c.l.b16 %v67
  %v236 = vunpack.c.l.b16 %v68
  %v237 = vunpack.c.l.b16 %v69
  %v238 = vunpack.c.l.b16 %v70
  %v239 = vunpack.c.l.b16 %v71
  %v240 = vunpack.c.l.b16 %v72
  %v241 = vunpack.c.l.b16 %v73
  %v242 = vunpack.c.l.b16 %v74
  %v243 = vunpack.c.l.b16 %v75
  %v244 = vunpack.c.l.b16 %v76
  %v245 = vunpack.c.l.b16 %v77
  %v246 = vunpack.c.l.b16 %v78
  %v247 = vunpack.c.l.b16 %v79
  %v248 = vunpack.c.l.b16 %v80
  %v249 = vunpack.c.l.b16 %v81
  %v250 = vunpack.c.l.b16 %v82
  %v251 = vunpack.c.l.b16 %v83
  %v252 = vunpack.c.l.b16 %v84
  %v253 = vunpack.c.l.b16 %v85
  %v254 = vunpack.c.l.b16 %v86
  %v255 = vunpack.c.l.b16 %v87
  %v256 = vunpack.c.l.b16 %v88
  %v257 = vunpack.c.l.b16 %v89
  %v258 = vunpack.c.l.b16 %v90
  %v259 = vunpack.c.l.b16 %v91
  %v260 = vpack.c.b16 %v197, %v196
  %v261 = vpack.c.b16 %v199, %v198
  %v262 = vpack.c.b16 %v201, %v200
  %v263 = vpack.c.b16 %v203, %v202
  %v264 = vpack.c.b16 %v205, %v204
  %v265 = vpack.c.b16 %v207, %v206
  %v266 = vpack.c.b16 %v209, %v208
  %v267 = vpack.c.b16 %v211, %v210
  %v268 = vpack.c.b16 %v213, %v212
  %v269 = vpack.c.b16 %v215, %v214
  %v270 = vpack.c.b16 %v217, %v216
  %v271 = vpack.c.b16 %v219, %v218
  %v272 = vpack.c.b16 %v221, %v220
  %v273 = vpack.c.b16 %v223, %v222
  %v274 = vpack.c.b16 %v225, %v224
  %v275 = vpack.c.b16 %v227, %v226
  %v276 = vpack.c.b16 %v229, %v228
  %v277 = vpack.c.b16 %v231, %v230
  %v278 = vpack.c.b16 %v233, %v232
  %v279 = vpack.c.b16 %v235, %v234
  %v280 = vpack.c.b16 %v237, %v236
  %v281 = vpack.c.b16 %v239, %v238
  %v282 = vpack.c.b16 %v241, %v240
  %v283 = vpack.c.b16 %v243, %v242
  %v284 = vpack.c.b16 %v245, %v244
  %v285 = vpack.c.b16 %v247, %v246
  %v286 = vpack.c.b16 %v249, %v248
  %v287 = vpack.c.b16 %v251, %v250
  %v288 = vpack.c.b16 %v253, %v252
  %v289 = vpack.c.b16 %v255, %v254
  %v290 = vpack.c.b16 %v257, %v256
  %v291 = vpack.c.b16 %v259, %v258
  %324 = vmatpush.bf16.msra.mxu0 %v267
  %325 = vmatpush.bf16.msra.mxu0 %v266
  %326 = vmatpush.bf16.msra.mxu0 %v265
  %327 = vmatpush.bf16.msra.mxu0 %v264
  %328 = vmatpush.bf16.msra.mxu0 %v263
  %329 = vmatpush.bf16.msra.mxu0 %v262
  %330 = vmatpush.bf16.msra.mxu0 %v261
  %331 = vmatpush.bf16.msra.mxu0 %v260
  %332 = vmatmul.bf16.gmra.mxu0 %v116
  %v333 = vpop.f32.mrf.mxu0
  %v334 = vadd.f32 0.0, %v333
  %v335 = vpop.f32.mrf.mxu0
  %v336 = vadd.f32 0.0, %v335
  %337 = vmatmul.bf16.gmra.mxu0 %v120
  %v338 = vpop.f32.mrf.mxu0
  %v339 = vadd.f32 0.0, %v338
  %v340 = vpop.f32.mrf.mxu0
  %v341 = vadd.f32 0.0, %v340
  %342 = vdwg.mxu0
  %343 = vmatpush.bf16.msra.mxu0 %v275
  %344 = vmatpush.bf16.msra.mxu0 %v274
  %345 = vmatpush.bf16.msra.mxu0 %v273
  %346 = vmatpush.bf16.msra.mxu0 %v272
  %347 = vmatpush.bf16.msra.mxu0 %v271
  %348 = vmatpush.bf16.msra.mxu0 %v270
  %349 = vmatpush.bf16.msra.mxu0 %v269
  %350 = vmatpush.bf16.msra.mxu0 %v268
  %351 = vmatmul.bf16.gmra.mxu0 %v117
  %v352 = vpop.f32.mrf.mxu0
  %v353 = vadd.f32 %v334, %v352
  %v354 = vpop.f32.mrf.mxu0
  %v355 = vadd.f32 %v336, %v354
  %356 = vmatmul.bf16.gmra.mxu0 %v121
  %v357 = vpop.f32.mrf.mxu0
  %v358 = vadd.f32 %v339, %v357
  %v359 = vpop.f32.mrf.mxu0
  %v360 = vadd.f32 %v341, %v359
  %361 = vdwg.mxu0
  %362 = vmatpush.bf16.msra.mxu0 %v283
  %363 = vmatpush.bf16.msra.mxu0 %v282
  %364 = vmatpush.bf16.msra.mxu0 %v281
  %365 = vmatpush.bf16.msra.mxu0 %v280
  %366 = vmatpush.bf16.msra.mxu0 %v279
  %367 = vmatpush.bf16.msra.mxu0 %v278
  %368 = vmatpush.bf16.msra.mxu0 %v277
  %369 = vmatpush.bf16.msra.mxu0 %v276
  %370 = vmatmul.bf16.gmra.mxu0 %v118
  %v371 = vpop.f32.mrf.mxu0
  %v372 = vadd.f32 %v353, %v371
  %v373 = vpop.f32.mrf.mxu0
  %v374 = vadd.f32 %v355, %v373
  %375 = vmatmul.bf16.gmra.mxu0 %v122
  %v376 = vpop.f32.mrf.mxu0
  %v377 = vadd.f32 %v358, %v376
  %v378 = vpop.f32.mrf.mxu0
  %v379 = vadd.f32 %v360, %v378
  %380 = vdwg.mxu0
  %381 = vmatpush.bf16.msra.mxu0 %v291
  %382 = vmatpush.bf16.msra.mxu0 %v290
  %383 = vmatpush.bf16.msra.mxu0 %v289
  %384 = vmatpush.bf16.msra.mxu0 %v288
  %385 = vmatpush.bf16.msra.mxu0 %v287
  %386 = vmatpush.bf16.msra.mxu0 %v286
  %387 = vmatpush.bf16.msra.mxu0 %v285
  %388 = vmatpush.bf16.msra.mxu0 %v284
  %389 = vmatmul.bf16.gmra.mxu0 %v119
  %v390 = vpop.f32.mrf.mxu0
  %v391 = vadd.f32 %v372, %v390
  %v392 = vpop.f32.mrf.mxu0
  %v393 = vadd.f32 %v374, %v392
  %394 = vmatmul.bf16.gmra.mxu0 %v123
  %v395 = vpop.f32.mrf.mxu0
  %v396 = vadd.f32 %v377, %v395
  %v397 = vpop.f32.mrf.mxu0
  %v398 = vadd.f32 %v379, %v397
  %399 = vdwg.mxu0
  %v400 = vpack.c.bf16 %v391, %v391
  %v401 = vpack.c.bf16 %v393, %v393
  %v402 = vpack.c.bf16 %v396, %v396
  %v403 = vpack.c.bf16 %v398, %v398
  %404 = vst [vmem:[%s2] sm:$0xf] %v400
  %405 = vst [vmem:[%s2 + $0x4] sm:$0xf] %v401
  %406 = vst [vmem:[%s2 + $0x8] sm:$0xf] %v402
  %407 = vst [vmem:[%s2 + $0xc] sm:$0xf] %v403
  %v408 = vld [vmem:[%s3] sm:$0x1]
  %v409 = vadd.f32 %v391, %v393
  %v410 = vadd.f32 %v409, %v396
  %v411 = vadd.f32 %v410, %v398
  %v412 = vrot.slane %v411, 4
  %v413 = vadd.f32 %v411, %v412
  %v414 = vrot.slane %v413, 2
  %v415 = vadd.f32 %v413, %v414
  %v416 = vrot.slane %v415, 1
  %v417 = vadd.f32 %v415, %v416
  %v418 = vadd.f32 %v408, %v417
  %419 = vst [vmem:[%s3] sm:$0x1] %v418
  %v420 = vld [vmem:[%s4] sm:$0x1]
  %v421 = vmul.f32 %v391, %v391
  %v422 = vmul.f32 %v393, %v393
  %v423 = vmul.f32 %v396, %v396
  %v424 = vmul.f32 %v398, %v398
  %v425 = vadd.f32 %v421, %v422
  %v426 = vadd.f32 %v425, %v423
  %v427 = vadd.f32 %v426, %v424
  %v428 = vrot.slane %v427, 4
  %v429 = vadd.f32 %v427, %v428
  %v430 = vrot.slane %v429, 2
  %v431 = vadd.f32 %v429, %v430
  %v432 = vrot.slane %v431, 1
  %v433 = vadd.f32 %v431, %v432
  %v434 = vadd.f32 %v420, %v433
  %435 = vst [vmem:[%s4] sm:$0x1] %v434
  // Predicated region
  $region14: #{discriminator_forward.15} parent=0 // pred_check
    _
  $region15: #{discriminator_forward.15} parent=0 // pred_check_branch
    %437 = sbr.rel (0) target = $region17
  $region16: #{discriminator_forward.15} parent=0 // pred_region
    _
  $region17: #{discriminator_forward.15} parent=0 // pred_fallthru
    _
  // Predicated region
  $region18: #{discriminator_forward.15} parent=0 // pred_check
    _
  $region19: #{discriminator_forward.15} parent=0 // pred_check_branch
    %439 = sbr.rel (0) target = $region21
  $region20: #{discriminator_forward.15} parent=0 // pred_region
    _
  $region21: #{discriminator_forward.15} parent=0 // pred_fallthru
    _
  // Predicated region
  $region22: #{discriminator_forward.15} parent=0 // pred_check
    _
  $region23: #{discriminator_forward.15} parent=0 // pred_check_branch
    %441 = sbr.rel (0) target = $region25
  $region24: #{discriminator_forward.15} parent=0 // pred_region
    _
  $region25: #{discriminator_forward.15} parent=0 // pred_fallthru
    _
  // Predicated region
  $region26: #{discriminator_forward.15} parent=0 // pred_check
    _
  $region27: #{discriminator_forward.15} parent=0 // pred_check_branch
    %443 = sbr.rel (0) target = $region29
  $region28: #{discriminator_forward.15} parent=0 // pred_region
    _
  $region29: #{discriminator_forward.15} parent=0 // pred_fallthru
    _
  // Predicated region
  $region30: #{discriminator_forward.15} parent=0 // pred_check
    _
  $region31: #{discriminator_forward.15} parent=0 // pred_check_branch
    %445 = sbr.rel (0) target = $region33
  $region32: #{discriminator_forward.15} parent=0 // pred_region
    _
  $region33: #{discriminator_forward.15} parent=0 // pred_fallthru
    _
  // Predicated region
  $region34: #{discriminator_forward.15} parent=0 // pred_check
    _
  $region35: #{discriminator_forward.15} parent=0 // pred_check_branch
    %447 = sbr.rel (0) target = $region37
  $region36: #{discriminator_forward.15} parent=0 // pred_region
    _
  $region37: #{discriminator_forward.15} parent=0 // pred_fallthru
    _

// kernel: discriminator_forward.17
$region0: #{discriminator_forward.17}
  #allocation0 [shape = 'u32[]', space=smem, size = 0x4, offset = 0x4, fixed_abs, tag = 'smem constant byte address 0x4 - core index']
  #allocation1 [shape = 'u32[72,128]{1,0:T(1,128)}', space=vmem, size = 0x9000, scoped, tag = 'internal scratch']
  %s0 = inlined_call_operand.vmem [shape: bf16[8,1024], index: 0, kind: input, shape index: {}]
  %s1 = inlined_call_operand.vmem [shape: bf16[1024,128], index: 1, kind: input, shape index: {}]
  %s2 = inlined_call_operand.vmem [shape: f32[1,128], index: 2, kind: input, shape index: {}]
  %s3 = inlined_call_operand.vmem [shape: f32[8,128], index: 3, kind: output, shape index: {}]
  %s4 = sld [smem:[#allocation0]]
  $region22: #{discriminator_forward.17} parent=0
    _
  %s6 = ssub.s32 1, %s4
  %s7 = scalar_select 0, %s6, %s4
  // Predicated region
  $region2: #{discriminator_forward.17} parent=0 // pred_check
    _
  $region3: #{discriminator_forward.17} parent=0 // pred_check_branch
    %9 = sbr.rel (0) target = $region5
  $region4: #{discriminator_forward.17} parent=0 // pred_region
    _
  $region5: #{discriminator_forward.17} parent=0 // pred_fallthru
    _
  // Predicated region
  $region6: #{discriminator_forward.17} parent=0 // pred_check
    _
  $region7: #{discriminator_forward.17} parent=0 // pred_check_branch
    %11 = sbr.rel (0) target = $region9
  $region8: #{discriminator_forward.17} parent=0 // pred_region
    _
  $region9: #{discriminator_forward.17} parent=0 // pred_fallthru
    _
  // Predicated region
  $region10: #{discriminator_forward.17} parent=0 // pred_check
    _
  $region11: #{discriminator_forward.17} parent=0 // pred_check_branch
    %13 = sbr.rel (0) target = $region13
  $region12: #{discriminator_forward.17} parent=0 // pred_region
    _
  $region13: #{discriminator_forward.17} parent=0 // pred_fallthru
    _
  %v14 = vld [vmem:[%s0] sm:$0xff]
  %v15 = vld [vmem:[%s0 + $0x8] sm:$0xff]
  %v16 = vld [vmem:[%s0 + $0x10] sm:$0xff]
  %v17 = vld [vmem:[%s0 + $0x18] sm:$0xff]
  %v18 = vld [vmem:[%s1] sm:$0xf]
  %v19 = vld [vmem:[%s1 + $0x4] sm:$0xf]
  %v20 = vld [vmem:[%s1 + $0x8] sm:$0xf]
  %v21 = vld [vmem:[%s1 + $0xc] sm:$0xf]
  %v22 = vld [vmem:[%s1 + $0x10] sm:$0xf]
  %v23 = vld [vmem:[%s1 + $0x14] sm:$0xf]
  %v24 = vld [vmem:[%s1 + $0x18] sm:$0xf]
  %v25 = vld [vmem:[%s1 + $0x1c] sm:$0xf]
  %v26 = vld [vmem:[%s1 + $0x20] sm:$0xf]
  %v27 = vld [vmem:[%s1 + $0x24] sm:$0xf]
  %v28 = vld [vmem:[%s1 + $0x28] sm:$0xf]
  %v29 = vld [vmem:[%s1 + $0x2c] sm:$0xf]
  %v30 = vld [vmem:[%s1 + $0x30] sm:$0xf]
  %v31 = vld [vmem:[%s1 + $0x34] sm:$0xf]
  %v32 = vld [vmem:[%s1 + $0x38] sm:$0xf]
  %v33 = vld [vmem:[%s1 + $0x3c] sm:$0xf]
  %v34 = vld [vmem:[%s1 + $0x40] sm:$0xf]
  %v35 = vld [vmem:[%s1 + $0x44] sm:$0xf]
  %v36 = vld [vmem:[%s1 + $0x48] sm:$0xf]
  %v37 = vld [vmem:[%s1 + $0x4c] sm:$0xf]
  %v38 = vld [vmem:[%s1 + $0x50] sm:$0xf]
  %v39 = vld [vmem:[%s1 + $0x54] sm:$0xf]
  %v40 = vld [vmem:[%s1 + $0x58] sm:$0xf]
  %v41 = vld [vmem:[%s1 + $0x5c] sm:$0xf]
  %v42 = vld [vmem:[%s1 + $0x60] sm:$0xf]
  %v43 = vld [vmem:[%s1 + $0x64] sm:$0xf]
  %v44 = vld [vmem:[%s1 + $0x68] sm:$0xf]
  %v45 = vld [vmem:[%s1 + $0x6c] sm:$0xf]
  %v46 = vld [vmem:[%s1 + $0x70] sm:$0xf]
  %v47 = vld [vmem:[%s1 + $0x74] sm:$0xf]
  %v48 = vld [vmem:[%s1 + $0x78] sm:$0xf]
  %v49 = vld [vmem:[%s1 + $0x7c] sm:$0xf]
  %v50 = vld [vmem:[%s1 + $0x80] sm:$0xf]
  %v51 = vld [vmem:[%s1 + $0x84] sm:$0xf]
  %v52 = vld [vmem:[%s1 + $0x88] sm:$0xf]
  %v53 = vld [vmem:[%s1 + $0x8c] sm:$0xf]
  %v54 = vld [vmem:[%s1 + $0x90] sm:$0xf]
  %v55 = vld [vmem:[%s1 + $0x94] sm:$0xf]
  %v56 = vld [vmem:[%s1 + $0x98] sm:$0xf]
  %v57 = vld [vmem:[%s1 + $0x9c] sm:$0xf]
  %v58 = vld [vmem:[%s1 + $0xa0] sm:$0xf]
  %v59 = vld [vmem:[%s1 + $0xa4] sm:$0xf]
  %v60 = vld [vmem:[%s1 + $0xa8] sm:$0xf]
  %v61 = vld [vmem:[%s1 + $0xac] sm:$0xf]
  %v62 = vld [vmem:[%s1 + $0xb0] sm:$0xf]
  %v63 = vld [vmem:[%s1 + $0xb4] sm:$0xf]
  %v64 = vld [vmem:[%s1 + $0xb8] sm:$0xf]
  %v65 = vld [vmem:[%s1 + $0xbc] sm:$0xf]
  %v66 = vld [vmem:[%s1 + $0xc0] sm:$0xf]
  %v67 = vld [vmem:[%s1 + $0xc4] sm:$0xf]
  %v68 = vld [vmem:[%s1 + $0xc8] sm:$0xf]
  %v69 = vld [vmem:[%s1 + $0xcc] sm:$0xf]
  %v70 = vld [vmem:[%s1 + $0xd0] sm:$0xf]
  %v71 = vld [vmem:[%s1 + $0xd4] sm:$0xf]
  %v72 = vld [vmem:[%s1 + $0xd8] sm:$0xf]
  %v73 = vld [vmem:[%s1 + $0xdc] sm:$0xf]
  %v74 = vld [vmem:[%s1 + $0xe0] sm:$0xf]
  %v75 = vld [vmem:[%s1 + $0xe4] sm:$0xf]
  %v76 = vld [vmem:[%s1 + $0xe8] sm:$0xf]
  %v77 = vld [vmem:[%s1 + $0xec] sm:$0xf]
  %v78 = vld [vmem:[%s1 + $0xf0] sm:$0xf]
  %v79 = vld [vmem:[%s1 + $0xf4] sm:$0xf]
  %v80 = vld [vmem:[%s1 + $0xf8] sm:$0xf]
  %v81 = vld [vmem:[%s1 + $0xfc] sm:$0xf]
  %v82 = vld [vmem:[%s1 + $0x100] sm:$0xf]
  %v83 = vld [vmem:[%s1 + $0x104] sm:$0xf]
  %v84 = vld [vmem:[%s1 + $0x108] sm:$0xf]
  %v85 = vld [vmem:[%s1 + $0x10c] sm:$0xf]
  %v86 = vld [vmem:[%s1 + $0x110] sm:$0xf]
  %v87 = vld [vmem:[%s1 + $0x114] sm:$0xf]
  %v88 = vld [vmem:[%s1 + $0x118] sm:$0xf]
  %v89 = vld [vmem:[%s1 + $0x11c] sm:$0xf]
  %v90 = vld [vmem:[%s1 + $0x120] sm:$0xf]
  %v91 = vld [vmem:[%s1 + $0x124] sm:$0xf]
  %v92 = vld [vmem:[%s1 + $0x128] sm:$0xf]
  %v93 = vld [vmem:[%s1 + $0x12c] sm:$0xf]
  %v94 = vld [vmem:[%s1 + $0x130] sm:$0xf]
  %v95 = vld [vmem:[%s1 + $0x134] sm:$0xf]
  %v96 = vld [vmem:[%s1 + $0x138] sm:$0xf]
  %v97 = vld [vmem:[%s1 + $0x13c] sm:$0xf]
  %v98 = vld [vmem:[%s1 + $0x140] sm:$0xf]
  %v99 = vld [vmem:[%s1 + $0x144] sm:$0xf]
  %v100 = vld [vmem:[%s1 + $0x148] sm:$0xf]
  %v101 = vld [vmem:[%s1 + $0x14c] sm:$0xf]
  %v102 = vld [vmem:[%s1 + $0x150] sm:$0xf]
  %v103 = vld [vmem:[%s1 + $0x154] sm:$0xf]
  %v104 = vld [vmem:[%s1 + $0x158] sm:$0xf]
  %v105 = vld [vmem:[%s1 + $0x15c] sm:$0xf]
  %v106 = vld [vmem:[%s1 + $0x160] sm:$0xf]
  %v107 = vld [vmem:[%s1 + $0x164] sm:$0xf]
  %v108 = vld [vmem:[%s1 + $0x168] sm:$0xf]
  %v109 = vld [vmem:[%s1 + $0x16c] sm:$0xf]
  %v110 = vld [vmem:[%s1 + $0x170] sm:$0xf]
  %v111 = vld [vmem:[%s1 + $0x174] sm:$0xf]
  %v112 = vld [vmem:[%s1 + $0x178] sm:$0xf]
  %v113 = vld [vmem:[%s1 + $0x17c] sm:$0xf]
  %v114 = vld [vmem:[%s1 + $0x180] sm:$0xf]
  %v115 = vld [vmem:[%s1 + $0x184] sm:$0xf]
  %v116 = vld [vmem:[%s1 + $0x188] sm:$0xf]
  %v117 = vld [vmem:[%s1 + $0x18c] sm:$0xf]
  %v118 = vld [vmem:[%s1 + $0x190] sm:$0xf]
  %v119 = vld [vmem:[%s1 + $0x194] sm:$0xf]
  %v120 = vld [vmem:[%s1 + $0x198] sm:$0xf]
  %v121 = vld [vmem:[%s1 + $0x19c] sm:$0xf]
  %v122 = vld [vmem:[%s1 + $0x1a0] sm:$0xf]
  %v123 = vld [vmem:[%s1 + $0x1a4] sm:$0xf]
  %v124 = vld [vmem:[%s1 + $0x1a8] sm:$0xf]
  %v125 = vld [vmem:[%s1 + $0x1ac] sm:$0xf]
  %v126 = vld [vmem:[%s1 + $0x1b0] sm:$0xf]
  %v127 = vld [vmem:[%s1 + $0x1b4] sm:$0xf]
  %v128 = vld [vmem:[%s1 + $0x1b8] sm:$0xf]
  %v129 = vld [vmem:[%s1 + $0x1bc] sm:$0xf]
  %v130 = vld [vmem:[%s1 + $0x1c0] sm:$0xf]
  %v131 = vld [vmem:[%s1 + $0x1c4] sm:$0xf]
  %v132 = vld [vmem:[%s1 + $0x1c8] sm:$0xf]
  %v133 = vld [vmem:[%s1 + $0x1cc] sm:$0xf]
  %v134 = vld [vmem:[%s1 + $0x1d0] sm:$0xf]
  %v135 = vld [vmem:[%s1 + $0x1d4] sm:$0xf]
  %v136 = vld [vmem:[%s1 + $0x1d8] sm:$0xf]
  %v137 = vld [vmem:[%s1 + $0x1dc] sm:$0xf]
  %v138 = vld [vmem:[%s1 + $0x1e0] sm:$0xf]
  %v139 = vld [vmem:[%s1 + $0x1e4] sm:$0xf]
  %v140 = vld [vmem:[%s1 + $0x1e8] sm:$0xf]
  %v141 = vld [vmem:[%s1 + $0x1ec] sm:$0xf]
  %v142 = vld [vmem:[%s1 + $0x1f0] sm:$0xf]
  %v143 = vld [vmem:[%s1 + $0x1f4] sm:$0xf]
  %v144 = vld [vmem:[%s1 + $0x1f8] sm:$0xf]
  %v145 = vld [vmem:[%s1 + $0x1fc] sm:$0xf]
  %v146 = vld [vmem:[%s2] sm:$0x1]
  %v148 = vperm.slane %v146, 0
  %v154 = vunpack.c.l.b16 %v14
  %v155 = vunpack.c.h.b16 %v14
  %v156 = vunpack.c.l.b16 %v15
  %v157 = vunpack.c.h.b16 %v15
  %v158 = vunpack.c.l.b16 %v16
  %v159 = vunpack.c.h.b16 %v16
  %v160 = vunpack.c.l.b16 %v17
  %v161 = vunpack.c.h.b16 %v17
  %v162 = vpack.c.b16 %v154, %v154
  %v163 = vpack.c.b16 %v155, %v155
  %v164 = vpack.c.b16 %v156, %v156
  %v165 = vpack.c.b16 %v157, %v157
  %v166 = vpack.c.b16 %v158, %v158
  %v167 = vpack.c.b16 %v159, %v159
  %v168 = vpack.c.b16 %v160, %v160
  %v169 = vpack.c.b16 %v161, %v161
  %v306 = vunpack.c.l.b16 %v18
  %v307 = vunpack.c.l.b16 %v19
  %v308 = vunpack.c.l.b16 %v20
  %v309 = vunpack.c.l.b16 %v21
  %v310 = vunpack.c.l.b16 %v22
  %v311 = vunpack.c.l.b16 %v23
  %v312 = vunpack.c.l.b16 %v24
  %v313 = vunpack.c.l.b16 %v25
  %v314 = vunpack.c.l.b16 %v26
  %v315 = vunpack.c.l.b16 %v27
  %v316 = vunpack.c.l.b16 %v28
  %v317 = vunpack.c.l.b16 %v29
  %v318 = vunpack.c.l.b16 %v30
  %v319 = vunpack.c.l.b16 %v31
  %v320 = vunpack.c.l.b16 %v32
  %v321 = vunpack.c.l.b16 %v33
  %v322 = vunpack.c.l.b16 %v34
  %v323 = vunpack.c.l.b16 %v35
  %v324 = vunpack.c.l.b16 %v36
  %v325 = vunpack.c.l.b16 %v37
  %v326 = vunpack.c.l.b16 %v38
  %v327 = vunpack.c.l.b16 %v39
  %v328 = vunpack.c.l.b16 %v40
  %v329 = vunpack.c.l.b16 %v41
  %v330 = vunpack.c.l.b16 %v42
  %v331 = vunpack.c.l.b16 %v43
  %v332 = vunpack.c.l.b16 %v44
  %v333 = vunpack.c.l.b16 %v45
  %v334 = vunpack.c.l.b16 %v46
  %v335 = vunpack.c.l.b16 %v47
  %v336 = vunpack.c.l.b16 %v48
  %v337 = vunpack.c.l.b16 %v49
  %v338 = vunpack.c.l.b16 %v50
  %v339 = vunpack.c.l.b16 %v51
  %v340 = vunpack.c.l.b16 %v52
  %v341 = vunpack.c.l.b16 %v53
  %v342 = vunpack.c.l.b16 %v54
  %v343 = vunpack.c.l.b16 %v55
  %v344 = vunpack.c.l.b16 %v56
  %v345 = vunpack.c.l.b16 %v57
  %v346 = vunpack.c.l.b16 %v58
  %v347 = vunpack.c.l.b16 %v59
  %v348 = vunpack.c.l.b16 %v60
  %v349 = vunpack.c.l.b16 %v61
  %v350 = vunpack.c.l.b16 %v62
  %v351 = vunpack.c.l.b16 %v63
  %v352 = vunpack.c.l.b16 %v64
  %v353 = vunpack.c.l.b16 %v65
  %v354 = vunpack.c.l.b16 %v66
  %v355 = vunpack.c.l.b16 %v67
  %v356 = vunpack.c.l.b16 %v68
  %v357 = vunpack.c.l.b16 %v69
  %v358 = vunpack.c.l.b16 %v70
  %v359 = vunpack.c.l.b16 %v71
  %v360 = vunpack.c.l.b16 %v72
  %v361 = vunpack.c.l.b16 %v73
  %v362 = vunpack.c.l.b16 %v74
  %v363 = vunpack.c.l.b16 %v75
  %v364 = vunpack.c.l.b16 %v76
  %v365 = vunpack.c.l.b16 %v77
  %v366 = vunpack.c.l.b16 %v78
  %v367 = vunpack.c.l.b16 %v79
  %v368 = vunpack.c.l.b16 %v80
  %v369 = vunpack.c.l.b16 %v81
  %v370 = vunpack.c.l.b16 %v82
  %v371 = vunpack.c.l.b16 %v83
  %v372 = vunpack.c.l.b16 %v84
  %v373 = vunpack.c.l.b16 %v85
  %v374 = vunpack.c.l.b16 %v86
  %v375 = vunpack.c.l.b16 %v87
  %v376 = vunpack.c.l.b16 %v88
  %v377 = vunpack.c.l.b16 %v89
  %v378 = vunpack.c.l.b16 %v90
  %v379 = vunpack.c.l.b16 %v91
  %v380 = vunpack.c.l.b16 %v92
  %v381 = vunpack.c.l.b16 %v93
  %v382 = vunpack.c.l.b16 %v94
  %v383 = vunpack.c.l.b16 %v95
  %v384 = vunpack.c.l.b16 %v96
  %v385 = vunpack.c.l.b16 %v97
  %v386 = vunpack.c.l.b16 %v98
  %v387 = vunpack.c.l.b16 %v99
  %v388 = vunpack.c.l.b16 %v100
  %v389 = vunpack.c.l.b16 %v101
  %v390 = vunpack.c.l.b16 %v102
  %v391 = vunpack.c.l.b16 %v103
  %v392 = vunpack.c.l.b16 %v104
  %v393 = vunpack.c.l.b16 %v105
  %v394 = vunpack.c.l.b16 %v106
  %v395 = vunpack.c.l.b16 %v107
  %v396 = vunpack.c.l.b16 %v108
  %v397 = vunpack.c.l.b16 %v109
  %v398 = vunpack.c.l.b16 %v110
  %v399 = vunpack.c.l.b16 %v111
  %v400 = vunpack.c.l.b16 %v112
  %v401 = vunpack.c.l.b16 %v113
  %v402 = vunpack.c.l.b16 %v114
  %v403 = vunpack.c.l.b16 %v115
  %v404 = vunpack.c.l.b16 %v116
  %v405 = vunpack.c.l.b16 %v117
  %v406 = vunpack.c.l.b16 %v118
  %v407 = vunpack.c.l.b16 %v119
  %v408 = vunpack.c.l.b16 %v120
  %v409 = vunpack.c.l.b16 %v121
  %v410 = vunpack.c.l.b16 %v122
  %v411 = vunpack.c.l.b16 %v123
  %v412 = vunpack.c.l.b16 %v124
  %v413 = vunpack.c.l.b16 %v125
  %v414 = vunpack.c.l.b16 %v126
  %v415 = vunpack.c.l.b16 %v127
  %v416 = vunpack.c.l.b16 %v128
  %v417 = vunpack.c.l.b16 %v129
  %v418 = vunpack.c.l.b16 %v130
  %v419 = vunpack.c.l.b16 %v131
  %v420 = vunpack.c.l.b16 %v132
  %v421 = vunpack.c.l.b16 %v133
  %v422 = vunpack.c.l.b16 %v134
  %v423 = vunpack.c.l.b16 %v135
  %v424 = vunpack.c.l.b16 %v136
  %v425 = vunpack.c.l.b16 %v137
  %v426 = vunpack.c.l.b16 %v138
  %v427 = vunpack.c.l.b16 %v139
  %v428 = vunpack.c.l.b16 %v140
  %v429 = vunpack.c.l.b16 %v141
  %v430 = vunpack.c.l.b16 %v142
  %v431 = vunpack.c.l.b16 %v143
  %v432 = vunpack.c.l.b16 %v144
  %v433 = vunpack.c.l.b16 %v145
  %v434 = vpack.c.b16 %v307, %v306
  %v435 = vpack.c.b16 %v309, %v308
  %v436 = vpack.c.b16 %v311, %v310
  %v437 = vpack.c.b16 %v313, %v312
  %v438 = vpack.c.b16 %v315, %v314
  %v439 = vpack.c.b16 %v317, %v316
  %v440 = vpack.c.b16 %v319, %v318
  %v441 = vpack.c.b16 %v321, %v320
  %v442 = vpack.c.b16 %v323, %v322
  %v443 = vpack.c.b16 %v325, %v324
  %v444 = vpack.c.b16 %v327, %v326
  %v445 = vpack.c.b16 %v329, %v328
  %v446 = vpack.c.b16 %v331, %v330
  %v447 = vpack.c.b16 %v333, %v332
  %v448 = vpack.c.b16 %v335, %v334
  %v449 = vpack.c.b16 %v337, %v336
  %v450 = vpack.c.b16 %v339, %v338
  %v451 = vpack.c.b16 %v341, %v340
  %v452 = vpack.c.b16 %v343, %v342
  %v453 = vpack.c.b16 %v345, %v344
  %v454 = vpack.c.b16 %v347, %v346
  %v455 = vpack.c.b16 %v349, %v348
  %v456 = vpack.c.b16 %v351, %v350
  %v457 = vpack.c.b16 %v353, %v352
  %v458 = vpack.c.b16 %v355, %v354
  %v459 = vpack.c.b16 %v357, %v356
  %v460 = vpack.c.b16 %v359, %v358
  %v461 = vpack.c.b16 %v361, %v360
  %v462 = vpack.c.b16 %v363, %v362
  %v463 = vpack.c.b16 %v365, %v364
  %v464 = vpack.c.b16 %v367, %v366
  %v465 = vpack.c.b16 %v369, %v368
  %v466 = vpack.c.b16 %v371, %v370
  %v467 = vpack.c.b16 %v373, %v372
  %v468 = vpack.c.b16 %v375, %v374
  %v469 = vpack.c.b16 %v377, %v376
  %v470 = vpack.c.b16 %v379, %v378
  %v471 = vpack.c.b16 %v381, %v380
  %v472 = vpack.c.b16 %v383, %v382
  %v473 = vpack.c.b16 %v385, %v384
  %v474 = vpack.c.b16 %v387, %v386
  %v475 = vpack.c.b16 %v389, %v388
  %v476 = vpack.c.b16 %v391, %v390
  %v477 = vpack.c.b16 %v393, %v392
  %v478 = vpack.c.b16 %v395, %v394
  %v479 = vpack.c.b16 %v397, %v396
  %v480 = vpack.c.b16 %v399, %v398
  %v481 = vpack.c.b16 %v401, %v400
  %v482 = vpack.c.b16 %v403, %v402
  %v483 = vpack.c.b16 %v405, %v404
  %v484 = vpack.c.b16 %v407, %v406
  %v485 = vpack.c.b16 %v409, %v408
  %v486 = vpack.c.b16 %v411, %v410
  %v487 = vpack.c.b16 %v413, %v412
  %v488 = vpack.c.b16 %v415, %v414
  %v489 = vpack.c.b16 %v417, %v416
  %v490 = vpack.c.b16 %v419, %v418
  %v491 = vpack.c.b16 %v421, %v420
  %v492 = vpack.c.b16 %v423, %v422
  %v493 = vpack.c.b16 %v425, %v424
  %v494 = vpack.c.b16 %v427, %v426
  %v495 = vpack.c.b16 %v429, %v428
  %v496 = vpack.c.b16 %v431, %v430
  %v497 = vpack.c.b16 %v433, %v432
  %562 = vmatpush.bf16.msra.mxu0 %v441
  %563 = vmatpush.bf16.msra.mxu0 %v440
  %564 = vmatpush.bf16.msra.mxu0 %v439
  %565 = vmatpush.bf16.msra.mxu0 %v438
  %566 = vmatpush.bf16.msra.mxu0 %v437
  %567 = vmatpush.bf16.msra.mxu0 %v436
  %568 = vmatpush.bf16.msra.mxu0 %v435
  %569 = vmatpush.bf16.msra.mxu0 %v434
  %570 = vmatmul.bf16.gmra.mxu0 %v162
  %v571 = vpop.f32.mrf.mxu0
  %v572 = vadd.f32 %v148, %v571
  %v573 = vpop.f32.mrf.mxu0
  %574 = vdwg.mxu0
  %575 = vmatpush.bf16.msra.mxu0 %v449
  %576 = vmatpush.bf16.msra.mxu0 %v448
  %577 = vmatpush.bf16.msra.mxu0 %v447
  %578 = vmatpush.bf16.msra.mxu0 %v446
  %579 = vmatpush.bf16.msra.mxu0 %v445
  %580 = vmatpush.bf16.msra.mxu0 %v444
  %581 = vmatpush.bf16.msra.mxu0 %v443
  %582 = vmatpush.bf16.msra.mxu0 %v442
  %583 = vmatmul.bf16.gmra.mxu0 %v163
  %v584 = vpop.f32.mrf.mxu0
  %v585 = vadd.f32 %v572, %v584
  %v586 = vpop.f32.mrf.mxu0
  %587 = vdwg.mxu0
  %588 = vmatpush.bf16.msra.mxu0 %v457
  %589 = vmatpush.bf16.msra.mxu0 %v456
  %590 = vmatpush.bf16.msra.mxu0 %v455
  %591 = vmatpush.bf16.msra.mxu0 %v454
  %592 = vmatpush.bf16.msra.mxu0 %v453
  %593 = vmatpush.bf16.msra.mxu0 %v452
  %594 = vmatpush.bf16.msra.mxu0 %v451
  %595 = vmatpush.bf16.msra.mxu0 %v450
  %596 = vmatmul.bf16.gmra.mxu0 %v164
  %v597 = vpop.f32.mrf.mxu0
  %v598 = vadd.f32 %v585, %v597
  %v599 = vpop.f32.mrf.mxu0
  %600 = vdwg.mxu0
  %601 = vmatpush.bf16.msra.mxu0 %v465
  %602 = vmatpush.bf16.msra.mxu0 %v464
  %603 = vmatpush.bf16.msra.mxu0 %v463
  %604 = vmatpush.bf16.msra.mxu0 %v462
  %605 = vmatpush.bf16.msra.mxu0 %v461
  %606 = vmatpush.bf16.msra.mxu0 %v460
  %607 = vmatpush.bf16.msra.mxu0 %v459
  %608 = vmatpush.bf16.msra.mxu0 %v458
  %609 = vmatmul.bf16.gmra.mxu0 %v165
  %v610 = vpop.f32.mrf.mxu0
  %v611 = vadd.f32 %v598, %v610
  %v612 = vpop.f32.mrf.mxu0
  %613 = vdwg.mxu0
  %614 = vmatpush.bf16.msra.mxu0 %v473
  %615 = vmatpush.bf16.msra.mxu0 %v472
  %616 = vmatpush.bf16.msra.mxu0 %v471
  %617 = vmatpush.bf16.msra.mxu0 %v470
  %618 = vmatpush.bf16.msra.mxu0 %v469
  %619 = vmatpush.bf16.msra.mxu0 %v468
  %620 = vmatpush.bf16.msra.mxu0 %v467
  %621 = vmatpush.bf16.msra.mxu0 %v466
  %622 = vmatmul.bf16.gmra.mxu0 %v166
  %v623 = vpop.f32.mrf.mxu0
  %v624 = vadd.f32 %v611, %v623
  %v625 = vpop.f32.mrf.mxu0
  %626 = vdwg.mxu0
  %627 = vmatpush.bf16.msra.mxu0 %v481
  %628 = vmatpush.bf16.msra.mxu0 %v480
  %629 = vmatpush.bf16.msra.mxu0 %v479
  %630 = vmatpush.bf16.msra.mxu0 %v478
  %631 = vmatpush.bf16.msra.mxu0 %v477
  %632 = vmatpush.bf16.msra.mxu0 %v476
  %633 = vmatpush.bf16.msra.mxu0 %v475
  %634 = vmatpush.bf16.msra.mxu0 %v474
  %635 = vmatmul.bf16.gmra.mxu0 %v167
  %v636 = vpop.f32.mrf.mxu0
  %v637 = vadd.f32 %v624, %v636
  %v638 = vpop.f32.mrf.mxu0
  %639 = vdwg.mxu0
  %640 = vmatpush.bf16.msra.mxu0 %v489
  %641 = vmatpush.bf16.msra.mxu0 %v488
  %642 = vmatpush.bf16.msra.mxu0 %v487
  %643 = vmatpush.bf16.msra.mxu0 %v486
  %644 = vmatpush.bf16.msra.mxu0 %v485
  %645 = vmatpush.bf16.msra.mxu0 %v484
  %646 = vmatpush.bf16.msra.mxu0 %v483
  %647 = vmatpush.bf16.msra.mxu0 %v482
  %648 = vmatmul.bf16.gmra.mxu0 %v168
  %v649 = vpop.f32.mrf.mxu0
  %v650 = vadd.f32 %v637, %v649
  %v651 = vpop.f32.mrf.mxu0
  %652 = vdwg.mxu0
  %653 = vmatpush.bf16.msra.mxu0 %v497
  %654 = vmatpush.bf16.msra.mxu0 %v496
  %655 = vmatpush.bf16.msra.mxu0 %v495
  %656 = vmatpush.bf16.msra.mxu0 %v494
  %657 = vmatpush.bf16.msra.mxu0 %v493
  %658 = vmatpush.bf16.msra.mxu0 %v492
  %659 = vmatpush.bf16.msra.mxu0 %v491
  %660 = vmatpush.bf16.msra.mxu0 %v490
  %661 = vmatmul.bf16.gmra.mxu0 %v169
  %v662 = vpop.f32.mrf.mxu0
  %v663 = vadd.f32 %v650, %v662
  %v664 = vpop.f32.mrf.mxu0
  %665 = vdwg.mxu0
  %v666 = vxor.u32 %v663, 2147483648
  %v667 = vmul.f32 %v666, 1.442695
  %v668 = vpow.pop %v667
  %v669 = vadd.f32 %v668, 1.0
  %v670 = vrcp.pop %v669
  %v671 = vmul.f32 %v669, %v670
  %v672 = vsub.f32 1.0, %v671
  %v673 = vmul.f32 %v670, %v672
  %v674 = vadd.f32 %v670, %v673
  %vm675 = vweird.f32 %v669
  %vm676 = vweird.f32 %v670
  %vm677 = vmor %vm675, %vm676
  %v678 = vsel %vm677, %v670, %v674
  %v679 = vand.u32 2147483647, %v669
  %vm680 = vcmp.eq.f32.partialorder %v679, 8.507059e+37
  %v681 = vand.u32 %v669, 2147483648
  %v682 = vor.u32 1.1754944e-38, %v681
  %v683 = vsel %vm680, %v682, %v678
  %v684 = vmul.f32 1.0, %v683
  %685 = vst [vmem:[%s3] sm:$0xff] %v684
  // Predicated region
  $region14: #{discriminator_forward.17} parent=0 // pred_check
    _
  $region15: #{discriminator_forward.17} parent=0 // pred_check_branch
    %687 = sbr.rel (0) target = $region17
  $region16: #{discriminator_forward.17} parent=0 // pred_region
    _
  $region17: #{discriminator_forward.17} parent=0 // pred_fallthru
    _
  // Predicated region
  $region18: #{discriminator_forward.17} parent=0 // pred_check
    _
  $region19: #{discriminator_forward.17} parent=0 // pred_check_branch
    %689 = sbr.rel (0) target = $region21
  $region20: #{discriminator_forward.17} parent=0 // pred_region
    _
  $region21: #{discriminator_forward.17} parent=0 // pred_fallthru
    _

</llo_original>
